<compile_context>
chip_gen: v6e
topology: v6e:2x2x1
jax: 0.10.0
libtpu: 0.0.40
codegen_flags: <defaults>
</compile_context>

<pallas_src>
import functools
import math

import jax
import jax.numpy as jnp
from jax.experimental import pallas as pl
from jax.experimental.pallas import tpu as pltpu


# ----------------------------------------------------------------------------
# Pallas kernels
# ----------------------------------------------------------------------------
def _mamba_layer_kernel(
    x_ref,       # (T*BP, d_model)  f32  time-major chunk (row = t*BP + b)
    w_norm_ref,  # (1, d_model)              f32  RMSNorm weight
    w_in_ref,    # (d_model, 2*d_inner)      bf16 in_proj (in, res)
    w_conv_ref,  # (d_conv, d_inner)         f32  depthwise conv taps
    b_conv_ref,  # (1, d_inner)              f32  conv bias
    w_xbc_ref,   # (d_inner, d_inner + 2*d_state) bf16  fused [dt | B | C] proj
    b_dt_ref,    # (1, d_inner)              f32  dt_proj bias
    a_ref,       # (d_state, d_inner)        f32  A = -exp(A_log), transposed
    d_ref,       # (1, d_inner)              f32  D skip
    w_out_ref,   # (d_inner, d_model)        bf16 out_proj
    out_ref,     # (T*BP, d_model)           f32  residual output chunk
    xpad_ref,    # scratch ((T+d_conv-1)*BP, d_inner) f32  padded conv input
    carry_ref,   # scratch ((d_conv-1)*BP, d_inner)   f32  conv carry (persists)
    state_ref,   # scratch (BP, d_state, d_inner)     f32  scan state (persists)
    dlt_ref,     # scratch (T*BP, d_inner)   f32  delta
    u_ref,       # scratch (T*BP, d_inner)   f32  conv output u (= x_c)
    bc_ref,      # scratch (T*BP, 2*d_state) f32  B|C
    y_ref,       # scratch (T*BP, d_inner)   f32  scan output
    *, chunk, batch_pad, d_inner, d_state, d_conv, eps, unroll):
    T, BP = chunk, batch_pad
    rows = T * BP
    npad = (d_conv - 1) * BP

    # --- init cross-chunk carries on the first chunk ---
    @pl.when(pl.program_id(0) == 0)
    def _init():
        carry_ref[...] = jnp.zeros_like(carry_ref)
        state_ref[...] = jnp.zeros_like(state_ref)

    x = x_ref[...]                                  # (rows, d_model)

    # --- RMSNorm ---
    ms = jnp.mean(x * x, axis=-1, keepdims=True)
    xn = x * jax.lax.rsqrt(ms + eps) * w_norm_ref[...]

    # --- in_proj (bf16 MXU inputs, f32 accumulation) ---
    xz = jnp.dot(xn.astype(jnp.bfloat16), w_in_ref[...],
                 preferred_element_type=jnp.float32)          # (rows, 2*d_inner)
    x_in = xz[:, :d_inner]
    res = xz[:, d_inner:]

    # --- depthwise causal conv along time (shift of s steps == s*BP rows) ---
    xpad_ref[0:npad, :] = carry_ref[...]           # history from previous chunk
    xpad_ref[npad:npad + rows, :] = x_in
    carry_ref[...] = x_in[rows - npad:, :]         # carry for the next chunk
    conv = jnp.broadcast_to(b_conv_ref[...], (rows, d_inner))
    for k in range(d_conv):                        # K small, static, aligned taps
        conv = conv + xpad_ref[k * BP:k * BP + rows, :] * w_conv_ref[k:k + 1, :]
    x_c = conv * jax.nn.sigmoid(conv)              # SiLU (rows, d_inner)

    # --- fused SSM projection: one GEMM produces [delta_pre | B | C] ---
    proj = jnp.dot(x_c.astype(jnp.bfloat16), w_xbc_ref[...],
                   preferred_element_type=jnp.float32)        # (rows, d_in + 2n)
    delta = jax.nn.softplus(proj[:, :d_inner] + b_dt_ref[...])

    # stash per-timestep operands in VMEM scratch for the scan
    dlt_ref[...] = delta
    u_ref[...] = x_c
    bc_ref[...] = proj[:, d_inner:]

    A = a_ref[...]                                 # (d_state, d_inner)

    # --- selective scan: state (BP, d_state, d_inner), d_inner on lanes ---
    def step(t, state):
        r0 = pl.multiple_of(t * BP, 8)             # BP is a multiple of 8
        d_t = dlt_ref[pl.ds(r0, BP), :]            # (BP, d_inner)
        u_t = u_ref[pl.ds(r0, BP), :]              # (BP, d_inner)
        bc_t = bc_ref[pl.ds(r0, BP), :]            # (BP, 2*d_state)
        b_t = bc_t[:, :d_state]
        c_t = bc_t[:, d_state:]
        dA = jnp.exp(d_t[:, None, :] * A[None, :, :])         # (BP, n, d_in)
        dBu = (d_t * u_t)[:, None, :] * b_t[:, :, None]       # (BP, n, d_in)
        state = dA * state + dBu
        y_ref[pl.ds(r0, BP), :] = jnp.sum(state * c_t[:, :, None], axis=1)
        return state

    state_fin = jax.lax.fori_loop(0, T, step, state_ref[...], unroll=unroll)
    state_ref[...] = state_fin                     # persist for the next chunk

    # --- D skip, gate, out_proj, residual ---
    y = y_ref[...] + u_ref[...] * d_ref[...]
    y = y * (res * jax.nn.sigmoid(res))
    out = jnp.dot(y.astype(jnp.bfloat16), w_out_ref[...],
                  preferred_element_type=jnp.float32)          # (rows, d_model)
    out_ref[...] = x + out


def _head_kernel(x_ref, w_norm_ref, w_fc_ref, b_fc_ref, out_ref, *, eps):
    # x_ref is only the LAST timestep row-block: (BP, d_model)
    xl = x_ref[...]
    ms = jnp.mean(xl * xl, axis=-1, keepdims=True)
    xn = xl * jax.lax.rsqrt(ms + eps) * w_norm_ref[...]
    out_ref[...] = (jnp.dot(xn, w_fc_ref[...],
                            preferred_element_type=jnp.float32)
                    + b_fc_ref[...])


# ----------------------------------------------------------------------------
# Wrappers
# ----------------------------------------------------------------------------
def _auto_time_chunk(seq_len, batch_pad, cfg, vmem_budget_bytes=24 << 20):
    """Largest divisor of seq_len whose per-chunk VMEM scratch fits the budget.

    Budget kept under the smallest-generation scoped VMEM (v7x: 32 MiB default
    of 64 MiB physical); raise the budget together with vmem_limit_bytes for
    bigger chunks on v5e/v6e (128 MiB VMEM).
    """
    d_model, d_inner, d_state, d_conv = (cfg["d_model"], cfg["d_inner"],
                                         cfg["d_state"], cfg["d_conv"])
    # f32 bytes per timestep of chunk-resident activation blocks + scratch.
    per_step = 4 * batch_pad * (4 * d_model + 5 * d_inner + 2 * d_state)
    divisors = [t for t in range(1, seq_len + 1)
                if seq_len % t == 0 and t >= min(d_conv - 1, seq_len)]
    fitting = [t for t in divisors if t * per_step <= vmem_budget_bytes]
    return max(fitting) if fitting else min(divisors)


def mamba_layer(x2, layer_params, cfg, *, seq_len, batch_pad, time_chunk):
    M, d_model = x2.shape
    d_inner, d_state, d_conv = cfg["d_inner"], cfg["d_state"], cfg["d_conv"]
    T, BP = time_chunk, batch_pad
    assert seq_len % T == 0, "time_chunk must divide seq_len"
    assert T >= d_conv - 1, "time_chunk must cover the conv history window"
    num_chunks = seq_len // T
    rows = T * BP
    if T % 4 == 0:
        unroll = 4
    elif T % 2 == 0:
        unroll = 2
    else:
        unroll = 1

    kernel = functools.partial(
        _mamba_layer_kernel, chunk=T, batch_pad=BP,
        d_inner=d_inner, d_state=d_state, d_conv=d_conv,
        eps=cfg["eps"], unroll=unroll)

    weights = tuple(layer_params)
    in_specs = ([pl.BlockSpec((rows, d_model), lambda c: (c, 0))] +
                [pl.BlockSpec(w.shape, lambda c: (0, 0)) for w in weights])

    return pl.pallas_call(
        kernel,
        out_shape=jax.ShapeDtypeStruct((M, d_model), jnp.float32),
        grid=(num_chunks,),
        in_specs=in_specs,
        out_specs=pl.BlockSpec((rows, d_model), lambda c: (c, 0)),
        scratch_shapes=[
            pltpu.VMEM(((T + d_conv - 1) * BP, d_inner), jnp.float32),  # xpad
            pltpu.VMEM(((d_conv - 1) * BP, d_inner), jnp.float32),      # conv carry
            pltpu.VMEM((BP, d_state, d_inner), jnp.float32),            # scan state
            pltpu.VMEM((rows, d_inner), jnp.float32),                   # delta
            pltpu.VMEM((rows, d_inner), jnp.float32),                   # u (x_c)
            pltpu.VMEM((rows, 2 * d_state), jnp.float32),               # B|C
            pltpu.VMEM((rows, d_inner), jnp.float32),                   # y
        ],
        compiler_params=pltpu.CompilerParams(
            dimension_semantics=("arbitrary",)),
    )(x2, *weights)


def mamba_head(x2, w_norm_f, w_fc_p, b_fc_p, cfg, *, seq_len, batch_pad):
    _, d_model = x2.shape
    out_pad = w_fc_p.shape[1]
    kernel = functools.partial(_head_kernel, eps=cfg["eps"])
    return pl.pallas_call(
        kernel,
        out_shape=jax.ShapeDtypeStruct((batch_pad, out_pad), jnp.float32),
        grid=(1,),
        in_specs=[
            # Only DMA the last timestep row-block of the time-major slab.
            pl.BlockSpec((batch_pad, d_model), lambda i, _L=seq_len: (_L - 1, 0)),
            pl.BlockSpec(w_norm_f.shape, lambda i: (0, 0)),
            pl.BlockSpec(w_fc_p.shape, lambda i: (0, 0)),
            pl.BlockSpec(b_fc_p.shape, lambda i: (0, 0)),
        ],
        out_specs=pl.BlockSpec((batch_pad, out_pad), lambda i: (0, 0)),
    )(x2, w_norm_f, w_fc_p, b_fc_p)


def mamba_model_forward(x, kparams, cfg, *, time_chunk=None):
    B, L, d_model = x.shape
    BP = ((B + 7) // 8) * 8                 # pad batch rows to the f32 sublane tile
    if time_chunk is None:
        time_chunk = _auto_time_chunk(L, BP, cfg)
    # time-major, batch-padded flatten (XLA, outside kernels): row = t*BP + b
    x3 = jnp.zeros((L, BP, d_model), jnp.float32)
    x3 = x3.at[:, :B, :].set(jnp.swapaxes(x, 0, 1).astype(jnp.float32))
    x2 = x3.reshape(L * BP, d_model)
    for layer_params in kparams["layers"]:
        x2 = mamba_layer(x2, layer_params, cfg, seq_len=L, batch_pad=BP,
                         time_chunk=time_chunk)
    out = mamba_head(x2, kparams["norm_f"], kparams["w_fc_p"],
                     kparams["b_fc_p"], cfg, seq_len=L, batch_pad=BP)
    return out[:B, :kparams["output_size"]]


# ----------------------------------------------------------------------------
# Parameters: raw (mirrors the PyTorch module) + kernel-ready preparation
# ----------------------------------------------------------------------------
def init_params(key, cfg, output_size):
    d_model, d_inner = cfg["d_model"], cfg["d_inner"]
    d_state, dt_rank, d_conv = cfg["d_state"], cfg["dt_rank"], cfg["d_conv"]

    layers = []
    for _ in range(cfg["n_layer"]):
        key, k0, k1, k2, k3, k4 = jax.random.split(key, 6)
        w_norm = jnp.ones((1, d_model), jnp.float32)
        w_in = 0.05 * jax.random.normal(k0, (d_model, 2 * d_inner), jnp.float32)
        w_conv = 0.20 * jax.random.normal(k1, (d_conv, d_inner), jnp.float32)
        b_conv = jnp.zeros((1, d_inner), jnp.float32)
        w_x = 0.05 * jax.random.normal(k2, (d_inner, dt_rank + 2 * d_state),
                                       jnp.float32)
        w_dt = 0.10 * jax.random.normal(k3, (dt_rank, d_inner), jnp.float32)
        b_dt = jnp.zeros((1, d_inner), jnp.float32)
        a_log = jnp.log(jnp.tile(
            jnp.arange(1, d_state + 1, dtype=jnp.float32)[None, :],
            (d_inner, 1)))
        d_param = jnp.ones((1, d_inner), jnp.float32)
        w_out = 0.05 * jax.random.normal(k4, (d_inner, d_model), jnp.float32)
        layers.append((w_norm, w_in, w_conv, b_conv, w_x, w_dt, b_dt,
                       a_log, d_param, w_out))

    key, kf = jax.random.split(key)
    return {
        "layers": layers,
        "norm_f": jnp.ones((1, d_model), jnp.float32),
        "w_fc": 0.05 * jax.random.normal(kf, (d_model, output_size),
                                         jnp.float32),
        "b_fc": jnp.zeros((1, output_size), jnp.float32),
    }


def prepare_kernel_params(raw, cfg, output_size):
    hp = jax.lax.Precision.HIGHEST
    dt_rank = cfg["dt_rank"]
    layers = []
    for (w_norm, w_in, w_conv, b_conv, w_x, w_dt, b_dt,
         a_log, d_param, w_out) in raw["layers"]:
        w_xdt = jnp.dot(w_x[:, :dt_rank], w_dt, precision=hp)   # fused dt path
        w_bc = w_x[:, dt_rank:]
        # single fused GEMM weight [delta_pre | B | C]; delta first => lane aligned
        w_xbc = jnp.concatenate([w_xdt, w_bc], axis=1)
        a_t = (-jnp.exp(a_log)).T                               # (d_state, d_inner)
        layers.append((
            w_norm,
            w_in.astype(jnp.bfloat16),
            w_conv, b_conv,
            w_xbc.astype(jnp.bfloat16),
            b_dt, a_t, d_param,
            w_out.astype(jnp.bfloat16),
        ))
    out_pad = ((output_size + 127) // 128) * 128                # lane-dense head
    w_fc_p = jnp.zeros((raw["w_fc"].shape[0], out_pad), jnp.float32)
    w_fc_p = w_fc_p.at[:, :output_size].set(raw["w_fc"])
    b_fc_p = jnp.zeros((1, out_pad), jnp.float32)
    b_fc_p = b_fc_p.at[:, :output_size].set(raw["b_fc"])
    return {"layers": layers, "norm_f": raw["norm_f"],
            "w_fc_p": w_fc_p, "b_fc_p": b_fc_p, "output_size": output_size}


# ----------------------------------------------------------------------------
# Pure-JAX reference (mirrors the PyTorch module math, f32)
# ----------------------------------------------------------------------------
def _ref_forward(x, params, cfg):
    hp = jax.lax.Precision.HIGHEST
    eps = cfg["eps"]
    d_inner, dt_rank, d_state, d_conv = (cfg["d_inner"], cfg["dt_rank"],
                                         cfg["d_state"], cfg["d_conv"])

    def rmsnorm(v, w):
        return v * jax.lax.rsqrt(jnp.mean(v * v, -1, keepdims=True) + eps) * w[0]

    for (w_norm, w_in, w_conv, b_conv, w_x, w_dt, b_dt,
         a_log, d_param, w_out) in params["layers"]:
        xn = rmsnorm(x, w_norm)
        xz = jnp.dot(xn, w_in, precision=hp)
        x_in, res = xz[..., :d_inner], xz[..., d_inner:]
        b, l, _ = x_in.shape
        x_pad = jnp.concatenate(
            [jnp.zeros((b, d_conv - 1, d_inner), jnp.float32), x_in], axis=1)
        conv = b_conv[0][None, None, :]
        for k in range(d_conv):
            conv = conv + x_pad[:, k:k + l, :] * w_conv[k][None, None, :]
        x_c = jax.nn.silu(conv)
        x_dbl = jnp.dot(x_c, w_x, precision=hp)
        delta_r = x_dbl[..., :dt_rank]
        Bm = x_dbl[..., dt_rank:dt_rank + d_state]
        Cm = x_dbl[..., dt_rank + d_state:]
        delta = jax.nn.softplus(jnp.dot(delta_r, w_dt, precision=hp) + b_dt[0])
        A = -jnp.exp(a_log)
        dA = jnp.exp(delta[..., None] * A[None, None])
        dBu = delta[..., None] * Bm[:, :, None, :] * x_c[..., None]
        state = jnp.zeros((b, d_inner, d_state), jnp.float32)
        ys = []
        for t in range(l):
            state = dA[:, t] * state + dBu[:, t]
            ys.append(jnp.sum(state * Cm[:, t, None, :], axis=-1))
        y = jnp.stack(ys, axis=1) + x_c * d_param[0]
        y = y * jax.nn.silu(res)
        x = x + jnp.dot(y, w_out, precision=hp)

    xn = rmsnorm(x, params["norm_f"])[:, -1, :]
    return jnp.dot(xn, params["w_fc"], precision=hp) + params["b_fc"][0]


# ----------------------------------------------------------------------------
if __name__ == "__main__":
    # Small config consistent with MinimalMambaArgs
    d_model, n_layer, d_state, expand, d_conv = 32, 2, 16, 2, 4
    cfg = {
        "d_model": d_model,
        "n_layer": n_layer,
        "d_state": d_state,
        "d_conv": d_conv,
        "d_inner": expand * d_model,
        "dt_rank": math.ceil(d_model / 16),
        "eps": 1e-5,
    }
    output_size = 10
    batch, seq = 2, 8

    key = jax.random.PRNGKey(0)
    key, kx, kp = jax.random.split(key, 3)
    x = jax.random.normal(kx, (batch, seq, d_model), jnp.float32)
    raw_params = init_params(kp, cfg, output_size)
    kparams = prepare_kernel_params(raw_params, cfg, output_size)

    # time_chunk=4 => grid=(2,) per layer, exercising the persistent
    # conv-history / scan-state carry path across chunks.
    out = mamba_model_forward(x, kparams, cfg, time_chunk=4)
    out = jax.block_until_ready(out)

    ref = _ref_forward(x, raw_params, cfg)
    assert out.shape == (batch, output_size)
    assert bool(jnp.all(jnp.isfinite(out)))
    # bf16 matmul inputs (f32 accumulation) => compare with a modest tolerance
    assert bool(jnp.allclose(out, ref, rtol=2e-2, atol=2e-2)), (out, ref)

    print("KERNEL_OK")
</pallas_src>

<mosaic_0001>
module attributes {stable_mosaic.version = 11 : i64} {
  func.func @_mamba_layer_kernel(%arg0: i32, %arg1: memref<32x32xf32, #tpu.memory_space<vmem>>, %arg2: memref<1x32xf32, #tpu.memory_space<vmem>>, %arg3: memref<32x128xbf16, #tpu.memory_space<vmem>>, %arg4: memref<4x64xf32, #tpu.memory_space<vmem>>, %arg5: memref<1x64xf32, #tpu.memory_space<vmem>>, %arg6: memref<64x96xbf16, #tpu.memory_space<vmem>>, %arg7: memref<1x64xf32, #tpu.memory_space<vmem>>, %arg8: memref<16x64xf32, #tpu.memory_space<vmem>>, %arg9: memref<1x64xf32, #tpu.memory_space<vmem>>, %arg10: memref<64x32xbf16, #tpu.memory_space<vmem>>, %arg11: memref<32x32xf32, #tpu.memory_space<vmem>>, %arg12: memref<56x64xf32, #tpu.memory_space<vmem>>, %arg13: memref<24x64xf32, #tpu.memory_space<vmem>>, %arg14: memref<8x16x64xf32, #tpu.memory_space<vmem>>, %arg15: memref<32x64xf32, #tpu.memory_space<vmem>>, %arg16: memref<32x64xf32, #tpu.memory_space<vmem>>, %arg17: memref<32x32xf32, #tpu.memory_space<vmem>>, %arg18: memref<32x64xf32, #tpu.memory_space<vmem>>) attributes {dimension_semantics = [#tpu.dimension_semantics<arbitrary>], iteration_bounds = array<i64: 2>, scalar_prefetch = 0 : i64, scratch_operands = 7 : i64, tpu.core_type = #tpu.core_type<tc>, window_params = [{transform_indices = @transform_0, window_bounds = array<i64: 32, 32>}, {pipeline_mode = #tpu.pipeline_mode<synchronous>, transform_indices = @transform_1, window_bounds = array<i64: 1, 32>}, {pipeline_mode = #tpu.pipeline_mode<synchronous>, transform_indices = @transform_2, window_bounds = array<i64: 32, 128>}, {pipeline_mode = #tpu.pipeline_mode<synchronous>, transform_indices = @transform_3, window_bounds = array<i64: 4, 64>}, {pipeline_mode = #tpu.pipeline_mode<synchronous>, transform_indices = @transform_4, window_bounds = array<i64: 1, 64>}, {pipeline_mode = #tpu.pipeline_mode<synchronous>, transform_indices = @transform_5, window_bounds = array<i64: 64, 96>}, {pipeline_mode = #tpu.pipeline_mode<synchronous>, transform_indices = @transform_6, window_bounds = array<i64: 1, 64>}, {pipeline_mode = #tpu.pipeline_mode<synchronous>, transform_indices = @transform_7, window_bounds = array<i64: 16, 64>}, {pipeline_mode = #tpu.pipeline_mode<synchronous>, transform_indices = @transform_8, window_bounds = array<i64: 1, 64>}, {pipeline_mode = #tpu.pipeline_mode<synchronous>, transform_indices = @transform_9, window_bounds = array<i64: 64, 32>}, {transform_indices = @transform_10, window_bounds = array<i64: 32, 32>}]} {
    %c0_i32 = arith.constant 0 : i32
    %0 = arith.cmpi eq, %arg0, %c0_i32 : i32
    %1 = arith.extui %0 : i1 to i32
    %c0_i32_0 = arith.constant 0 : i32
    %2 = arith.cmpi ne, %1, %c0_i32_0 : i32
    scf.if %2 {
      %cst_87 = arith.constant 0.000000e+00 : f32
      %222 = vector.broadcast %cst_87 : f32 to vector<24x64xf32>
      %c0_88 = arith.constant 0 : index
      %c0_89 = arith.constant 0 : index
      %223 = vector.load %arg13[%c0_88, %c0_89] : memref<24x64xf32, #tpu.memory_space<vmem>>, vector<24x64xf32>
      tpu.vector_store %arg13[%c0_88, %c0_89], %222 {strides = array<i32>} : memref<24x64xf32, #tpu.memory_space<vmem>>, vector<24x64xf32>,
      %cst_90 = arith.constant 0.000000e+00 : f32
      %224 = vector.broadcast %cst_90 : f32 to vector<8x16x64xf32>
      %c0_91 = arith.constant 0 : index
      %c0_92 = arith.constant 0 : index
      %c0_93 = arith.constant 0 : index
      %225 = vector.load %arg14[%c0_91, %c0_92, %c0_93] : memref<8x16x64xf32, #tpu.memory_space<vmem>>, vector<8x16x64xf32>
      tpu.vector_store %arg14[%c0_91, %c0_92, %c0_93], %224 {strides = array<i32>} : memref<8x16x64xf32, #tpu.memory_space<vmem>>, vector<8x16x64xf32>,
    } else {
    }
    %c0 = arith.constant 0 : index
    %c0_1 = arith.constant 0 : index
    %3 = vector.load %arg1[%c0, %c0_1] : memref<32x32xf32, #tpu.memory_space<vmem>>, vector<32x32xf32>
    %4 = arith.mulf %3, %3 : vector<32x32xf32>
    %cst = arith.constant dense<0.000000e+00> : vector<32xf32>
    %5 = vector.multi_reduction <add>, %4, %cst [1] : vector<32x32xf32> to vector<32xf32>
    %6 = vector.shape_cast %5 : vector<32xf32> to vector<32x1xf32>
    %cst_2 = arith.constant 3.200000e+01 : f32
    %7 = vector.broadcast %cst_2 : f32 to vector<32x1xf32>
    %8 = arith.divf %6, %7 : vector<32x1xf32>
    %cst_3 = arith.constant 9.99999974E-6 : f32
    %9 = vector.broadcast %cst_3 : f32 to vector<32x1xf32>
    %10 = arith.addf %8, %9 : vector<32x1xf32>
    %11 = math.rsqrt %10 : vector<32x1xf32>
    %12 = vector.broadcast %11 : vector<32x1xf32> to vector<32x32xf32>
    %13 = arith.mulf %3, %12 : vector<32x32xf32>
    %c0_4 = arith.constant 0 : index
    %c0_5 = arith.constant 0 : index
    %14 = vector.load %arg2[%c0_4, %c0_5] : memref<1x32xf32, #tpu.memory_space<vmem>>, vector<1x32xf32>
    %15 = vector.broadcast %14 : vector<1x32xf32> to vector<32x32xf32>
    %16 = arith.mulf %13, %15 : vector<32x32xf32>
    %17 = arith.truncf %16 : vector<32x32xf32> to vector<32x32xbf16>
    %c0_6 = arith.constant 0 : index
    %c0_7 = arith.constant 0 : index
    %18 = vector.load %arg3[%c0_6, %c0_7] : memref<32x128xbf16, #tpu.memory_space<vmem>>, vector<32x128xbf16>
    %cst_8 = arith.constant dense<0.000000e+00> : vector<32x128xf32>
    %19 = tpu.matmul %17, %18, %cst_8 {dimension_numbers = #tpu.dot_dimension_numbers<[1], [0], [0], [1], [0, 0, 1, 1], [], []>} : vector<32x32xbf16>, vector<32x128xbf16>, vector<32x128xf32> -> vector<32x128xf32>
    %20 = vector.extract_strided_slice %19 {offsets = [0, 0], sizes = [32, 64], strides = [1, 1]} : vector<32x128xf32> to vector<32x64xf32>
    %21 = vector.extract_strided_slice %19 {offsets = [0, 64], sizes = [32, 64], strides = [1, 1]} : vector<32x128xf32> to vector<32x64xf32>
    %c0_9 = arith.constant 0 : index
    %c0_10 = arith.constant 0 : index
    %22 = vector.load %arg13[%c0_9, %c0_10] : memref<24x64xf32, #tpu.memory_space<vmem>>, vector<24x64xf32>
    %c0_11 = arith.constant 0 : index
    %c0_12 = arith.constant 0 : index
    %23 = vector.load %arg12[%c0_11, %c0_12] : memref<56x64xf32, #tpu.memory_space<vmem>>, vector<24x64xf32>
    tpu.vector_store %arg12[%c0_11, %c0_12], %22 {strides = array<i32>} : memref<56x64xf32, #tpu.memory_space<vmem>>, vector<24x64xf32>,
    %c24 = arith.constant 24 : index
    %c0_13 = arith.constant 0 : index
    %24 = vector.load %arg12[%c24, %c0_13] : memref<56x64xf32, #tpu.memory_space<vmem>>, vector<32x64xf32>
    tpu.vector_store %arg12[%c24, %c0_13], %20 {strides = array<i32>} : memref<56x64xf32, #tpu.memory_space<vmem>>, vector<32x64xf32>,
    %25 = vector.extract_strided_slice %20 {offsets = [8, 0], sizes = [24, 64], strides = [1, 1]} : vector<32x64xf32> to vector<24x64xf32>
    %c0_14 = arith.constant 0 : index
    %c0_15 = arith.constant 0 : index
    %26 = vector.load %arg13[%c0_14, %c0_15] : memref<24x64xf32, #tpu.memory_space<vmem>>, vector<24x64xf32>
    tpu.vector_store %arg13[%c0_14, %c0_15], %25 {strides = array<i32>} : memref<24x64xf32, #tpu.memory_space<vmem>>, vector<24x64xf32>,
    %c0_16 = arith.constant 0 : index
    %c0_17 = arith.constant 0 : index
    %27 = vector.load %arg5[%c0_16, %c0_17] : memref<1x64xf32, #tpu.memory_space<vmem>>, vector<1x64xf32>
    %28 = vector.shape_cast %27 : vector<1x64xf32> to vector<1x64xf32>
    %29 = vector.broadcast %28 : vector<1x64xf32> to vector<32x64xf32>
    %c0_18 = arith.constant 0 : index
    %c0_19 = arith.constant 0 : index
    %30 = vector.load %arg12[%c0_18, %c0_19] : memref<56x64xf32, #tpu.memory_space<vmem>>, vector<32x64xf32>
    %c0_20 = arith.constant 0 : index
    %c0_21 = arith.constant 0 : index
    %31 = vector.load %arg4[%c0_20, %c0_21] : memref<4x64xf32, #tpu.memory_space<vmem>>, vector<1x64xf32>
    %32 = vector.broadcast %31 : vector<1x64xf32> to vector<32x64xf32>
    %33 = arith.mulf %30, %32 : vector<32x64xf32>
    %34 = arith.addf %29, %33 : vector<32x64xf32>
    %c8 = arith.constant 8 : index
    %c0_22 = arith.constant 0 : index
    %35 = vector.load %arg12[%c8, %c0_22] : memref<56x64xf32, #tpu.memory_space<vmem>>, vector<32x64xf32>
    %c1 = arith.constant 1 : index
    %c0_23 = arith.constant 0 : index
    %36 = vector.load %arg4[%c1, %c0_23] : memref<4x64xf32, #tpu.memory_space<vmem>>, vector<1x64xf32>
    %37 = vector.broadcast %36 : vector<1x64xf32> to vector<32x64xf32>
    %38 = arith.mulf %35, %37 : vector<32x64xf32>
    %39 = arith.addf %34, %38 : vector<32x64xf32>
    %c16 = arith.constant 16 : index
    %c0_24 = arith.constant 0 : index
    %40 = vector.load %arg12[%c16, %c0_24] : memref<56x64xf32, #tpu.memory_space<vmem>>, vector<32x64xf32>
    %c2 = arith.constant 2 : index
    %c0_25 = arith.constant 0 : index
    %41 = vector.load %arg4[%c2, %c0_25] : memref<4x64xf32, #tpu.memory_space<vmem>>, vector<1x64xf32>
    %42 = vector.broadcast %41 : vector<1x64xf32> to vector<32x64xf32>
    %43 = arith.mulf %40, %42 : vector<32x64xf32>
    %44 = arith.addf %39, %43 : vector<32x64xf32>
    %c24_26 = arith.constant 24 : index
    %c0_27 = arith.constant 0 : index
    %45 = vector.load %arg12[%c24_26, %c0_27] : memref<56x64xf32, #tpu.memory_space<vmem>>, vector<32x64xf32>
    %c3 = arith.constant 3 : index
    %c0_28 = arith.constant 0 : index
    %46 = vector.load %arg4[%c3, %c0_28] : memref<4x64xf32, #tpu.memory_space<vmem>>, vector<1x64xf32>
    %47 = vector.broadcast %46 : vector<1x64xf32> to vector<32x64xf32>
    %48 = arith.mulf %45, %47 : vector<32x64xf32>
    %49 = arith.addf %44, %48 : vector<32x64xf32>
    %50 = arith.negf %49 : vector<32x64xf32>
    %51 = math.exp %50 : vector<32x64xf32>
    %cst_29 = arith.constant 1.000000e+00 : f32
    %52 = vector.broadcast %cst_29 : f32 to vector<32x64xf32>
    %53 = arith.addf %52, %51 : vector<32x64xf32>
    %54 = arith.divf %52, %53 : vector<32x64xf32>
    %55 = arith.mulf %49, %54 : vector<32x64xf32>
    %56 = arith.truncf %55 : vector<32x64xf32> to vector<32x64xbf16>
    %c0_30 = arith.constant 0 : index
    %c0_31 = arith.constant 0 : index
    %57 = vector.load %arg6[%c0_30, %c0_31] : memref<64x96xbf16, #tpu.memory_space<vmem>>, vector<64x96xbf16>
    %cst_32 = arith.constant dense<0.000000e+00> : vector<32x96xf32>
    %58 = tpu.matmul %56, %57, %cst_32 {dimension_numbers = #tpu.dot_dimension_numbers<[1], [0], [0], [1], [0, 0, 1, 1], [], []>} : vector<32x64xbf16>, vector<64x96xbf16>, vector<32x96xf32> -> vector<32x96xf32>
    %59 = vector.extract_strided_slice %58 {offsets = [0, 0], sizes = [32, 64], strides = [1, 1]} : vector<32x96xf32> to vector<32x64xf32>
    %c0_33 = arith.constant 0 : index
    %c0_34 = arith.constant 0 : index
    %60 = vector.load %arg7[%c0_33, %c0_34] : memref<1x64xf32, #tpu.memory_space<vmem>>, vector<1x64xf32>
    %61 = vector.broadcast %60 : vector<1x64xf32> to vector<32x64xf32>
    %62 = arith.addf %59, %61 : vector<32x64xf32>
    %cst_35 = arith.constant 0.000000e+00 : f32
    %63 = vector.broadcast %cst_35 : f32 to vector<32x64xf32>
    %64 = arith.maximumf %62, %63 : vector<32x64xf32>
    %65 = vector.broadcast %cst_35 : f32 to vector<32x64xf32>
    %66 = arith.subf %62, %65 : vector<32x64xf32>
    %67 = arith.cmpf one, %66, %66 : vector<32x64xf32>
    %68 = vector.broadcast %cst_35 : f32 to vector<32x64xf32>
    %69 = arith.addf %62, %68 : vector<32x64xf32>
    %70 = math.absf %66 : vector<32x64xf32>
    %cst_36 = arith.constant 0.000000e+00 : f32
    %71 = vector.broadcast %cst_36 : f32 to vector<32x64xf32>
    %72 = arith.subf %71, %70 : vector<32x64xf32>
    %73 = math.exp %72 : vector<32x64xf32>
    %74 = math.log1p %73 : vector<32x64xf32>
    %75 = arith.addf %64, %74 : vector<32x64xf32>
    %76 = arith.select %67, %69, %75 : vector<32x64xi1>, vector<32x64xf32>
    %c0_37 = arith.constant 0 : index
    %c0_38 = arith.constant 0 : index
    %77 = vector.load %arg15[%c0_37, %c0_38] : memref<32x64xf32, #tpu.memory_space<vmem>>, vector<32x64xf32>
    tpu.vector_store %arg15[%c0_37, %c0_38], %76 {strides = array<i32>} : memref<32x64xf32, #tpu.memory_space<vmem>>, vector<32x64xf32>,
    %c0_39 = arith.constant 0 : index
    %c0_40 = arith.constant 0 : index
    %78 = vector.load %arg16[%c0_39, %c0_40] : memref<32x64xf32, #tpu.memory_space<vmem>>, vector<32x64xf32>
    tpu.vector_store %arg16[%c0_39, %c0_40], %55 {strides = array<i32>} : memref<32x64xf32, #tpu.memory_space<vmem>>, vector<32x64xf32>,
    %79 = vector.extract_strided_slice %58 {offsets = [0, 64], sizes = [32, 32], strides = [1, 1]} : vector<32x96xf32> to vector<32x32xf32>
    %c0_41 = arith.constant 0 : index
    %c0_42 = arith.constant 0 : index
    %80 = vector.load %arg17[%c0_41, %c0_42] : memref<32x32xf32, #tpu.memory_space<vmem>>, vector<32x32xf32>
    tpu.vector_store %arg17[%c0_41, %c0_42], %79 {strides = array<i32>} : memref<32x32xf32, #tpu.memory_space<vmem>>, vector<32x32xf32>,
    %c0_43 = arith.constant 0 : index
    %c0_44 = arith.constant 0 : index
    %81 = vector.load %arg8[%c0_43, %c0_44] : memref<16x64xf32, #tpu.memory_space<vmem>>, vector<16x64xf32>
    %c0_45 = arith.constant 0 : index
    %c0_46 = arith.constant 0 : index
    %c0_47 = arith.constant 0 : index
    %82 = vector.load %arg14[%c0_45, %c0_46, %c0_47] : memref<8x16x64xf32, #tpu.memory_space<vmem>>, vector<8x16x64xf32>
    %c0_i32_48 = arith.constant 0 : i32
    %c8_i32 = arith.constant 8 : i32
    %83 = arith.muli %c0_i32_48, %c8_i32 : i32
    %84 = tpu.assume_multiple %83, 8 : i32
    %85 = arith.index_cast %84 : i32 to index
    %c0_49 = arith.constant 0 : index
    %86 = vector.load %arg15[%85, %c0_49] : memref<32x64xf32, #tpu.memory_space<vmem>>, vector<8x64xf32>
    %87 = arith.index_cast %84 : i32 to index
    %c0_50 = arith.constant 0 : index
    %88 = vector.load %arg16[%87, %c0_50] : memref<32x64xf32, #tpu.memory_space<vmem>>, vector<8x64xf32>
    %89 = arith.index_cast %84 : i32 to index
    %c0_51 = arith.constant 0 : index
    %90 = vector.load %arg17[%89, %c0_51] : memref<32x32xf32, #tpu.memory_space<vmem>>, vector<8x32xf32>
    %91 = vector.extract_strided_slice %90 {offsets = [0, 0], sizes = [8, 16], strides = [1, 1]} : vector<8x32xf32> to vector<8x16xf32>
    %92 = vector.extract_strided_slice %90 {offsets = [0, 16], sizes = [8, 16], strides = [1, 1]} : vector<8x32xf32> to vector<8x16xf32>
    %93 = vector.shape_cast %86 : vector<8x64xf32> to vector<8x1x64xf32>
    %94 = vector.shape_cast %81 : vector<16x64xf32> to vector<1x16x64xf32>
    %95 = vector.broadcast %93 : vector<8x1x64xf32> to vector<8x16x64xf32>
    %96 = vector.broadcast %94 : vector<1x16x64xf32> to vector<8x16x64xf32>
    %97 = arith.mulf %95, %96 : vector<8x16x64xf32>
    %98 = math.exp %97 : vector<8x16x64xf32>
    %99 = arith.mulf %86, %88 : vector<8x64xf32>
    %100 = vector.shape_cast %99 : vector<8x64xf32> to vector<8x1x64xf32>
    %101 = vector.shape_cast %91 : vector<8x16xf32> to vector<8x16x1xf32>
    %102 = vector.broadcast %100 : vector<8x1x64xf32> to vector<8x16x64xf32>
    %103 = vector.broadcast %101 : vector<8x16x1xf32> to vector<8x16x64xf32>
    %104 = arith.mulf %102, %103 : vector<8x16x64xf32>
    %105 = arith.mulf %98, %82 : vector<8x16x64xf32>
    %106 = arith.addf %105, %104 : vector<8x16x64xf32>
    %107 = vector.shape_cast %92 : vector<8x16xf32> to vector<8x16x1xf32>
    %108 = vector.broadcast %107 : vector<8x16x1xf32> to vector<8x16x64xf32>
    %109 = arith.mulf %106, %108 : vector<8x16x64xf32>
    %cst_52 = arith.constant dense<0.000000e+00> : vector<8x64xf32>
    %110 = vector.multi_reduction <add>, %109, %cst_52 [1] : vector<8x16x64xf32> to vector<8x64xf32>
    %111 = arith.index_cast %84 : i32 to index
    %c0_53 = arith.constant 0 : index
    %112 = vector.load %arg18[%111, %c0_53] : memref<32x64xf32, #tpu.memory_space<vmem>>, vector<8x64xf32>
    tpu.vector_store %arg18[%111, %c0_53], %110 {strides = array<i32>} : memref<32x64xf32, #tpu.memory_space<vmem>>, vector<8x64xf32>,
    %c1_i32 = arith.constant 1 : i32
    %c8_i32_54 = arith.constant 8 : i32
    %113 = arith.muli %c1_i32, %c8_i32_54 : i32
    %114 = tpu.assume_multiple %113, 8 : i32
    %115 = arith.index_cast %114 : i32 to index
    %c0_55 = arith.constant 0 : index
    %116 = vector.load %arg15[%115, %c0_55] : memref<32x64xf32, #tpu.memory_space<vmem>>, vector<8x64xf32>
    %117 = arith.index_cast %114 : i32 to index
    %c0_56 = arith.constant 0 : index
    %118 = vector.load %arg16[%117, %c0_56] : memref<32x64xf32, #tpu.memory_space<vmem>>, vector<8x64xf32>
    %119 = arith.index_cast %114 : i32 to index
    %c0_57 = arith.constant 0 : index
    %120 = vector.load %arg17[%119, %c0_57] : memref<32x32xf32, #tpu.memory_space<vmem>>, vector<8x32xf32>
    %121 = vector.extract_strided_slice %120 {offsets = [0, 0], sizes = [8, 16], strides = [1, 1]} : vector<8x32xf32> to vector<8x16xf32>
    %122 = vector.extract_strided_slice %120 {offsets = [0, 16], sizes = [8, 16], strides = [1, 1]} : vector<8x32xf32> to vector<8x16xf32>
    %123 = vector.shape_cast %116 : vector<8x64xf32> to vector<8x1x64xf32>
    %124 = vector.shape_cast %81 : vector<16x64xf32> to vector<1x16x64xf32>
    %125 = vector.broadcast %123 : vector<8x1x64xf32> to vector<8x16x64xf32>
    %126 = vector.broadcast %124 : vector<1x16x64xf32> to vector<8x16x64xf32>
    %127 = arith.mulf %125, %126 : vector<8x16x64xf32>
    %128 = math.exp %127 : vector<8x16x64xf32>
    %129 = arith.mulf %116, %118 : vector<8x64xf32>
    %130 = vector.shape_cast %129 : vector<8x64xf32> to vector<8x1x64xf32>
    %131 = vector.shape_cast %121 : vector<8x16xf32> to vector<8x16x1xf32>
    %132 = vector.broadcast %130 : vector<8x1x64xf32> to vector<8x16x64xf32>
    %133 = vector.broadcast %131 : vector<8x16x1xf32> to vector<8x16x64xf32>
    %134 = arith.mulf %132, %133 : vector<8x16x64xf32>
    %135 = arith.mulf %128, %106 : vector<8x16x64xf32>
    %136 = arith.addf %135, %134 : vector<8x16x64xf32>
    %137 = vector.shape_cast %122 : vector<8x16xf32> to vector<8x16x1xf32>
    %138 = vector.broadcast %137 : vector<8x16x1xf32> to vector<8x16x64xf32>
    %139 = arith.mulf %136, %138 : vector<8x16x64xf32>
    %cst_58 = arith.constant dense<0.000000e+00> : vector<8x64xf32>
    %140 = vector.multi_reduction <add>, %139, %cst_58 [1] : vector<8x16x64xf32> to vector<8x64xf32>
    %141 = arith.index_cast %114 : i32 to index
    %c0_59 = arith.constant 0 : index
    %142 = vector.load %arg18[%141, %c0_59] : memref<32x64xf32, #tpu.memory_space<vmem>>, vector<8x64xf32>
    tpu.vector_store %arg18[%141, %c0_59], %140 {strides = array<i32>} : memref<32x64xf32, #tpu.memory_space<vmem>>, vector<8x64xf32>,
    %c2_i32 = arith.constant 2 : i32
    %c8_i32_60 = arith.constant 8 : i32
    %143 = arith.muli %c2_i32, %c8_i32_60 : i32
    %144 = tpu.assume_multiple %143, 8 : i32
    %145 = arith.index_cast %144 : i32 to index
    %c0_61 = arith.constant 0 : index
    %146 = vector.load %arg15[%145, %c0_61] : memref<32x64xf32, #tpu.memory_space<vmem>>, vector<8x64xf32>
    %147 = arith.index_cast %144 : i32 to index
    %c0_62 = arith.constant 0 : index
    %148 = vector.load %arg16[%147, %c0_62] : memref<32x64xf32, #tpu.memory_space<vmem>>, vector<8x64xf32>
    %149 = arith.index_cast %144 : i32 to index
    %c0_63 = arith.constant 0 : index
    %150 = vector.load %arg17[%149, %c0_63] : memref<32x32xf32, #tpu.memory_space<vmem>>, vector<8x32xf32>
    %151 = vector.extract_strided_slice %150 {offsets = [0, 0], sizes = [8, 16], strides = [1, 1]} : vector<8x32xf32> to vector<8x16xf32>
    %152 = vector.extract_strided_slice %150 {offsets = [0, 16], sizes = [8, 16], strides = [1, 1]} : vector<8x32xf32> to vector<8x16xf32>
    %153 = vector.shape_cast %146 : vector<8x64xf32> to vector<8x1x64xf32>
    %154 = vector.shape_cast %81 : vector<16x64xf32> to vector<1x16x64xf32>
    %155 = vector.broadcast %153 : vector<8x1x64xf32> to vector<8x16x64xf32>
    %156 = vector.broadcast %154 : vector<1x16x64xf32> to vector<8x16x64xf32>
    %157 = arith.mulf %155, %156 : vector<8x16x64xf32>
    %158 = math.exp %157 : vector<8x16x64xf32>
    %159 = arith.mulf %146, %148 : vector<8x64xf32>
    %160 = vector.shape_cast %159 : vector<8x64xf32> to vector<8x1x64xf32>
    %161 = vector.shape_cast %151 : vector<8x16xf32> to vector<8x16x1xf32>
    %162 = vector.broadcast %160 : vector<8x1x64xf32> to vector<8x16x64xf32>
    %163 = vector.broadcast %161 : vector<8x16x1xf32> to vector<8x16x64xf32>
    %164 = arith.mulf %162, %163 : vector<8x16x64xf32>
    %165 = arith.mulf %158, %136 : vector<8x16x64xf32>
    %166 = arith.addf %165, %164 : vector<8x16x64xf32>
    %167 = vector.shape_cast %152 : vector<8x16xf32> to vector<8x16x1xf32>
    %168 = vector.broadcast %167 : vector<8x16x1xf32> to vector<8x16x64xf32>
    %169 = arith.mulf %166, %168 : vector<8x16x64xf32>
    %cst_64 = arith.constant dense<0.000000e+00> : vector<8x64xf32>
    %170 = vector.multi_reduction <add>, %169, %cst_64 [1] : vector<8x16x64xf32> to vector<8x64xf32>
    %171 = arith.index_cast %144 : i32 to index
    %c0_65 = arith.constant 0 : index
    %172 = vector.load %arg18[%171, %c0_65] : memref<32x64xf32, #tpu.memory_space<vmem>>, vector<8x64xf32>
    tpu.vector_store %arg18[%171, %c0_65], %170 {strides = array<i32>} : memref<32x64xf32, #tpu.memory_space<vmem>>, vector<8x64xf32>,
    %c3_i32 = arith.constant 3 : i32
    %c8_i32_66 = arith.constant 8 : i32
    %173 = arith.muli %c3_i32, %c8_i32_66 : i32
    %174 = tpu.assume_multiple %173, 8 : i32
    %175 = arith.index_cast %174 : i32 to index
    %c0_67 = arith.constant 0 : index
    %176 = vector.load %arg15[%175, %c0_67] : memref<32x64xf32, #tpu.memory_space<vmem>>, vector<8x64xf32>
    %177 = arith.index_cast %174 : i32 to index
    %c0_68 = arith.constant 0 : index
    %178 = vector.load %arg16[%177, %c0_68] : memref<32x64xf32, #tpu.memory_space<vmem>>, vector<8x64xf32>
    %179 = arith.index_cast %174 : i32 to index
    %c0_69 = arith.constant 0 : index
    %180 = vector.load %arg17[%179, %c0_69] : memref<32x32xf32, #tpu.memory_space<vmem>>, vector<8x32xf32>
    %181 = vector.extract_strided_slice %180 {offsets = [0, 0], sizes = [8, 16], strides = [1, 1]} : vector<8x32xf32> to vector<8x16xf32>
    %182 = vector.extract_strided_slice %180 {offsets = [0, 16], sizes = [8, 16], strides = [1, 1]} : vector<8x32xf32> to vector<8x16xf32>
    %183 = vector.shape_cast %176 : vector<8x64xf32> to vector<8x1x64xf32>
    %184 = vector.shape_cast %81 : vector<16x64xf32> to vector<1x16x64xf32>
    %185 = vector.broadcast %183 : vector<8x1x64xf32> to vector<8x16x64xf32>
    %186 = vector.broadcast %184 : vector<1x16x64xf32> to vector<8x16x64xf32>
    %187 = arith.mulf %185, %186 : vector<8x16x64xf32>
    %188 = math.exp %187 : vector<8x16x64xf32>
    %189 = arith.mulf %176, %178 : vector<8x64xf32>
    %190 = vector.shape_cast %189 : vector<8x64xf32> to vector<8x1x64xf32>
    %191 = vector.shape_cast %181 : vector<8x16xf32> to vector<8x16x1xf32>
    %192 = vector.broadcast %190 : vector<8x1x64xf32> to vector<8x16x64xf32>
    %193 = vector.broadcast %191 : vector<8x16x1xf32> to vector<8x16x64xf32>
    %194 = arith.mulf %192, %193 : vector<8x16x64xf32>
    %195 = arith.mulf %188, %166 : vector<8x16x64xf32>
    %196 = arith.addf %195, %194 : vector<8x16x64xf32>
    %197 = vector.shape_cast %182 : vector<8x16xf32> to vector<8x16x1xf32>
    %198 = vector.broadcast %197 : vector<8x16x1xf32> to vector<8x16x64xf32>
    %199 = arith.mulf %196, %198 : vector<8x16x64xf32>
    %cst_70 = arith.constant dense<0.000000e+00> : vector<8x64xf32>
    %200 = vector.multi_reduction <add>, %199, %cst_70 [1] : vector<8x16x64xf32> to vector<8x64xf32>
    %201 = arith.index_cast %174 : i32 to index
    %c0_71 = arith.constant 0 : index
    %202 = vector.load %arg18[%201, %c0_71] : memref<32x64xf32, #tpu.memory_space<vmem>>, vector<8x64xf32>
    tpu.vector_store %arg18[%201, %c0_71], %200 {strides = array<i32>} : memref<32x64xf32, #tpu.memory_space<vmem>>, vector<8x64xf32>,
    %c4_i32 = arith.constant 4 : i32
    %c0_72 = arith.constant 0 : index
    %c0_73 = arith.constant 0 : index
    %c0_74 = arith.constant 0 : index
    %203 = vector.load %arg14[%c0_72, %c0_73, %c0_74] : memref<8x16x64xf32, #tpu.memory_space<vmem>>, vector<8x16x64xf32>
    tpu.vector_store %arg14[%c0_72, %c0_73, %c0_74], %196 {strides = array<i32>} : memref<8x16x64xf32, #tpu.memory_space<vmem>>, vector<8x16x64xf32>,
    %c0_75 = arith.constant 0 : index
    %c0_76 = arith.constant 0 : index
    %204 = vector.load %arg18[%c0_75, %c0_76] : memref<32x64xf32, #tpu.memory_space<vmem>>, vector<32x64xf32>
    %c0_77 = arith.constant 0 : index
    %c0_78 = arith.constant 0 : index
    %205 = vector.load %arg16[%c0_77, %c0_78] : memref<32x64xf32, #tpu.memory_space<vmem>>, vector<32x64xf32>
    %c0_79 = arith.constant 0 : index
    %c0_80 = arith.constant 0 : index
    %206 = vector.load %arg9[%c0_79, %c0_80] : memref<1x64xf32, #tpu.memory_space<vmem>>, vector<1x64xf32>
    %207 = vector.broadcast %206 : vector<1x64xf32> to vector<32x64xf32>
    %208 = arith.mulf %205, %207 : vector<32x64xf32>
    %209 = arith.addf %204, %208 : vector<32x64xf32>
    %210 = arith.negf %21 : vector<32x64xf32>
    %211 = math.exp %210 : vector<32x64xf32>
    %cst_81 = arith.constant 1.000000e+00 : f32
    %212 = vector.broadcast %cst_81 : f32 to vector<32x64xf32>
    %213 = arith.addf %212, %211 : vector<32x64xf32>
    %214 = arith.divf %212, %213 : vector<32x64xf32>
    %215 = arith.mulf %21, %214 : vector<32x64xf32>
    %216 = arith.mulf %209, %215 : vector<32x64xf32>
    %217 = arith.truncf %216 : vector<32x64xf32> to vector<32x64xbf16>
    %c0_82 = arith.constant 0 : index
    %c0_83 = arith.constant 0 : index
    %218 = vector.load %arg10[%c0_82, %c0_83] : memref<64x32xbf16, #tpu.memory_space<vmem>>, vector<64x32xbf16>
    %cst_84 = arith.constant dense<0.000000e+00> : vector<32x32xf32>
    %219 = tpu.matmul %217, %218, %cst_84 {dimension_numbers = #tpu.dot_dimension_numbers<[1], [0], [0], [1], [0, 0, 1, 1], [], []>} : vector<32x64xbf16>, vector<64x32xbf16>, vector<32x32xf32> -> vector<32x32xf32>
    %220 = arith.addf %3, %219 : vector<32x32xf32>
    %c0_85 = arith.constant 0 : index
    %c0_86 = arith.constant 0 : index
    %221 = vector.load %arg11[%c0_85, %c0_86] : memref<32x32xf32, #tpu.memory_space<vmem>>, vector<32x32xf32>
    tpu.vector_store %arg11[%c0_85, %c0_86], %220 {strides = array<i32>} : memref<32x32xf32, #tpu.memory_space<vmem>>, vector<32x32xf32>,
    return
  }
  func.func @transform_0(%arg0: i32) -> (i32, i32) {
    %c0_i32 = arith.constant 0 : i32
    %c0_i32_0 = arith.constant 0 : i32
    return %arg0, %c0_i32 : i32, i32
  }
  func.func @transform_1(%arg0: i32) -> (i32, i32) {
    %c0_i32 = arith.constant 0 : i32
    %c0_i32_0 = arith.constant 0 : i32
    %c0_i32_1 = arith.constant 0 : i32
    return %c0_i32, %c0_i32_0 : i32, i32
  }
  func.func @transform_2(%arg0: i32) -> (i32, i32) {
    %c0_i32 = arith.constant 0 : i32
    %c0_i32_0 = arith.constant 0 : i32
    %c0_i32_1 = arith.constant 0 : i32
    return %c0_i32, %c0_i32_0 : i32, i32
  }
  func.func @transform_3(%arg0: i32) -> (i32, i32) {
    %c0_i32 = arith.constant 0 : i32
    %c0_i32_0 = arith.constant 0 : i32
    %c0_i32_1 = arith.constant 0 : i32
    return %c0_i32, %c0_i32_0 : i32, i32
  }
  func.func @transform_4(%arg0: i32) -> (i32, i32) {
    %c0_i32 = arith.constant 0 : i32
    %c0_i32_0 = arith.constant 0 : i32
    %c0_i32_1 = arith.constant 0 : i32
    return %c0_i32, %c0_i32_0 : i32, i32
  }
  func.func @transform_5(%arg0: i32) -> (i32, i32) {
    %c0_i32 = arith.constant 0 : i32
    %c0_i32_0 = arith.constant 0 : i32
    %c0_i32_1 = arith.constant 0 : i32
    return %c0_i32, %c0_i32_0 : i32, i32
  }
  func.func @transform_6(%arg0: i32) -> (i32, i32) {
    %c0_i32 = arith.constant 0 : i32
    %c0_i32_0 = arith.constant 0 : i32
    %c0_i32_1 = arith.constant 0 : i32
    return %c0_i32, %c0_i32_0 : i32, i32
  }
  func.func @transform_7(%arg0: i32) -> (i32, i32) {
    %c0_i32 = arith.constant 0 : i32
    %c0_i32_0 = arith.constant 0 : i32
    %c0_i32_1 = arith.constant 0 : i32
    return %c0_i32, %c0_i32_0 : i32, i32
  }
  func.func @transform_8(%arg0: i32) -> (i32, i32) {
    %c0_i32 = arith.constant 0 : i32
    %c0_i32_0 = arith.constant 0 : i32
    %c0_i32_1 = arith.constant 0 : i32
    return %c0_i32, %c0_i32_0 : i32, i32
  }
  func.func @transform_9(%arg0: i32) -> (i32, i32) {
    %c0_i32 = arith.constant 0 : i32
    %c0_i32_0 = arith.constant 0 : i32
    %c0_i32_1 = arith.constant 0 : i32
    return %c0_i32, %c0_i32_0 : i32, i32
  }
  func.func @transform_10(%arg0: i32) -> (i32, i32) {
    %c0_i32 = arith.constant 0 : i32
    %c0_i32_0 = arith.constant 0 : i32
    return %arg0, %c0_i32 : i32, i32
  }
}

</mosaic_0001>

<llo_original>
// kernel: tpu_custom_call.1
$region0: #{tpu_custom_call.1}
  #allocation0 [shape = 'u32[]', space=smem, size = 0x4, offset = 0x4, fixed_abs, tag = 'smem constant byte address 0x4 - core index']
  #allocation1 [shape = 'u32[144,128]{1,0:T(1,128)}', space=vmem, size = 0x12000, scoped, tag = 'internal scratch']
  #allocation2 [shape = 'f32[56,64]{1,0:T(8,128)}', space=vmem, size = 0x7000, scoped, tag = 'scratch operand']
  #allocation3 [shape = 'f32[24,64]{1,0:T(8,128)}', space=vmem, size = 0x3000, scoped, tag = 'scratch operand']
  #allocation4 [shape = 'f32[8,16,64]{2,1,0:T(8,128)}', space=vmem, size = 0x10000, scoped, tag = 'scratch operand']
  #allocation5 [shape = 'f32[32,64]{1,0:T(8,128)}', space=vmem, size = 0x4000, scoped, tag = 'scratch operand']
  #allocation6 [shape = 'f32[32,64]{1,0:T(8,128)}', space=vmem, size = 0x4000, scoped, tag = 'scratch operand']
  #allocation7 [shape = 'f32[32,32]{1,0:T(8,128)}', space=vmem, size = 0x4000, scoped, tag = 'scratch operand']
  #allocation8 [shape = 'f32[32,64]{1,0:T(8,128)}', space=vmem, size = 0x4000, scoped, tag = 'scratch operand']
  %s0 = inlined_call_operand.vmem [shape: f32[64,32], index: 0, kind: input, shape index: {}]
  %s1 = inlined_call_operand.vmem [shape: f32[1,32], index: 1, kind: input, shape index: {}]
  %s2 = inlined_call_operand.vmem [shape: bf16[32,128], index: 2, kind: input, shape index: {}]
  %s3 = inlined_call_operand.vmem [shape: f32[4,64], index: 3, kind: input, shape index: {}]
  %s4 = inlined_call_operand.vmem [shape: f32[1,64], index: 4, kind: input, shape index: {}]
  %s5 = inlined_call_operand.vmem [shape: bf16[64,96], index: 5, kind: input, shape index: {}]
  %s6 = inlined_call_operand.vmem [shape: f32[1,64], index: 6, kind: input, shape index: {}]
  %s7 = inlined_call_operand.vmem [shape: f32[16,64], index: 7, kind: input, shape index: {}]
  %s8 = inlined_call_operand.vmem [shape: f32[1,64], index: 8, kind: input, shape index: {}]
  %s9 = inlined_call_operand.vmem [shape: bf16[64,32], index: 9, kind: input, shape index: {}]
  %s10 = inlined_call_operand.vmem [shape: f32[64,32], index: 10, kind: output, shape index: {}]
  %s11 = sld [smem:[#allocation0]]
  $region77: #{tpu_custom_call.1} parent=0
    _
  %s13 = ssub.s32 1, %s11
  %s14 = scalar_select 0, %s13, %s11
  loop: start=0, step=1, limit=4
  $region2: #{tpu_custom_call.1} parent=0 // loop_pre_header
    _
  $region3: #{tpu_custom_call.1} parent=0 // loop_header
    %s16 = sphi 0, %s20
    %p17 = scmp.ge.s32.totalorder %s16, 4
    %s26 = sphi 0, %s28
    %s29 = sphi 0, %s26
    %s30 = sphi 0, %s29
    %s46 = sphi 0, %s30
    %s50 = sphi 0, %s50
    %s52 = sphi 0, %s50
    %s53 = sphi 0, %s52
    %s67 = sphi 0, %s53
    %s71 = sphi 0, %s71
    %s73 = sphi 0, %s71
    %s74 = sphi 0, %s73
    %s88 = sphi 0, %s74
    %s92 = sphi 0, %s92
    %s94 = sphi 0, %s92
    %s95 = sphi 0, %s94
    %s109 = sphi 0, %s95
    %s113 = sphi 0, %s113
    %s115 = sphi 0, %s113
    %s116 = sphi 0, %s115
    %s130 = sphi 0, %s116
    %s134 = sphi 0, %s134
    %s136 = sphi 0, %s134
    %s137 = sphi 0, %s136
    %s151 = sphi 0, %s137
    %s155 = sphi 0, %s155
    %s157 = sphi 0, %s155
    %s158 = sphi 0, %s157
    %s172 = sphi 0, %s158
    %s176 = sphi 0, %s176
    %s178 = sphi 0, %s176
    %s179 = sphi 0, %s178
    %s193 = sphi 0, %s179
    %s197 = sphi 0, %s197
    %s199 = sphi 0, %s197
    %s200 = sphi 0, %s199
    %s214 = sphi 0, %s200
    %s218 = sphi 0, %s218
    %s220 = sphi 0, %s218
    %s221 = sphi 0, %s220
    %s235 = sphi 0, %s221
    %s241 = sphi 0, %s243
    %s244 = sphi 0, %s241
    %s245 = sphi 0, %s244
    %s261 = sphi 0, %s245
  $region4: #{tpu_custom_call.1} parent=0 // loop_header_branch
    %19 = sbr.rel (%p17) target = $region8
  $region5: #{tpu_custom_call.1} parent=0 // loop_body
    %s21 = ssub.s32 %s16, 1
    %s22 = ssub.s32 %s16, 2
    %s23 = sadd.s32 %s16, 1
    %s24 = ssub.s32 %s16, %s23
    %p25 = scmp.eq.s32.totalorder %s24, 0
    %s27 = sadd.s32 %s26, 1
    %s28 = scalar_select %p25, %s26, %s27
    %p31 = pneg %p25
    %p32 = scmp.eq.s32.totalorder %s16, 1
    %p33 = por %p31, %p32
    %p34 = scmp.ne.s32.totalorder %s26, %s29
    %p35 = scmp.eq.s32.totalorder %s16, 0
    %p36 = por %p34, %p35
    %p37 = scmp.ne.s32.totalorder %s26, %s29
    %p38 = scmp.eq.s32.totalorder %s21, 1
    %p39 = por %p37, %p38
    %p40 = scmp.ne.s32.totalorder %s29, %s30
    %p41 = scmp.eq.s32.totalorder %s21, 0
    %p42 = por %p40, %p41
    %p43 = scmp.ne.s32.totalorder %s29, %s30
    %p44 = scmp.eq.s32.totalorder %s22, 1
    %p45 = por %p43, %p44
    %p47 = scmp.ne.s32.totalorder %s30, %s46
    %p48 = scmp.eq.s32.totalorder %s22, 0
    %p49 = por %p47, %p48
    %s51 = sadd.s32 %s50, 1
    %p54 = scmp.eq.s32.totalorder %s16, 1
    %p55 = scmp.ne.s32.totalorder %s50, %s52
    %p56 = scmp.eq.s32.totalorder %s16, 0
    %p57 = por %p55, %p56
    %p58 = scmp.ne.s32.totalorder %s50, %s52
    %p59 = scmp.eq.s32.totalorder %s21, 1
    %p60 = por %p58, %p59
    %p61 = scmp.ne.s32.totalorder %s52, %s53
    %p62 = scmp.eq.s32.totalorder %s21, 0
    %p63 = por %p61, %p62
    %p64 = scmp.ne.s32.totalorder %s52, %s53
    %p65 = scmp.eq.s32.totalorder %s22, 1
    %p66 = por %p64, %p65
    %p68 = scmp.ne.s32.totalorder %s53, %s67
    %p69 = scmp.eq.s32.totalorder %s22, 0
    %p70 = por %p68, %p69
    %s72 = sadd.s32 %s71, 1
    %p75 = scmp.eq.s32.totalorder %s16, 1
    %p76 = scmp.ne.s32.totalorder %s71, %s73
    %p77 = scmp.eq.s32.totalorder %s16, 0
    %p78 = por %p76, %p77
    %p79 = scmp.ne.s32.totalorder %s71, %s73
    %p80 = scmp.eq.s32.totalorder %s21, 1
    %p81 = por %p79, %p80
    %p82 = scmp.ne.s32.totalorder %s73, %s74
    %p83 = scmp.eq.s32.totalorder %s21, 0
    %p84 = por %p82, %p83
    %p85 = scmp.ne.s32.totalorder %s73, %s74
    %p86 = scmp.eq.s32.totalorder %s22, 1
    %p87 = por %p85, %p86
    %p89 = scmp.ne.s32.totalorder %s74, %s88
    %p90 = scmp.eq.s32.totalorder %s22, 0
    %p91 = por %p89, %p90
    %s93 = sadd.s32 %s92, 1
    %p96 = scmp.eq.s32.totalorder %s16, 1
    %p97 = scmp.ne.s32.totalorder %s92, %s94
    %p98 = scmp.eq.s32.totalorder %s16, 0
    %p99 = por %p97, %p98
    %p100 = scmp.ne.s32.totalorder %s92, %s94
    %p101 = scmp.eq.s32.totalorder %s21, 1
    %p102 = por %p100, %p101
    %p103 = scmp.ne.s32.totalorder %s94, %s95
    %p104 = scmp.eq.s32.totalorder %s21, 0
    %p105 = por %p103, %p104
    %p106 = scmp.ne.s32.totalorder %s94, %s95
    %p107 = scmp.eq.s32.totalorder %s22, 1
    %p108 = por %p106, %p107
    %p110 = scmp.ne.s32.totalorder %s95, %s109
    %p111 = scmp.eq.s32.totalorder %s22, 0
    %p112 = por %p110, %p111
    %s114 = sadd.s32 %s113, 1
    %p117 = scmp.eq.s32.totalorder %s16, 1
    %p118 = scmp.ne.s32.totalorder %s113, %s115
    %p119 = scmp.eq.s32.totalorder %s16, 0
    %p120 = por %p118, %p119
    %p121 = scmp.ne.s32.totalorder %s113, %s115
    %p122 = scmp.eq.s32.totalorder %s21, 1
    %p123 = por %p121, %p122
    %p124 = scmp.ne.s32.totalorder %s115, %s116
    %p125 = scmp.eq.s32.totalorder %s21, 0
    %p126 = por %p124, %p125
    %p127 = scmp.ne.s32.totalorder %s115, %s116
    %p128 = scmp.eq.s32.totalorder %s22, 1
    %p129 = por %p127, %p128
    %p131 = scmp.ne.s32.totalorder %s116, %s130
    %p132 = scmp.eq.s32.totalorder %s22, 0
    %p133 = por %p131, %p132
    %s135 = sadd.s32 %s134, 1
    %p138 = scmp.eq.s32.totalorder %s16, 1
    %p139 = scmp.ne.s32.totalorder %s134, %s136
    %p140 = scmp.eq.s32.totalorder %s16, 0
    %p141 = por %p139, %p140
    %p142 = scmp.ne.s32.totalorder %s134, %s136
    %p143 = scmp.eq.s32.totalorder %s21, 1
    %p144 = por %p142, %p143
    %p145 = scmp.ne.s32.totalorder %s136, %s137
    %p146 = scmp.eq.s32.totalorder %s21, 0
    %p147 = por %p145, %p146
    %p148 = scmp.ne.s32.totalorder %s136, %s137
    %p149 = scmp.eq.s32.totalorder %s22, 1
    %p150 = por %p148, %p149
    %p152 = scmp.ne.s32.totalorder %s137, %s151
    %p153 = scmp.eq.s32.totalorder %s22, 0
    %p154 = por %p152, %p153
    %s156 = sadd.s32 %s155, 1
    %p159 = scmp.eq.s32.totalorder %s16, 1
    %p160 = scmp.ne.s32.totalorder %s155, %s157
    %p161 = scmp.eq.s32.totalorder %s16, 0
    %p162 = por %p160, %p161
    %p163 = scmp.ne.s32.totalorder %s155, %s157
    %p164 = scmp.eq.s32.totalorder %s21, 1
    %p165 = por %p163, %p164
    %p166 = scmp.ne.s32.totalorder %s157, %s158
    %p167 = scmp.eq.s32.totalorder %s21, 0
    %p168 = por %p166, %p167
    %p169 = scmp.ne.s32.totalorder %s157, %s158
    %p170 = scmp.eq.s32.totalorder %s22, 1
    %p171 = por %p169, %p170
    %p173 = scmp.ne.s32.totalorder %s158, %s172
    %p174 = scmp.eq.s32.totalorder %s22, 0
    %p175 = por %p173, %p174
    %s177 = sadd.s32 %s176, 1
    %p180 = scmp.eq.s32.totalorder %s16, 1
    %p181 = scmp.ne.s32.totalorder %s176, %s178
    %p182 = scmp.eq.s32.totalorder %s16, 0
    %p183 = por %p181, %p182
    %p184 = scmp.ne.s32.totalorder %s176, %s178
    %p185 = scmp.eq.s32.totalorder %s21, 1
    %p186 = por %p184, %p185
    %p187 = scmp.ne.s32.totalorder %s178, %s179
    %p188 = scmp.eq.s32.totalorder %s21, 0
    %p189 = por %p187, %p188
    %p190 = scmp.ne.s32.totalorder %s178, %s179
    %p191 = scmp.eq.s32.totalorder %s22, 1
    %p192 = por %p190, %p191
    %p194 = scmp.ne.s32.totalorder %s179, %s193
    %p195 = scmp.eq.s32.totalorder %s22, 0
    %p196 = por %p194, %p195
    %s198 = sadd.s32 %s197, 1
    %p201 = scmp.eq.s32.totalorder %s16, 1
    %p202 = scmp.ne.s32.totalorder %s197, %s199
    %p203 = scmp.eq.s32.totalorder %s16, 0
    %p204 = por %p202, %p203
    %p205 = scmp.ne.s32.totalorder %s197, %s199
    %p206 = scmp.eq.s32.totalorder %s21, 1
    %p207 = por %p205, %p206
    %p208 = scmp.ne.s32.totalorder %s199, %s200
    %p209 = scmp.eq.s32.totalorder %s21, 0
    %p210 = por %p208, %p209
    %p211 = scmp.ne.s32.totalorder %s199, %s200
    %p212 = scmp.eq.s32.totalorder %s22, 1
    %p213 = por %p211, %p212
    %p215 = scmp.ne.s32.totalorder %s200, %s214
    %p216 = scmp.eq.s32.totalorder %s22, 0
    %p217 = por %p215, %p216
    %s219 = sadd.s32 %s218, 1
    %p222 = scmp.eq.s32.totalorder %s16, 1
    %p223 = scmp.ne.s32.totalorder %s218, %s220
    %p224 = scmp.eq.s32.totalorder %s16, 0
    %p225 = por %p223, %p224
    %p226 = scmp.ne.s32.totalorder %s218, %s220
    %p227 = scmp.eq.s32.totalorder %s21, 1
    %p228 = por %p226, %p227
    %p229 = scmp.ne.s32.totalorder %s220, %s221
    %p230 = scmp.eq.s32.totalorder %s21, 0
    %p231 = por %p229, %p230
    %p232 = scmp.ne.s32.totalorder %s220, %s221
    %p233 = scmp.eq.s32.totalorder %s22, 1
    %p234 = por %p232, %p233
    %p236 = scmp.ne.s32.totalorder %s221, %s235
    %p237 = scmp.eq.s32.totalorder %s22, 0
    %p238 = por %p236, %p237
    %s239 = ssub.s32 %s16, %s23
    %p240 = scmp.eq.s32.totalorder %s239, 0
    %s242 = sadd.s32 %s241, 1
    %s243 = scalar_select %p240, %s241, %s242
    %p246 = pneg %p240
    %p247 = scmp.eq.s32.totalorder %s16, 1
    %p248 = por %p246, %p247
    %p249 = scmp.ne.s32.totalorder %s241, %s244
    %p250 = scmp.eq.s32.totalorder %s16, 0
    %p251 = por %p249, %p250
    %p252 = scmp.ne.s32.totalorder %s241, %s244
    %p253 = scmp.eq.s32.totalorder %s21, 1
    %p254 = por %p252, %p253
    %p255 = scmp.ne.s32.totalorder %s244, %s245
    %p256 = scmp.eq.s32.totalorder %s21, 0
    %p257 = por %p255, %p256
    %p258 = scmp.ne.s32.totalorder %s244, %s245
    %p259 = scmp.eq.s32.totalorder %s22, 1
    %p260 = por %p258, %p259
    %p262 = scmp.ne.s32.totalorder %s245, %s261
    %p263 = scmp.eq.s32.totalorder %s22, 0
    %p264 = por %p262, %p263
    %p265 = scmp.le.s32.totalorder 1, %s16
    %p266 = scmp.lt.s32.totalorder %s16, 3
    %p267 = pnand %p265, %p266
    %p268 = pneg %p267
    // Predicated region
    $region9: #{tpu_custom_call.1} parent=5 // pred_check
      _
    $region10: #{tpu_custom_call.1} parent=5 // pred_check_branch
      %270 = sbr.rel (%p267) target = $region12
    $region11: #{tpu_custom_call.1} parent=5 // pred_region
      %s271 = ssub.s32 %s16, 1
      // Predicated region
      $region13: #{tpu_custom_call.1} parent=11 // pred_check
        %p272 = pneg %p63
      $region14: #{tpu_custom_call.1} parent=11 // pred_check_branch
        %274 = sbr.rel (%p272) target = $region16
      $region15: #{tpu_custom_call.1} parent=11 // pred_region
        _
      $region16: #{tpu_custom_call.1} parent=11 // pred_fallthru
        _
      // Predicated region
      $region17: #{tpu_custom_call.1} parent=11 // pred_check
        %p275 = pneg %p84
      $region18: #{tpu_custom_call.1} parent=11 // pred_check_branch
        %277 = sbr.rel (%p275) target = $region20
      $region19: #{tpu_custom_call.1} parent=11 // pred_region
        _
      $region20: #{tpu_custom_call.1} parent=11 // pred_fallthru
        _
      // Predicated region
      $region21: #{tpu_custom_call.1} parent=11 // pred_check
        %p278 = pneg %p105
      $region22: #{tpu_custom_call.1} parent=11 // pred_check_branch
        %280 = sbr.rel (%p278) target = $region24
      $region23: #{tpu_custom_call.1} parent=11 // pred_region
        _
      $region24: #{tpu_custom_call.1} parent=11 // pred_fallthru
        _
      // Predicated region
      $region25: #{tpu_custom_call.1} parent=11 // pred_check
        %p281 = pneg %p126
      $region26: #{tpu_custom_call.1} parent=11 // pred_check_branch
        %283 = sbr.rel (%p281) target = $region28
      $region27: #{tpu_custom_call.1} parent=11 // pred_region
        _
      $region28: #{tpu_custom_call.1} parent=11 // pred_fallthru
        _
      // Predicated region
      $region29: #{tpu_custom_call.1} parent=11 // pred_check
        %p284 = pneg %p147
      $region30: #{tpu_custom_call.1} parent=11 // pred_check_branch
        %286 = sbr.rel (%p284) target = $region32
      $region31: #{tpu_custom_call.1} parent=11 // pred_region
        _
      $region32: #{tpu_custom_call.1} parent=11 // pred_fallthru
        _
      // Predicated region
      $region33: #{tpu_custom_call.1} parent=11 // pred_check
        %p287 = pneg %p168
      $region34: #{tpu_custom_call.1} parent=11 // pred_check_branch
        %289 = sbr.rel (%p287) target = $region36
      $region35: #{tpu_custom_call.1} parent=11 // pred_region
        _
      $region36: #{tpu_custom_call.1} parent=11 // pred_fallthru
        _
      // Predicated region
      $region37: #{tpu_custom_call.1} parent=11 // pred_check
        %p290 = pneg %p189
      $region38: #{tpu_custom_call.1} parent=11 // pred_check_branch
        %292 = sbr.rel (%p290) target = $region40
      $region39: #{tpu_custom_call.1} parent=11 // pred_region
        _
      $region40: #{tpu_custom_call.1} parent=11 // pred_fallthru
        _
      // Predicated region
      $region41: #{tpu_custom_call.1} parent=11 // pred_check
        %p293 = pneg %p210
      $region42: #{tpu_custom_call.1} parent=11 // pred_check_branch
        %295 = sbr.rel (%p293) target = $region44
      $region43: #{tpu_custom_call.1} parent=11 // pred_region
        _
      $region44: #{tpu_custom_call.1} parent=11 // pred_fallthru
        _
      // Predicated region
      $region45: #{tpu_custom_call.1} parent=11 // pred_check
        %p296 = pneg %p231
      $region46: #{tpu_custom_call.1} parent=11 // pred_check_branch
        %298 = sbr.rel (%p296) target = $region48
      $region47: #{tpu_custom_call.1} parent=11 // pred_region
        _
      $region48: #{tpu_custom_call.1} parent=11 // pred_fallthru
        _
    $region12: #{tpu_custom_call.1} parent=5 // pred_fallthru
      _
    %p299 = scmp.lt.s32.totalorder %s16, 2
    // Predicated region
    $region49: #{tpu_custom_call.1} parent=5 // pred_check
      %p300 = pneg %p299
    $region50: #{tpu_custom_call.1} parent=5 // pred_check_branch
      %302 = sbr.rel (%p300) target = $region52
    $region51: #{tpu_custom_call.1} parent=5 // pred_region
      // Predicated region
      $region53: #{tpu_custom_call.1} parent=51 // pred_check
        %p303 = pneg %p36
      $region54: #{tpu_custom_call.1} parent=51 // pred_check_branch
        %305 = sbr.rel (%p303) target = $region56
      $region55: #{tpu_custom_call.1} parent=51 // pred_region
        %s306 = smul.u32 4, %s16
        %p307 = scmp.lt.s32.totalorder %s306, 7
        %s308 = scalar_select %p307, %s306, 7
        %s309 = smul.addr %s308, 8
        %s310 = scalar_lea.vmem %s0, %s309
        %s311 = smul.u32 4, %s16
      $region56: #{tpu_custom_call.1} parent=51 // pred_fallthru
        _
    $region52: #{tpu_custom_call.1} parent=5 // pred_fallthru
      _
    %p312 = scmp.le.s32.totalorder 1, %s16
    %p313 = scmp.lt.s32.totalorder %s16, 3
    %p314 = pnand %p312, %p313
    %p315 = pneg %p314
    // Predicated region
    $region57: #{tpu_custom_call.1} parent=5 // pred_check
      _
    $region58: #{tpu_custom_call.1} parent=5 // pred_check_branch
      %317 = sbr.rel (%p314) target = $region60
    $region59: #{tpu_custom_call.1} parent=5 // pred_region
      %s318 = ssub.s32 %s16, 1
      %s319 = smul.u32 4, %s21
      %p320 = scmp.lt.s32.totalorder %s319, 7
      %s321 = scalar_select %p320, %s319, 7
      %s322 = smul.addr %s321, 8
      %s323 = scalar_lea.vmem %s0, %s322
      %p324 = pneg %p42
      %p325 = pneg %p39
      %p326 = pneg %p63
      %p327 = pneg %p60
      %p328 = pneg %p84
      %p329 = pneg %p81
      %p330 = pneg %p105
      %p331 = pneg %p102
      %p332 = pneg %p126
      %p333 = pneg %p123
      %p334 = pneg %p147
      %p335 = pneg %p144
      %p336 = pneg %p168
      %p337 = pneg %p165
      %p338 = pneg %p189
      %p339 = pneg %p186
      %p340 = pneg %p210
      %p341 = pneg %p207
      %p342 = pneg %p231
      %p343 = pneg %p228
      %p344 = pneg %p257
      %p345 = pneg %p254
      %s346 = smul.u32 4, %s21
      %p347 = scmp.lt.s32.totalorder %s346, 7
      %s348 = scalar_select %p347, %s346, 7
      %s349 = smul.addr %s348, 8
      %s350 = scalar_lea.vmem %s10, %s349
      %s351 = smul.u32 4, %s21
      %p352 = scmp.lt.s32.totalorder %s351, 7
      %s353 = scalar_select %p352, %s351, 7
      %s354 = smul.addr %s353, 8
      %s355 = scalar_lea.vmem %s0, %s354
      %s356 = smul.u32 4, %s21
      %s357 = smul.u32 4, %s21
      %p358 = scmp.lt.s32.totalorder %s357, 7
      %s359 = scalar_select %p358, %s357, 7
      %s360 = smul.addr %s359, 8
      %s361 = scalar_lea.vmem %s10, %s360
      %s362 = smul.u32 4, %s21
      %p364 = scmp.eq.s32.totalorder %s21, 0
      // Predicated region
      $region61: #{tpu_custom_call.1} parent=59 // pred_check
        %p365 = pneg %p364
      $region62: #{tpu_custom_call.1} parent=59 // pred_check_branch
        %367 = sbr.rel (%p365) target = $region64
      $region63: #{tpu_custom_call.1} parent=59 // pred_region
        %vm368 = vcmask 523264
        %369 = vst.msk [vmem:[#allocation3] sm:$0xff] %vm368, 0.0
        %370 = vst.msk [vmem:[#allocation3 + $0x8] sm:$0xff] %vm368, 0.0
        %371 = vst.msk [vmem:[#allocation3 + $0x10] sm:$0xff] %vm368, 0.0
        %372 = vst.msk [vmem:[#allocation4] sm:$0xff] %vm368, 0.0
        %373 = vst.msk [vmem:[#allocation4 + $0x8] sm:$0xff] %vm368, 0.0
        %374 = vst.msk [vmem:[#allocation4 + $0x10] sm:$0xff] %vm368, 0.0
        %375 = vst.msk [vmem:[#allocation4 + $0x18] sm:$0xff] %vm368, 0.0
        %376 = vst.msk [vmem:[#allocation4 + $0x20] sm:$0xff] %vm368, 0.0
        %377 = vst.msk [vmem:[#allocation4 + $0x28] sm:$0xff] %vm368, 0.0
        %378 = vst.msk [vmem:[#allocation4 + $0x30] sm:$0xff] %vm368, 0.0
        %379 = vst.msk [vmem:[#allocation4 + $0x38] sm:$0xff] %vm368, 0.0
        %380 = vst.msk [vmem:[#allocation4 + $0x40] sm:$0xff] %vm368, 0.0
        %381 = vst.msk [vmem:[#allocation4 + $0x48] sm:$0xff] %vm368, 0.0
        %382 = vst.msk [vmem:[#allocation4 + $0x50] sm:$0xff] %vm368, 0.0
        %383 = vst.msk [vmem:[#allocation4 + $0x58] sm:$0xff] %vm368, 0.0
        %384 = vst.msk [vmem:[#allocation4 + $0x60] sm:$0xff] %vm368, 0.0
        %385 = vst.msk [vmem:[#allocation4 + $0x68] sm:$0xff] %vm368, 0.0
        %386 = vst.msk [vmem:[#allocation4 + $0x70] sm:$0xff] %vm368, 0.0
        %387 = vst.msk [vmem:[#allocation4 + $0x78] sm:$0xff] %vm368, 0.0
      $region64: #{tpu_custom_call.1} parent=59 // pred_fallthru
        _
      %v388 = vld [vmem:[%s355] sm:$0xff]
      %v389 = vld [vmem:[%s355 + $0x8] sm:$0xff]
      %v390 = vld [vmem:[%s355 + $0x10] sm:$0xff]
      %v391 = vld [vmem:[%s355 + $0x18] sm:$0xff]
      %v392 = vmul.f32 %v388, %v388
      %v393 = vmul.f32 %v389, %v389
      %v394 = vmul.f32 %v390, %v390
      %v395 = vmul.f32 %v391, %v391
      %vm396 = vcmask 261120
      %v397 = vsel %vm396, %v392, 0.0
      %398 = vadd.xlane.f32.xlu0 %v397
      %v399 = vpop.xlane.xlu0 %398
      %v400 = vsel %vm396, %v393, 0.0
      %401 = vadd.xlane.f32.xlu0 %v400
      %v402 = vpop.xlane.xlu0 %401
      %v403 = vsel %vm396, %v394, 0.0
      %404 = vadd.xlane.f32.xlu0 %v403
      %v405 = vpop.xlane.xlu0 %404
      %v406 = vsel %vm396, %v395, 0.0
      %407 = vadd.xlane.f32.xlu0 %v406
      %v408 = vpop.xlane.xlu0 %407
      %v409 = vrcp.pop 32.0
      %v410 = vmul.f32 %v399, %v409
      %v411 = vmul.f32 %v402, %v409
      %v412 = vmul.f32 %v405, %v409
      %v413 = vmul.f32 %v408, %v409
      %v414 = vadd.f32 %v410, 1e-05
      %v415 = vadd.f32 %v411, 1e-05
      %v416 = vadd.f32 %v412, 1e-05
      %v417 = vadd.f32 %v413, 1e-05
      %v418 = vrsqrt.pop %v414
      %v419 = vrsqrt.pop %v415
      %v420 = vrsqrt.pop %v416
      %v421 = vrsqrt.pop %v417
      %v422 = vmul.f32 %v388, %v418
      %v423 = vmul.f32 %v389, %v419
      %v424 = vmul.f32 %v390, %v420
      %v425 = vmul.f32 %v391, %v421
      %v426 = vld [vmem:[%s1] sm:$0x1]
      %v428 = vlaneseq
      %v429 = vshrl.u32 %v428, 7
      %v430 = vsub.s32 0, %v429
      %v431 = vrot.slane %v426, %v430
      %v433 = vmul.f32 %v422, %v431
      %v434 = vmul.f32 %v423, %v431
      %v435 = vmul.f32 %v424, %v431
      %v436 = vmul.f32 %v425, %v431
      %v437 = vpack.c.bf16 %v434, %v433
      %v438 = vpack.c.bf16 %v436, %v435
      %v439 = vld [vmem:[%s2] sm:$0xf]
      %v440 = vld [vmem:[%s2 + $0x4] sm:$0xf]
      %v441 = vld [vmem:[%s2 + $0x8] sm:$0xf]
      %v442 = vld [vmem:[%s2 + $0xc] sm:$0xf]
      %v447 = vunpack.c.l.b16 %v439
      %v448 = vunpack.c.l.b16 %v440
      %v449 = vunpack.c.l.b16 %v441
      %v450 = vunpack.c.l.b16 %v442
      %v451 = vpack.c.b16 %v448, %v447
      %v452 = vpack.c.b16 %v450, %v449
      %v456 = vsel %vm396, %v437, 0
      %v459 = vsel %vm396, %v438, 0
      %461 = vmatprep.subr.bf16.mxu0 0
      %462 = vmatpush1.bf16.msra.mxu0 0
      %463 = vmatprep.subr.bf16.mxu0 0
      %464 = vmatpush1.bf16.msra.mxu0 0
      %465 = vmatprep.subr.bf16.mxu0 0
      %466 = vmatpush1.bf16.msra.mxu0 0
      %467 = vmatprep.subr.bf16.mxu0 0
      %468 = vmatpush1.bf16.msra.mxu0 0
      %469 = vmatprep.subr.bf16.mxu0 0
      %470 = vmatpush1.bf16.msra.mxu0 0
      %471 = vmatprep.subr.bf16.mxu0 0
      %472 = vmatpush1.bf16.msra.mxu0 0
      %473 = vmatprep.subr.bf16.mxu0 0
      %474 = vmatpush1.bf16.msra.mxu0 %v452
      %475 = vmatprep.subr.bf16.mxu0 0
      %476 = vmatpush1.bf16.msra.mxu0 %v451
      %477 = vmatprep.subr.bf16.mxu0 0
      %478 = vmatpush2.bf16.msra.mxu0 0
      %479 = vmatprep.subr.bf16.mxu0 0
      %480 = vmatpush2.bf16.msra.mxu0 0
      %481 = vmatprep.subr.bf16.mxu0 0
      %482 = vmatpush2.bf16.msra.mxu0 0
      %483 = vmatprep.subr.bf16.mxu0 0
      %484 = vmatpush2.bf16.msra.mxu0 0
      %485 = vmatprep.subr.bf16.mxu0 0
      %486 = vmatpush2.bf16.msra.mxu0 0
      %487 = vmatprep.subr.bf16.mxu0 0
      %488 = vmatpush2.bf16.msra.mxu0 0
      %489 = vmatprep.subr.bf16.mxu0 0
      %490 = vmatpush2.bf16.msra.mxu0 0
      %491 = vmatprep.subr.bf16.mxu0 0
      %492 = vmatpush2.bf16.msra.mxu0 0
      %493 = vmatprep.mubr.bf16.mxu0 0
      %494 = vmatmul.mubr.bf16.gmra.mxu0 %v456
      %v495 = vpop.f32.mrf.mxu0
      %v496 = vadd.f32 0.0, %v495
      %v497 = vpop.f32.mrf.mxu0
      %v498 = vpop.f32.mrf.mxu0
      %v499 = vadd.f32 0.0, %v498
      %v500 = vpop.f32.mrf.mxu0
      %501 = vmatprep.mubr.bf16.mxu0 0
      %502 = vmatmul.mubr.bf16.gmra.mxu0 %v459
      %v503 = vpop.f32.mrf.mxu0
      %v504 = vadd.f32 0.0, %v503
      %v505 = vpop.f32.mrf.mxu0
      %v506 = vpop.f32.mrf.mxu0
      %v507 = vadd.f32 0.0, %v506
      %v508 = vpop.f32.mrf.mxu0
      %509 = vdwg.mxu0
      %v510 = vld [vmem:[#allocation3] sm:$0xff]
      %v511 = vld [vmem:[#allocation3 + $0x8] sm:$0xff]
      %v512 = vld [vmem:[#allocation3 + $0x10] sm:$0xff]
      %vm513 = vcmask 523264
      %514 = vst.msk [vmem:[#allocation2] sm:$0xff] %vm513, %v510
      %515 = vst.msk [vmem:[#allocation2 + $0x8] sm:$0xff] %vm513, %v511
      %516 = vst.msk [vmem:[#allocation2 + $0x10] sm:$0xff] %vm513, %v512
      %517 = vst.msk [vmem:[#allocation2 + $0x18] sm:$0xff] %vm513, %v496
      %518 = vst.msk [vmem:[#allocation2 + $0x20] sm:$0xff] %vm513, %v499
      %519 = vst.msk [vmem:[#allocation2 + $0x28] sm:$0xff] %vm513, %v504
      %520 = vst.msk [vmem:[#allocation2 + $0x30] sm:$0xff] %vm513, %v507
      %521 = vst.msk [vmem:[#allocation3] sm:$0xff] %vm513, %v499
      %522 = vst.msk [vmem:[#allocation3 + $0x8] sm:$0xff] %vm513, %v504
      %523 = vst.msk [vmem:[#allocation3 + $0x10] sm:$0xff] %vm513, %v507
      %v524 = vld [vmem:[%s4] sm:$0x1]
      %v526 = vlaneseq
      %v527 = vshrl.u32 %v526, 7
      %v528 = vsub.s32 0, %v527
      %v529 = vrot.slane %v524, %v528
      %v531 = vld [vmem:[#allocation2] sm:$0xff]
      %v532 = vld [vmem:[#allocation2 + $0x8] sm:$0xff]
      %v533 = vld [vmem:[#allocation2 + $0x10] sm:$0xff]
      %v534 = vld [vmem:[#allocation2 + $0x18] sm:$0xff]
      %v535 = vld [vmem:[%s3] sm:$0x1]
      %v536 = vlaneseq
      %v537 = vshrl.u32 %v536, 7
      %v538 = vsub.s32 0, %v537
      %v539 = vrot.slane %v535, %v538
      %v540 = vmul.f32 %v531, %v539
      %v541 = vmul.f32 %v532, %v539
      %v542 = vmul.f32 %v533, %v539
      %v543 = vmul.f32 %v534, %v539
      %v544 = vadd.f32 %v529, %v540
      %v545 = vadd.f32 %v529, %v541
      %v546 = vadd.f32 %v529, %v542
      %v547 = vadd.f32 %v529, %v543
      %v548 = vld [vmem:[#allocation2 + $0x20] sm:$0xff]
      %v549 = vld [vmem:[%s3 + $0x1] sm:$0x1]
      %v550 = vlaneseq
      %v551 = vshrl.u32 %v550, 7
      %v552 = vsub.s32 0, %v551
      %v553 = vrot.slane %v549, %v552
      %v554 = vmul.f32 %v532, %v553
      %v555 = vmul.f32 %v533, %v553
      %v556 = vmul.f32 %v534, %v553
      %v557 = vmul.f32 %v548, %v553
      %v558 = vadd.f32 %v544, %v554
      %v559 = vadd.f32 %v545, %v555
      %v560 = vadd.f32 %v546, %v556
      %v561 = vadd.f32 %v547, %v557
      %v562 = vld [vmem:[#allocation2 + $0x28] sm:$0xff]
      %v563 = vld [vmem:[%s3 + $0x2] sm:$0x1]
      %v564 = vlaneseq
      %v565 = vshrl.u32 %v564, 7
      %v566 = vsub.s32 0, %v565
      %v567 = vrot.slane %v563, %v566
      %v568 = vmul.f32 %v533, %v567
      %v569 = vmul.f32 %v534, %v567
      %v570 = vmul.f32 %v548, %v567
      %v571 = vmul.f32 %v562, %v567
      %v572 = vadd.f32 %v558, %v568
      %v573 = vadd.f32 %v559, %v569
      %v574 = vadd.f32 %v560, %v570
      %v575 = vadd.f32 %v561, %v571
      %v576 = vld [vmem:[#allocation2 + $0x30] sm:$0xff]
      %v577 = vld [vmem:[%s3 + $0x3] sm:$0x1]
      %v578 = vlaneseq
      %v579 = vshrl.u32 %v578, 7
      %v580 = vsub.s32 0, %v579
      %v581 = vrot.slane %v577, %v580
      %v582 = vmul.f32 %v534, %v581
      %v583 = vmul.f32 %v548, %v581
      %v584 = vmul.f32 %v562, %v581
      %v585 = vmul.f32 %v576, %v581
      %v586 = vadd.f32 %v572, %v582
      %v587 = vadd.f32 %v573, %v583
      %v588 = vadd.f32 %v574, %v584
      %v589 = vadd.f32 %v575, %v585
      %v590 = vxor.u32 %v586, 2147483648
      %v591 = vxor.u32 %v587, 2147483648
      %v592 = vxor.u32 %v588, 2147483648
      %v593 = vxor.u32 %v589, 2147483648
      %v594 = vmul.f32 %v590, 1.442695
      %v595 = vpow.pop %v594
      %v596 = vmul.f32 %v591, 1.442695
      %v597 = vpow.pop %v596
      %v598 = vmul.f32 %v592, 1.442695
      %v599 = vpow.pop %v598
      %v600 = vmul.f32 %v593, 1.442695
      %v601 = vpow.pop %v600
      %v602 = vadd.f32 %v595, 1.0
      %v603 = vadd.f32 %v597, 1.0
      %v604 = vadd.f32 %v599, 1.0
      %v605 = vadd.f32 %v601, 1.0
      %v606 = vrcp.pop %v602
      %v607 = vmul.f32 1.0, %v606
      %v608 = vrcp.pop %v603
      %v609 = vmul.f32 1.0, %v608
      %v610 = vrcp.pop %v604
      %v611 = vmul.f32 1.0, %v610
      %v612 = vrcp.pop %v605
      %v613 = vmul.f32 1.0, %v612
      %v614 = vmul.f32 %v586, %v607
      %v615 = vmul.f32 %v587, %v609
      %v616 = vmul.f32 %v588, %v611
      %v617 = vmul.f32 %v589, %v613
      %v618 = vpack.c.bf16 %v615, %v614
      %v619 = vpack.c.bf16 %v617, %v616
      %v620 = vld [vmem:[%s5] sm:$0xf]
      %v621 = vld [vmem:[%s5 + $0x4] sm:$0xf]
      %v622 = vld [vmem:[%s5 + $0x8] sm:$0xf]
      %v623 = vld [vmem:[%s5 + $0xc] sm:$0xf]
      %v624 = vld [vmem:[%s5 + $0x10] sm:$0xf]
      %v625 = vld [vmem:[%s5 + $0x14] sm:$0xf]
      %v626 = vld [vmem:[%s5 + $0x18] sm:$0xf]
      %v627 = vld [vmem:[%s5 + $0x1c] sm:$0xf]
      %v636 = vunpack.c.l.b16 %v620
      %v637 = vunpack.c.l.b16 %v621
      %v638 = vunpack.c.l.b16 %v622
      %v639 = vunpack.c.l.b16 %v623
      %v640 = vunpack.c.l.b16 %v624
      %v641 = vunpack.c.l.b16 %v625
      %v642 = vunpack.c.l.b16 %v626
      %v643 = vunpack.c.l.b16 %v627
      %v644 = vpack.c.b16 %v637, %v636
      %v645 = vpack.c.b16 %v639, %v638
      %v646 = vpack.c.b16 %v641, %v640
      %v647 = vpack.c.b16 %v643, %v642
      %v653 = vsel %vm513, %v618, 0
      %v656 = vsel %vm513, %v619, 0
      %658 = vmatprep.subr.bf16.mxu0 0
      %659 = vmatpush1.bf16.msra.mxu0 0
      %660 = vmatprep.subr.bf16.mxu0 0
      %661 = vmatpush1.bf16.msra.mxu0 0
      %662 = vmatprep.subr.bf16.mxu0 0
      %663 = vmatpush1.bf16.msra.mxu0 0
      %664 = vmatprep.subr.bf16.mxu0 0
      %665 = vmatpush1.bf16.msra.mxu0 0
      %666 = vmatprep.subr.bf16.mxu0 0
      %667 = vmatpush1.bf16.msra.mxu0 %v647
      %668 = vmatprep.subr.bf16.mxu0 0
      %669 = vmatpush1.bf16.msra.mxu0 %v646
      %670 = vmatprep.subr.bf16.mxu0 0
      %671 = vmatpush1.bf16.msra.mxu0 %v645
      %672 = vmatprep.subr.bf16.mxu0 0
      %673 = vmatpush1.bf16.msra.mxu0 %v644
      %674 = vmatprep.subr.bf16.mxu0 0
      %675 = vmatpush2.bf16.msra.mxu0 0
      %676 = vmatprep.subr.bf16.mxu0 0
      %677 = vmatpush2.bf16.msra.mxu0 0
      %678 = vmatprep.subr.bf16.mxu0 0
      %679 = vmatpush2.bf16.msra.mxu0 0
      %680 = vmatprep.subr.bf16.mxu0 0
      %681 = vmatpush2.bf16.msra.mxu0 0
      %682 = vmatprep.subr.bf16.mxu0 0
      %683 = vmatpush2.bf16.msra.mxu0 0
      %684 = vmatprep.subr.bf16.mxu0 0
      %685 = vmatpush2.bf16.msra.mxu0 0
      %686 = vmatprep.subr.bf16.mxu0 0
      %687 = vmatpush2.bf16.msra.mxu0 0
      %688 = vmatprep.subr.bf16.mxu0 0
      %689 = vmatpush2.bf16.msra.mxu0 0
      %690 = vmatprep.mubr.bf16.mxu0 0
      %691 = vmatmul.mubr.bf16.gmra.mxu0 %v653
      %v692 = vpop.f32.mrf.mxu0
      %v693 = vadd.f32 0.0, %v692
      %v694 = vpop.f32.mrf.mxu0
      %v695 = vpop.f32.mrf.mxu0
      %v696 = vadd.f32 0.0, %v695
      %v697 = vpop.f32.mrf.mxu0
      %698 = vmatprep.mubr.bf16.mxu0 0
      %699 = vmatmul.mubr.bf16.gmra.mxu0 %v656
      %v700 = vpop.f32.mrf.mxu0
      %v701 = vadd.f32 0.0, %v700
      %v702 = vpop.f32.mrf.mxu0
      %v703 = vpop.f32.mrf.mxu0
      %v704 = vadd.f32 0.0, %v703
      %v705 = vpop.f32.mrf.mxu0
      %706 = vdwg.mxu0
      %v707 = vld [vmem:[%s6] sm:$0x1]
      %v709 = vlaneseq
      %v710 = vshrl.u32 %v709, 7
      %v711 = vsub.s32 0, %v710
      %v712 = vrot.slane %v707, %v711
      %v714 = vadd.f32 %v693, %v712
      %v715 = vadd.f32 %v696, %v712
      %v716 = vadd.f32 %v701, %v712
      %v717 = vadd.f32 %v704, %v712
      %v718 = vmax.f32 %v714, 0.0
      %v719 = vmax.f32 %v715, 0.0
      %v720 = vmax.f32 %v716, 0.0
      %v721 = vmax.f32 %v717, 0.0
      %vm722 = vcmp.ne.f32.partialorder %v714, %v714
      %vm723 = vcmp.ne.f32.partialorder %v715, %v715
      %vm724 = vcmp.ne.f32.partialorder %v716, %v716
      %vm725 = vcmp.ne.f32.partialorder %v717, %v717
      %v726 = vadd.f32 %v714, 0.0
      %v727 = vadd.f32 %v715, 0.0
      %v728 = vadd.f32 %v716, 0.0
      %v729 = vadd.f32 %v717, 0.0
      %v730 = vand.u32 2147483647, %v714
      %v731 = vand.u32 2147483647, %v715
      %v732 = vand.u32 2147483647, %v716
      %v733 = vand.u32 2147483647, %v717
      %v734 = vsub.f32 0.0, %v730
      %v735 = vsub.f32 0.0, %v731
      %v736 = vsub.f32 0.0, %v732
      %v737 = vsub.f32 0.0, %v733
      %v738 = vmul.f32 %v734, 1.442695
      %v739 = vpow.pop %v738
      %v740 = vmul.f32 %v735, 1.442695
      %v741 = vpow.pop %v740
      %v742 = vmul.f32 %v736, 1.442695
      %v743 = vpow.pop %v742
      %v744 = vmul.f32 %v737, 1.442695
      %v745 = vpow.pop %v744
      %v746 = vadd.f32 %v739, 1.0
      %v747 = vlog2.pop %v746
      %v748 = vmul.f32 %v747, 0.6931472
      %v749 = vmul.f32 -0.5, %v739
      %v750 = vadd.f32 %v749, 1.0
      %v751 = vmul.f32 %v750, %v739
      %v752 = vand.u32 2147483647, %v739
      %vm753 = vcmp.lt.f32.partialorder %v752, 0.0004427343
      %v754 = vsel %vm753, %v751, %v748
      %v755 = vadd.f32 %v741, 1.0
      %v756 = vlog2.pop %v755
      %v757 = vmul.f32 %v756, 0.6931472
      %v758 = vmul.f32 -0.5, %v741
      %v759 = vadd.f32 %v758, 1.0
      %v760 = vmul.f32 %v759, %v741
      %v761 = vand.u32 2147483647, %v741
      %vm762 = vcmp.lt.f32.partialorder %v761, 0.0004427343
      %v763 = vsel %vm762, %v760, %v757
      %v764 = vadd.f32 %v743, 1.0
      %v765 = vlog2.pop %v764
      %v766 = vmul.f32 %v765, 0.6931472
      %v767 = vmul.f32 -0.5, %v743
      %v768 = vadd.f32 %v767, 1.0
      %v769 = vmul.f32 %v768, %v743
      %v770 = vand.u32 2147483647, %v743
      %vm771 = vcmp.lt.f32.partialorder %v770, 0.0004427343
      %v772 = vsel %vm771, %v769, %v766
      %v773 = vadd.f32 %v745, 1.0
      %v774 = vlog2.pop %v773
      %v775 = vmul.f32 %v774, 0.6931472
      %v776 = vmul.f32 -0.5, %v745
      %v777 = vadd.f32 %v776, 1.0
      %v778 = vmul.f32 %v777, %v745
      %v779 = vand.u32 2147483647, %v745
      %vm780 = vcmp.lt.f32.partialorder %v779, 0.0004427343
      %v781 = vsel %vm780, %v778, %v775
      %v782 = vadd.f32 %v718, %v754
      %v783 = vadd.f32 %v719, %v763
      %v784 = vadd.f32 %v720, %v772
      %v785 = vadd.f32 %v721, %v781
      %v786 = vsel %vm722, %v726, %v782
      %v787 = vsel %vm723, %v727, %v783
      %v788 = vsel %vm724, %v728, %v784
      %v789 = vsel %vm725, %v729, %v785
      %790 = vst.msk [vmem:[#allocation5] sm:$0xff] %vm513, %v786
      %791 = vst.msk [vmem:[#allocation5 + $0x8] sm:$0xff] %vm513, %v787
      %792 = vst.msk [vmem:[#allocation5 + $0x10] sm:$0xff] %vm513, %v788
      %793 = vst.msk [vmem:[#allocation5 + $0x18] sm:$0xff] %vm513, %v789
      %794 = vst.msk [vmem:[#allocation6] sm:$0xff] %vm513, %v614
      %795 = vst.msk [vmem:[#allocation6 + $0x8] sm:$0xff] %vm513, %v615
      %796 = vst.msk [vmem:[#allocation6 + $0x10] sm:$0xff] %vm513, %v616
      %797 = vst.msk [vmem:[#allocation6 + $0x18] sm:$0xff] %vm513, %v617
      %802 = vrot.lane.b32.xlu0 %v693, 64
      %v803 = vpop.permute.xlu0 %802
      %804 = vrot.lane.b32.xlu0 %v696, 64
      %v805 = vpop.permute.xlu0 %804
      %806 = vrot.lane.b32.xlu0 %v701, 64
      %v807 = vpop.permute.xlu0 %806
      %808 = vrot.lane.b32.xlu0 %v704, 64
      %v809 = vpop.permute.xlu0 %808
      %814 = vst.msk [vmem:[#allocation7] sm:$0xff] %vm396, %v803
      %815 = vst.msk [vmem:[#allocation7 + $0x8] sm:$0xff] %vm396, %v805
      %816 = vst.msk [vmem:[#allocation7 + $0x10] sm:$0xff] %vm396, %v807
      %817 = vst.msk [vmem:[#allocation7 + $0x18] sm:$0xff] %vm396, %v809
      %v818 = vld [vmem:[%s7] sm:$0xff]
      %v819 = vld [vmem:[%s7 + $0x8] sm:$0xff]
      %v820 = vld [vmem:[#allocation4] sm:$0xff]
      %v821 = vld [vmem:[#allocation4 + $0x8] sm:$0xff]
      %v822 = vld [vmem:[#allocation4 + $0x10] sm:$0xff]
      %v823 = vld [vmem:[#allocation4 + $0x18] sm:$0xff]
      %v824 = vld [vmem:[#allocation4 + $0x20] sm:$0xff]
      %v825 = vld [vmem:[#allocation4 + $0x28] sm:$0xff]
      %v826 = vld [vmem:[#allocation4 + $0x30] sm:$0xff]
      %v827 = vld [vmem:[#allocation4 + $0x38] sm:$0xff]
      %v828 = vld [vmem:[#allocation4 + $0x40] sm:$0xff]
      %v829 = vld [vmem:[#allocation4 + $0x48] sm:$0xff]
      %v830 = vld [vmem:[#allocation4 + $0x50] sm:$0xff]
      %v831 = vld [vmem:[#allocation4 + $0x58] sm:$0xff]
      %v832 = vld [vmem:[#allocation4 + $0x60] sm:$0xff]
      %v833 = vld [vmem:[#allocation4 + $0x68] sm:$0xff]
      %v834 = vld [vmem:[#allocation4 + $0x70] sm:$0xff]
      %v835 = vld [vmem:[#allocation4 + $0x78] sm:$0xff]
      %v836 = vld [vmem:[#allocation5] sm:$0xff]
      %v837 = vld [vmem:[#allocation6] sm:$0xff]
      %v838 = vld [vmem:[#allocation7] sm:$0xff]
      %v840 = vcombine.high %v836, %v836
      %v842 = vunpack.c.l.s4 1966171168
      %v843 = vunpack.c.0.s8 %v842
      %v844 = vlaneseq
      %v845 = vshrl.u32 %v844, 7
      %v846 = vsub.s32 %v843, %v845
      %v847 = vrot.slane %v836, %v846
      %v849 = vunpack.c.l.s4 1966171168
      %v850 = vunpack.c.0.s8 %v849
      %v851 = vlaneseq
      %v852 = vshrl.u32 %v851, 7
      %v853 = vsub.s32 %v850, %v852
      %v854 = vrot.slane %v840, %v853
      %v855 = vcombine.high %v847, %v847
      %v856 = vcombine.high %v854, %v854
      %v858 = vunpack.c.l.s4 1966171168
      %v859 = vunpack.c.0.s8 %v858
      %v860 = vlaneseq
      %v861 = vshrl.u32 %v860, 7
      %v862 = vsub.s32 %v859, %v861
      %v863 = vrot.slane %v847, %v862
      %v865 = vunpack.c.l.s4 1966171168
      %v866 = vunpack.c.0.s8 %v865
      %v867 = vlaneseq
      %v868 = vshrl.u32 %v867, 7
      %v869 = vsub.s32 %v866, %v868
      %v870 = vrot.slane %v854, %v869
      %v872 = vunpack.c.l.s4 1966171168
      %v873 = vunpack.c.0.s8 %v872
      %v874 = vlaneseq
      %v875 = vshrl.u32 %v874, 7
      %v876 = vsub.s32 %v873, %v875
      %v877 = vrot.slane %v855, %v876
      %v879 = vunpack.c.l.s4 1966171168
      %v880 = vunpack.c.0.s8 %v879
      %v881 = vlaneseq
      %v882 = vshrl.u32 %v881, 7
      %v883 = vsub.s32 %v880, %v882
      %v884 = vrot.slane %v856, %v883
      %v885 = vcombine.high %v863, %v863
      %v886 = vcombine.high %v870, %v870
      %v887 = vcombine.high %v877, %v877
      %v888 = vcombine.high %v884, %v884
      %v889 = vlaneseq
      %v890 = vshrl.u32 %v889, 7
      %v891 = vsub.s32 0, %v890
      %v892 = vrot.slane %v863, %v891
      %v893 = vlaneseq
      %v894 = vshrl.u32 %v893, 7
      %v895 = vsub.s32 0, %v894
      %v896 = vrot.slane %v877, %v895
      %v897 = vlaneseq
      %v898 = vshrl.u32 %v897, 7
      %v899 = vsub.s32 0, %v898
      %v900 = vrot.slane %v885, %v899
      %v901 = vlaneseq
      %v902 = vshrl.u32 %v901, 7
      %v903 = vsub.s32 0, %v902
      %v904 = vrot.slane %v887, %v903
      %v905 = vlaneseq
      %v906 = vshrl.u32 %v905, 7
      %v907 = vsub.s32 0, %v906
      %v908 = vrot.slane %v870, %v907
      %v909 = vlaneseq
      %v910 = vshrl.u32 %v909, 7
      %v911 = vsub.s32 0, %v910
      %v912 = vrot.slane %v884, %v911
      %v913 = vlaneseq
      %v914 = vshrl.u32 %v913, 7
      %v915 = vsub.s32 0, %v914
      %v916 = vrot.slane %v886, %v915
      %v917 = vlaneseq
      %v918 = vshrl.u32 %v917, 7
      %v919 = vsub.s32 0, %v918
      %v920 = vrot.slane %v888, %v919
      %v929 = vmul.f32 %v892, %v818
      %v930 = vmul.f32 %v892, %v819
      %v931 = vmul.f32 %v896, %v818
      %v932 = vmul.f32 %v896, %v819
      %v933 = vmul.f32 %v900, %v818
      %v934 = vmul.f32 %v900, %v819
      %v935 = vmul.f32 %v904, %v818
      %v936 = vmul.f32 %v904, %v819
      %v937 = vmul.f32 %v908, %v818
      %v938 = vmul.f32 %v908, %v819
      %v939 = vmul.f32 %v912, %v818
      %v940 = vmul.f32 %v912, %v819
      %v941 = vmul.f32 %v916, %v818
      %v942 = vmul.f32 %v916, %v819
      %v943 = vmul.f32 %v920, %v818
      %v944 = vmul.f32 %v920, %v819
      %v945 = vmul.f32 %v929, 1.442695
      %v946 = vpow.pop %v945
      %v947 = vmul.f32 %v930, 1.442695
      %v948 = vpow.pop %v947
      %v949 = vmul.f32 %v931, 1.442695
      %v950 = vpow.pop %v949
      %v951 = vmul.f32 %v932, 1.442695
      %v952 = vpow.pop %v951
      %v953 = vmul.f32 %v933, 1.442695
      %v954 = vpow.pop %v953
      %v955 = vmul.f32 %v934, 1.442695
      %v956 = vpow.pop %v955
      %v957 = vmul.f32 %v935, 1.442695
      %v958 = vpow.pop %v957
      %v959 = vmul.f32 %v936, 1.442695
      %v960 = vpow.pop %v959
      %v961 = vmul.f32 %v937, 1.442695
      %v962 = vpow.pop %v961
      %v963 = vmul.f32 %v938, 1.442695
      %v964 = vpow.pop %v963
      %v965 = vmul.f32 %v939, 1.442695
      %v966 = vpow.pop %v965
      %v967 = vmul.f32 %v940, 1.442695
      %v968 = vpow.pop %v967
      %v969 = vmul.f32 %v941, 1.442695
      %v970 = vpow.pop %v969
      %v971 = vmul.f32 %v942, 1.442695
      %v972 = vpow.pop %v971
      %v973 = vmul.f32 %v943, 1.442695
      %v974 = vpow.pop %v973
      %v975 = vmul.f32 %v944, 1.442695
      %v976 = vpow.pop %v975
      %v977 = vmul.f32 %v836, %v837
      %v979 = vcombine.high %v977, %v977
      %v981 = vunpack.c.l.s4 1966171168
      %v982 = vunpack.c.0.s8 %v981
      %v983 = vlaneseq
      %v984 = vshrl.u32 %v983, 7
      %v985 = vsub.s32 %v982, %v984
      %v986 = vrot.slane %v977, %v985
      %v988 = vunpack.c.l.s4 1966171168
      %v989 = vunpack.c.0.s8 %v988
      %v990 = vlaneseq
      %v991 = vshrl.u32 %v990, 7
      %v992 = vsub.s32 %v989, %v991
      %v993 = vrot.slane %v979, %v992
      %v994 = vcombine.high %v986, %v986
      %v995 = vcombine.high %v993, %v993
      %v997 = vunpack.c.l.s4 1966171168
      %v998 = vunpack.c.0.s8 %v997
      %v999 = vlaneseq
      %v1000 = vshrl.u32 %v999, 7
      %v1001 = vsub.s32 %v998, %v1000
      %v1002 = vrot.slane %v986, %v1001
      %v1004 = vunpack.c.l.s4 1966171168
      %v1005 = vunpack.c.0.s8 %v1004
      %v1006 = vlaneseq
      %v1007 = vshrl.u32 %v1006, 7
      %v1008 = vsub.s32 %v1005, %v1007
      %v1009 = vrot.slane %v993, %v1008
      %v1011 = vunpack.c.l.s4 1966171168
      %v1012 = vunpack.c.0.s8 %v1011
      %v1013 = vlaneseq
      %v1014 = vshrl.u32 %v1013, 7
      %v1015 = vsub.s32 %v1012, %v1014
      %v1016 = vrot.slane %v994, %v1015
      %v1018 = vunpack.c.l.s4 1966171168
      %v1019 = vunpack.c.0.s8 %v1018
      %v1020 = vlaneseq
      %v1021 = vshrl.u32 %v1020, 7
      %v1022 = vsub.s32 %v1019, %v1021
      %v1023 = vrot.slane %v995, %v1022
      %v1024 = vcombine.high %v1002, %v1002
      %v1025 = vcombine.high %v1009, %v1009
      %v1026 = vcombine.high %v1016, %v1016
      %v1027 = vcombine.high %v1023, %v1023
      %v1028 = vlaneseq
      %v1029 = vshrl.u32 %v1028, 7
      %v1030 = vsub.s32 0, %v1029
      %v1031 = vrot.slane %v838, %v1030
      %1033 = vbcast.lane.b32.xlu0 %v1031, 256
      %v1034 = vpop.permute.xlu0 %1033
      %s1036 = sor.u32 256, 8
      %1037 = vbcast.lane.b32.xlu0 %v1031, %s1036
      %v1038 = vpop.permute.xlu0 %1037
      %v1039 = vlaneseq
      %v1040 = vshrl.u32 %v1039, 7
      %v1041 = vsub.s32 1, %v1040
      %v1042 = vrot.slane %v838, %v1041
      %1044 = vbcast.lane.b32.xlu0 %v1042, 256
      %v1045 = vpop.permute.xlu0 %1044
      %s1047 = sor.u32 256, 8
      %1048 = vbcast.lane.b32.xlu0 %v1042, %s1047
      %v1049 = vpop.permute.xlu0 %1048
      %v1050 = vlaneseq
      %v1051 = vshrl.u32 %v1050, 7
      %v1052 = vsub.s32 2, %v1051
      %v1053 = vrot.slane %v838, %v1052
      %1055 = vbcast.lane.b32.xlu0 %v1053, 256
      %v1056 = vpop.permute.xlu0 %1055
      %s1058 = sor.u32 256, 8
      %1059 = vbcast.lane.b32.xlu0 %v1053, %s1058
      %v1060 = vpop.permute.xlu0 %1059
      %v1061 = vlaneseq
      %v1062 = vshrl.u32 %v1061, 7
      %v1063 = vsub.s32 3, %v1062
      %v1064 = vrot.slane %v838, %v1063
      %1066 = vbcast.lane.b32.xlu0 %v1064, 256
      %v1067 = vpop.permute.xlu0 %1066
      %s1069 = sor.u32 256, 8
      %1070 = vbcast.lane.b32.xlu0 %v1064, %s1069
      %v1071 = vpop.permute.xlu0 %1070
      %v1072 = vlaneseq
      %v1073 = vshrl.u32 %v1072, 7
      %v1074 = vsub.s32 4, %v1073
      %v1075 = vrot.slane %v838, %v1074
      %1077 = vbcast.lane.b32.xlu0 %v1075, 256
      %v1078 = vpop.permute.xlu0 %1077
      %s1080 = sor.u32 256, 8
      %1081 = vbcast.lane.b32.xlu0 %v1075, %s1080
      %v1082 = vpop.permute.xlu0 %1081
      %v1083 = vlaneseq
      %v1084 = vshrl.u32 %v1083, 7
      %v1085 = vsub.s32 5, %v1084
      %v1086 = vrot.slane %v838, %v1085
      %1088 = vbcast.lane.b32.xlu0 %v1086, 256
      %v1089 = vpop.permute.xlu0 %1088
      %s1091 = sor.u32 256, 8
      %1092 = vbcast.lane.b32.xlu0 %v1086, %s1091
      %v1093 = vpop.permute.xlu0 %1092
      %v1094 = vlaneseq
      %v1095 = vshrl.u32 %v1094, 7
      %v1096 = vsub.s32 6, %v1095
      %v1097 = vrot.slane %v838, %v1096
      %1099 = vbcast.lane.b32.xlu0 %v1097, 256
      %v1100 = vpop.permute.xlu0 %1099
      %s1102 = sor.u32 256, 8
      %1103 = vbcast.lane.b32.xlu0 %v1097, %s1102
      %v1104 = vpop.permute.xlu0 %1103
      %v1105 = vlaneseq
      %v1106 = vshrl.u32 %v1105, 7
      %v1107 = vsub.s32 7, %v1106
      %v1108 = vrot.slane %v838, %v1107
      %1110 = vbcast.lane.b32.xlu0 %v1108, 256
      %v1111 = vpop.permute.xlu0 %1110
      %s1113 = sor.u32 256, 8
      %1114 = vbcast.lane.b32.xlu0 %v1108, %s1113
      %v1115 = vpop.permute.xlu0 %1114
      %v1116 = vlaneseq
      %v1117 = vshrl.u32 %v1116, 7
      %v1118 = vsub.s32 0, %v1117
      %v1119 = vrot.slane %v1002, %v1118
      %v1120 = vlaneseq
      %v1121 = vshrl.u32 %v1120, 7
      %v1122 = vsub.s32 0, %v1121
      %v1123 = vrot.slane %v1016, %v1122
      %v1124 = vlaneseq
      %v1125 = vshrl.u32 %v1124, 7
      %v1126 = vsub.s32 0, %v1125
      %v1127 = vrot.slane %v1024, %v1126
      %v1128 = vlaneseq
      %v1129 = vshrl.u32 %v1128, 7
      %v1130 = vsub.s32 0, %v1129
      %v1131 = vrot.slane %v1026, %v1130
      %v1132 = vlaneseq
      %v1133 = vshrl.u32 %v1132, 7
      %v1134 = vsub.s32 0, %v1133
      %v1135 = vrot.slane %v1009, %v1134
      %v1136 = vlaneseq
      %v1137 = vshrl.u32 %v1136, 7
      %v1138 = vsub.s32 0, %v1137
      %v1139 = vrot.slane %v1023, %v1138
      %v1140 = vlaneseq
      %v1141 = vshrl.u32 %v1140, 7
      %v1142 = vsub.s32 0, %v1141
      %v1143 = vrot.slane %v1025, %v1142
      %v1144 = vlaneseq
      %v1145 = vshrl.u32 %v1144, 7
      %v1146 = vsub.s32 0, %v1145
      %v1147 = vrot.slane %v1027, %v1146
      %v1156 = vmul.f32 %v1119, %v1034
      %v1157 = vmul.f32 %v1119, %v1038
      %v1158 = vmul.f32 %v1123, %v1045
      %v1159 = vmul.f32 %v1123, %v1049
      %v1160 = vmul.f32 %v1127, %v1056
      %v1161 = vmul.f32 %v1127, %v1060
      %v1162 = vmul.f32 %v1131, %v1067
      %v1163 = vmul.f32 %v1131, %v1071
      %v1164 = vmul.f32 %v1135, %v1078
      %v1165 = vmul.f32 %v1135, %v1082
      %v1166 = vmul.f32 %v1139, %v1089
      %v1167 = vmul.f32 %v1139, %v1093
      %v1168 = vmul.f32 %v1143, %v1100
      %v1169 = vmul.f32 %v1143, %v1104
      %v1170 = vmul.f32 %v1147, %v1111
      %v1171 = vmul.f32 %v1147, %v1115
      %v1172 = vmul.f32 %v946, %v820
      %v1173 = vmul.f32 %v948, %v821
      %v1174 = vmul.f32 %v950, %v822
      %v1175 = vmul.f32 %v952, %v823
      %v1176 = vmul.f32 %v954, %v824
      %v1177 = vmul.f32 %v956, %v825
      %v1178 = vmul.f32 %v958, %v826
      %v1179 = vmul.f32 %v960, %v827
      %v1180 = vmul.f32 %v962, %v828
      %v1181 = vmul.f32 %v964, %v829
      %v1182 = vmul.f32 %v966, %v830
      %v1183 = vmul.f32 %v968, %v831
      %v1184 = vmul.f32 %v970, %v832
      %v1185 = vmul.f32 %v972, %v833
      %v1186 = vmul.f32 %v974, %v834
      %v1187 = vmul.f32 %v976, %v835
      %v1188 = vadd.f32 %v1172, %v1156
      %v1189 = vadd.f32 %v1173, %v1157
      %v1190 = vadd.f32 %v1174, %v1158
      %v1191 = vadd.f32 %v1175, %v1159
      %v1192 = vadd.f32 %v1176, %v1160
      %v1193 = vadd.f32 %v1177, %v1161
      %v1194 = vadd.f32 %v1178, %v1162
      %v1195 = vadd.f32 %v1179, %v1163
      %v1196 = vadd.f32 %v1180, %v1164
      %v1197 = vadd.f32 %v1181, %v1165
      %v1198 = vadd.f32 %v1182, %v1166
      %v1199 = vadd.f32 %v1183, %v1167
      %v1200 = vadd.f32 %v1184, %v1168
      %v1201 = vadd.f32 %v1185, %v1169
      %v1202 = vadd.f32 %v1186, %v1170
      %v1203 = vadd.f32 %v1187, %v1171
      %s1205 = sor.u32 256, 16
      %1206 = vbcast.lane.b32.xlu0 %v1031, %s1205
      %v1207 = vpop.permute.xlu0 %1206
      %s1209 = sor.u32 256, 24
      %1210 = vbcast.lane.b32.xlu0 %v1031, %s1209
      %v1211 = vpop.permute.xlu0 %1210
      %s1213 = sor.u32 256, 16
      %1214 = vbcast.lane.b32.xlu0 %v1042, %s1213
      %v1215 = vpop.permute.xlu0 %1214
      %s1217 = sor.u32 256, 24
      %1218 = vbcast.lane.b32.xlu0 %v1042, %s1217
      %v1219 = vpop.permute.xlu0 %1218
      %s1221 = sor.u32 256, 16
      %1222 = vbcast.lane.b32.xlu0 %v1053, %s1221
      %v1223 = vpop.permute.xlu0 %1222
      %s1225 = sor.u32 256, 24
      %1226 = vbcast.lane.b32.xlu0 %v1053, %s1225
      %v1227 = vpop.permute.xlu0 %1226
      %s1229 = sor.u32 256, 16
      %1230 = vbcast.lane.b32.xlu0 %v1064, %s1229
      %v1231 = vpop.permute.xlu0 %1230
      %s1233 = sor.u32 256, 24
      %1234 = vbcast.lane.b32.xlu0 %v1064, %s1233
      %v1235 = vpop.permute.xlu0 %1234
      %s1237 = sor.u32 256, 16
      %1238 = vbcast.lane.b32.xlu0 %v1075, %s1237
      %v1239 = vpop.permute.xlu0 %1238
      %s1241 = sor.u32 256, 24
      %1242 = vbcast.lane.b32.xlu0 %v1075, %s1241
      %v1243 = vpop.permute.xlu0 %1242
      %s1245 = sor.u32 256, 16
      %1246 = vbcast.lane.b32.xlu0 %v1086, %s1245
      %v1247 = vpop.permute.xlu0 %1246
      %s1249 = sor.u32 256, 24
      %1250 = vbcast.lane.b32.xlu0 %v1086, %s1249
      %v1251 = vpop.permute.xlu0 %1250
      %s1253 = sor.u32 256, 16
      %1254 = vbcast.lane.b32.xlu0 %v1097, %s1253
      %v1255 = vpop.permute.xlu0 %1254
      %s1257 = sor.u32 256, 24
      %1258 = vbcast.lane.b32.xlu0 %v1097, %s1257
      %v1259 = vpop.permute.xlu0 %1258
      %s1261 = sor.u32 256, 16
      %1262 = vbcast.lane.b32.xlu0 %v1108, %s1261
      %v1263 = vpop.permute.xlu0 %1262
      %s1265 = sor.u32 256, 24
      %1266 = vbcast.lane.b32.xlu0 %v1108, %s1265
      %v1267 = vpop.permute.xlu0 %1266
      %v1268 = vmul.f32 %v1188, %v1207
      %v1269 = vmul.f32 %v1189, %v1211
      %v1270 = vmul.f32 %v1190, %v1215
      %v1271 = vmul.f32 %v1191, %v1219
      %v1272 = vmul.f32 %v1192, %v1223
      %v1273 = vmul.f32 %v1193, %v1227
      %v1274 = vmul.f32 %v1194, %v1231
      %v1275 = vmul.f32 %v1195, %v1235
      %v1276 = vmul.f32 %v1196, %v1239
      %v1277 = vmul.f32 %v1197, %v1243
      %v1278 = vmul.f32 %v1198, %v1247
      %v1279 = vmul.f32 %v1199, %v1251
      %v1280 = vmul.f32 %v1200, %v1255
      %v1281 = vmul.f32 %v1201, %v1259
      %v1282 = vmul.f32 %v1202, %v1263
      %v1283 = vmul.f32 %v1203, %v1267
      %v1284 = vsel %vm513, %v1268, 0.0
      %v1285 = vsel %vm513, %v1269, 0.0
      %v1286 = vadd.f32 %v1284, %v1285
      %v1287 = vrot.slane %v1286, 4
      %v1288 = vadd.f32 %v1286, %v1287
      %v1289 = vrot.slane %v1288, 2
      %v1290 = vadd.f32 %v1288, %v1289
      %v1291 = vrot.slane %v1290, 1
      %v1292 = vadd.f32 %v1290, %v1291
      %v1293 = vsel %vm513, %v1270, 0.0
      %v1294 = vsel %vm513, %v1271, 0.0
      %v1295 = vadd.f32 %v1293, %v1294
      %v1296 = vrot.slane %v1295, 4
      %v1297 = vadd.f32 %v1295, %v1296
      %v1298 = vrot.slane %v1297, 2
      %v1299 = vadd.f32 %v1297, %v1298
      %v1300 = vrot.slane %v1299, 1
      %v1301 = vadd.f32 %v1299, %v1300
      %v1302 = vsel %vm513, %v1272, 0.0
      %v1303 = vsel %vm513, %v1273, 0.0
      %v1304 = vadd.f32 %v1302, %v1303
      %v1305 = vrot.slane %v1304, 4
      %v1306 = vadd.f32 %v1304, %v1305
      %v1307 = vrot.slane %v1306, 2
      %v1308 = vadd.f32 %v1306, %v1307
      %v1309 = vrot.slane %v1308, 1
      %v1310 = vadd.f32 %v1308, %v1309
      %v1311 = vsel %vm513, %v1274, 0.0
      %v1312 = vsel %vm513, %v1275, 0.0
      %v1313 = vadd.f32 %v1311, %v1312
      %v1314 = vrot.slane %v1313, 4
      %v1315 = vadd.f32 %v1313, %v1314
      %v1316 = vrot.slane %v1315, 2
      %v1317 = vadd.f32 %v1315, %v1316
      %v1318 = vrot.slane %v1317, 1
      %v1319 = vadd.f32 %v1317, %v1318
      %v1320 = vsel %vm513, %v1276, 0.0
      %v1321 = vsel %vm513, %v1277, 0.0
      %v1322 = vadd.f32 %v1320, %v1321
      %v1323 = vrot.slane %v1322, 4
      %v1324 = vadd.f32 %v1322, %v1323
      %v1325 = vrot.slane %v1324, 2
      %v1326 = vadd.f32 %v1324, %v1325
      %v1327 = vrot.slane %v1326, 1
      %v1328 = vadd.f32 %v1326, %v1327
      %v1329 = vsel %vm513, %v1278, 0.0
      %v1330 = vsel %vm513, %v1279, 0.0
      %v1331 = vadd.f32 %v1329, %v1330
      %v1332 = vrot.slane %v1331, 4
      %v1333 = vadd.f32 %v1331, %v1332
      %v1334 = vrot.slane %v1333, 2
      %v1335 = vadd.f32 %v1333, %v1334
      %v1336 = vrot.slane %v1335, 1
      %v1337 = vadd.f32 %v1335, %v1336
      %v1338 = vsel %vm513, %v1280, 0.0
      %v1339 = vsel %vm513, %v1281, 0.0
      %v1340 = vadd.f32 %v1338, %v1339
      %v1341 = vrot.slane %v1340, 4
      %v1342 = vadd.f32 %v1340, %v1341
      %v1343 = vrot.slane %v1342, 2
      %v1344 = vadd.f32 %v1342, %v1343
      %v1345 = vrot.slane %v1344, 1
      %v1346 = vadd.f32 %v1344, %v1345
      %v1347 = vsel %vm513, %v1282, 0.0
      %v1348 = vsel %vm513, %v1283, 0.0
      %v1349 = vadd.f32 %v1347, %v1348
      %v1350 = vrot.slane %v1349, 4
      %v1351 = vadd.f32 %v1349, %v1350
      %v1352 = vrot.slane %v1351, 2
      %v1353 = vadd.f32 %v1351, %v1352
      %v1354 = vrot.slane %v1353, 1
      %v1355 = vadd.f32 %v1353, %v1354
      %vm1364 = vcmask 1041409
      %v1365 = vsel %vm1364, %v1301, %v1292
      %vm1366 = vcmask 1042434
      %v1367 = vsel %vm1366, %v1310, %v1365
      %vm1368 = vcmask 1043459
      %v1369 = vsel %vm1368, %v1319, %v1367
      %vm1370 = vcmask 1044484
      %v1371 = vsel %vm1370, %v1328, %v1369
      %vm1372 = vcmask 1045509
      %v1373 = vsel %vm1372, %v1337, %v1371
      %vm1374 = vcmask 1046534
      %v1375 = vsel %vm1374, %v1346, %v1373
      %vm1376 = vcmask 1047559
      %v1377 = vsel %vm1376, %v1355, %v1375
      %1379 = vst.msk [vmem:[#allocation8] sm:$0xff] %vm513, %v1377
      %s1380 = scalar_lea.vmem [#allocation5], 8
      %v1381 = vld [vmem:[%s1380] sm:$0xff]
      %s1382 = scalar_lea.vmem [#allocation6], 8
      %v1383 = vld [vmem:[%s1382] sm:$0xff]
      %s1384 = scalar_lea.vmem [#allocation7], 8
      %v1385 = vld [vmem:[%s1384] sm:$0xff]
      %v1387 = vcombine.high %v1381, %v1381
      %v1389 = vunpack.c.l.s4 1966171168
      %v1390 = vunpack.c.0.s8 %v1389
      %v1391 = vlaneseq
      %v1392 = vshrl.u32 %v1391, 7
      %v1393 = vsub.s32 %v1390, %v1392
      %v1394 = vrot.slane %v1381, %v1393
      %v1396 = vunpack.c.l.s4 1966171168
      %v1397 = vunpack.c.0.s8 %v1396
      %v1398 = vlaneseq
      %v1399 = vshrl.u32 %v1398, 7
      %v1400 = vsub.s32 %v1397, %v1399
      %v1401 = vrot.slane %v1387, %v1400
      %v1402 = vcombine.high %v1394, %v1394
      %v1403 = vcombine.high %v1401, %v1401
      %v1405 = vunpack.c.l.s4 1966171168
      %v1406 = vunpack.c.0.s8 %v1405
      %v1407 = vlaneseq
      %v1408 = vshrl.u32 %v1407, 7
      %v1409 = vsub.s32 %v1406, %v1408
      %v1410 = vrot.slane %v1394, %v1409
      %v1412 = vunpack.c.l.s4 1966171168
      %v1413 = vunpack.c.0.s8 %v1412
      %v1414 = vlaneseq
      %v1415 = vshrl.u32 %v1414, 7
      %v1416 = vsub.s32 %v1413, %v1415
      %v1417 = vrot.slane %v1401, %v1416
      %v1419 = vunpack.c.l.s4 1966171168
      %v1420 = vunpack.c.0.s8 %v1419
      %v1421 = vlaneseq
      %v1422 = vshrl.u32 %v1421, 7
      %v1423 = vsub.s32 %v1420, %v1422
      %v1424 = vrot.slane %v1402, %v1423
      %v1426 = vunpack.c.l.s4 1966171168
      %v1427 = vunpack.c.0.s8 %v1426
      %v1428 = vlaneseq
      %v1429 = vshrl.u32 %v1428, 7
      %v1430 = vsub.s32 %v1427, %v1429
      %v1431 = vrot.slane %v1403, %v1430
      %v1432 = vcombine.high %v1410, %v1410
      %v1433 = vcombine.high %v1417, %v1417
      %v1434 = vcombine.high %v1424, %v1424
      %v1435 = vcombine.high %v1431, %v1431
      %v1436 = vlaneseq
      %v1437 = vshrl.u32 %v1436, 7
      %v1438 = vsub.s32 0, %v1437
      %v1439 = vrot.slane %v1410, %v1438
      %v1440 = vlaneseq
      %v1441 = vshrl.u32 %v1440, 7
      %v1442 = vsub.s32 0, %v1441
      %v1443 = vrot.slane %v1424, %v1442
      %v1444 = vlaneseq
      %v1445 = vshrl.u32 %v1444, 7
      %v1446 = vsub.s32 0, %v1445
      %v1447 = vrot.slane %v1432, %v1446
      %v1448 = vlaneseq
      %v1449 = vshrl.u32 %v1448, 7
      %v1450 = vsub.s32 0, %v1449
      %v1451 = vrot.slane %v1434, %v1450
      %v1452 = vlaneseq
      %v1453 = vshrl.u32 %v1452, 7
      %v1454 = vsub.s32 0, %v1453
      %v1455 = vrot.slane %v1417, %v1454
      %v1456 = vlaneseq
      %v1457 = vshrl.u32 %v1456, 7
      %v1458 = vsub.s32 0, %v1457
      %v1459 = vrot.slane %v1431, %v1458
      %v1460 = vlaneseq
      %v1461 = vshrl.u32 %v1460, 7
      %v1462 = vsub.s32 0, %v1461
      %v1463 = vrot.slane %v1433, %v1462
      %v1464 = vlaneseq
      %v1465 = vshrl.u32 %v1464, 7
      %v1466 = vsub.s32 0, %v1465
      %v1467 = vrot.slane %v1435, %v1466
      %v1476 = vmul.f32 %v1439, %v818
      %v1477 = vmul.f32 %v1439, %v819
      %v1478 = vmul.f32 %v1443, %v818
      %v1479 = vmul.f32 %v1443, %v819
      %v1480 = vmul.f32 %v1447, %v818
      %v1481 = vmul.f32 %v1447, %v819
      %v1482 = vmul.f32 %v1451, %v818
      %v1483 = vmul.f32 %v1451, %v819
      %v1484 = vmul.f32 %v1455, %v818
      %v1485 = vmul.f32 %v1455, %v819
      %v1486 = vmul.f32 %v1459, %v818
      %v1487 = vmul.f32 %v1459, %v819
      %v1488 = vmul.f32 %v1463, %v818
      %v1489 = vmul.f32 %v1463, %v819
      %v1490 = vmul.f32 %v1467, %v818
      %v1491 = vmul.f32 %v1467, %v819
      %v1492 = vmul.f32 %v1476, 1.442695
      %v1493 = vpow.pop %v1492
      %v1494 = vmul.f32 %v1477, 1.442695
      %v1495 = vpow.pop %v1494
      %v1496 = vmul.f32 %v1478, 1.442695
      %v1497 = vpow.pop %v1496
      %v1498 = vmul.f32 %v1479, 1.442695
      %v1499 = vpow.pop %v1498
      %v1500 = vmul.f32 %v1480, 1.442695
      %v1501 = vpow.pop %v1500
      %v1502 = vmul.f32 %v1481, 1.442695
      %v1503 = vpow.pop %v1502
      %v1504 = vmul.f32 %v1482, 1.442695
      %v1505 = vpow.pop %v1504
      %v1506 = vmul.f32 %v1483, 1.442695
      %v1507 = vpow.pop %v1506
      %v1508 = vmul.f32 %v1484, 1.442695
      %v1509 = vpow.pop %v1508
      %v1510 = vmul.f32 %v1485, 1.442695
      %v1511 = vpow.pop %v1510
      %v1512 = vmul.f32 %v1486, 1.442695
      %v1513 = vpow.pop %v1512
      %v1514 = vmul.f32 %v1487, 1.442695
      %v1515 = vpow.pop %v1514
      %v1516 = vmul.f32 %v1488, 1.442695
      %v1517 = vpow.pop %v1516
      %v1518 = vmul.f32 %v1489, 1.442695
      %v1519 = vpow.pop %v1518
      %v1520 = vmul.f32 %v1490, 1.442695
      %v1521 = vpow.pop %v1520
      %v1522 = vmul.f32 %v1491, 1.442695
      %v1523 = vpow.pop %v1522
      %v1524 = vmul.f32 %v1381, %v1383
      %v1526 = vcombine.high %v1524, %v1524
      %v1528 = vunpack.c.l.s4 1966171168
      %v1529 = vunpack.c.0.s8 %v1528
      %v1530 = vlaneseq
      %v1531 = vshrl.u32 %v1530, 7
      %v1532 = vsub.s32 %v1529, %v1531
      %v1533 = vrot.slane %v1524, %v1532
      %v1535 = vunpack.c.l.s4 1966171168
      %v1536 = vunpack.c.0.s8 %v1535
      %v1537 = vlaneseq
      %v1538 = vshrl.u32 %v1537, 7
      %v1539 = vsub.s32 %v1536, %v1538
      %v1540 = vrot.slane %v1526, %v1539
      %v1541 = vcombine.high %v1533, %v1533
      %v1542 = vcombine.high %v1540, %v1540
      %v1544 = vunpack.c.l.s4 1966171168
      %v1545 = vunpack.c.0.s8 %v1544
      %v1546 = vlaneseq
      %v1547 = vshrl.u32 %v1546, 7
      %v1548 = vsub.s32 %v1545, %v1547
      %v1549 = vrot.slane %v1533, %v1548
      %v1551 = vunpack.c.l.s4 1966171168
      %v1552 = vunpack.c.0.s8 %v1551
      %v1553 = vlaneseq
      %v1554 = vshrl.u32 %v1553, 7
      %v1555 = vsub.s32 %v1552, %v1554
      %v1556 = vrot.slane %v1540, %v1555
      %v1558 = vunpack.c.l.s4 1966171168
      %v1559 = vunpack.c.0.s8 %v1558
      %v1560 = vlaneseq
      %v1561 = vshrl.u32 %v1560, 7
      %v1562 = vsub.s32 %v1559, %v1561
      %v1563 = vrot.slane %v1541, %v1562
      %v1565 = vunpack.c.l.s4 1966171168
      %v1566 = vunpack.c.0.s8 %v1565
      %v1567 = vlaneseq
      %v1568 = vshrl.u32 %v1567, 7
      %v1569 = vsub.s32 %v1566, %v1568
      %v1570 = vrot.slane %v1542, %v1569
      %v1571 = vcombine.high %v1549, %v1549
      %v1572 = vcombine.high %v1556, %v1556
      %v1573 = vcombine.high %v1563, %v1563
      %v1574 = vcombine.high %v1570, %v1570
      %v1575 = vlaneseq
      %v1576 = vshrl.u32 %v1575, 7
      %v1577 = vsub.s32 0, %v1576
      %v1578 = vrot.slane %v1385, %v1577
      %1580 = vbcast.lane.b32.xlu0 %v1578, 256
      %v1581 = vpop.permute.xlu0 %1580
      %s1583 = sor.u32 256, 8
      %1584 = vbcast.lane.b32.xlu0 %v1578, %s1583
      %v1585 = vpop.permute.xlu0 %1584
      %v1586 = vlaneseq
      %v1587 = vshrl.u32 %v1586, 7
      %v1588 = vsub.s32 1, %v1587
      %v1589 = vrot.slane %v1385, %v1588
      %1591 = vbcast.lane.b32.xlu0 %v1589, 256
      %v1592 = vpop.permute.xlu0 %1591
      %s1594 = sor.u32 256, 8
      %1595 = vbcast.lane.b32.xlu0 %v1589, %s1594
      %v1596 = vpop.permute.xlu0 %1595
      %v1597 = vlaneseq
      %v1598 = vshrl.u32 %v1597, 7
      %v1599 = vsub.s32 2, %v1598
      %v1600 = vrot.slane %v1385, %v1599
      %1602 = vbcast.lane.b32.xlu0 %v1600, 256
      %v1603 = vpop.permute.xlu0 %1602
      %s1605 = sor.u32 256, 8
      %1606 = vbcast.lane.b32.xlu0 %v1600, %s1605
      %v1607 = vpop.permute.xlu0 %1606
      %v1608 = vlaneseq
      %v1609 = vshrl.u32 %v1608, 7
      %v1610 = vsub.s32 3, %v1609
      %v1611 = vrot.slane %v1385, %v1610
      %1613 = vbcast.lane.b32.xlu0 %v1611, 256
      %v1614 = vpop.permute.xlu0 %1613
      %s1616 = sor.u32 256, 8
      %1617 = vbcast.lane.b32.xlu0 %v1611, %s1616
      %v1618 = vpop.permute.xlu0 %1617
      %v1619 = vlaneseq
      %v1620 = vshrl.u32 %v1619, 7
      %v1621 = vsub.s32 4, %v1620
      %v1622 = vrot.slane %v1385, %v1621
      %1624 = vbcast.lane.b32.xlu0 %v1622, 256
      %v1625 = vpop.permute.xlu0 %1624
      %s1627 = sor.u32 256, 8
      %1628 = vbcast.lane.b32.xlu0 %v1622, %s1627
      %v1629 = vpop.permute.xlu0 %1628
      %v1630 = vlaneseq
      %v1631 = vshrl.u32 %v1630, 7
      %v1632 = vsub.s32 5, %v1631
      %v1633 = vrot.slane %v1385, %v1632
      %1635 = vbcast.lane.b32.xlu0 %v1633, 256
      %v1636 = vpop.permute.xlu0 %1635
      %s1638 = sor.u32 256, 8
      %1639 = vbcast.lane.b32.xlu0 %v1633, %s1638
      %v1640 = vpop.permute.xlu0 %1639
      %v1641 = vlaneseq
      %v1642 = vshrl.u32 %v1641, 7
      %v1643 = vsub.s32 6, %v1642
      %v1644 = vrot.slane %v1385, %v1643
      %1646 = vbcast.lane.b32.xlu0 %v1644, 256
      %v1647 = vpop.permute.xlu0 %1646
      %s1649 = sor.u32 256, 8
      %1650 = vbcast.lane.b32.xlu0 %v1644, %s1649
      %v1651 = vpop.permute.xlu0 %1650
      %v1652 = vlaneseq
      %v1653 = vshrl.u32 %v1652, 7
      %v1654 = vsub.s32 7, %v1653
      %v1655 = vrot.slane %v1385, %v1654
      %1657 = vbcast.lane.b32.xlu0 %v1655, 256
      %v1658 = vpop.permute.xlu0 %1657
      %s1660 = sor.u32 256, 8
      %1661 = vbcast.lane.b32.xlu0 %v1655, %s1660
      %v1662 = vpop.permute.xlu0 %1661
      %v1663 = vlaneseq
      %v1664 = vshrl.u32 %v1663, 7
      %v1665 = vsub.s32 0, %v1664
      %v1666 = vrot.slane %v1549, %v1665
      %v1667 = vlaneseq
      %v1668 = vshrl.u32 %v1667, 7
      %v1669 = vsub.s32 0, %v1668
      %v1670 = vrot.slane %v1563, %v1669
      %v1671 = vlaneseq
      %v1672 = vshrl.u32 %v1671, 7
      %v1673 = vsub.s32 0, %v1672
      %v1674 = vrot.slane %v1571, %v1673
      %v1675 = vlaneseq
      %v1676 = vshrl.u32 %v1675, 7
      %v1677 = vsub.s32 0, %v1676
      %v1678 = vrot.slane %v1573, %v1677
      %v1679 = vlaneseq
      %v1680 = vshrl.u32 %v1679, 7
      %v1681 = vsub.s32 0, %v1680
      %v1682 = vrot.slane %v1556, %v1681
      %v1683 = vlaneseq
      %v1684 = vshrl.u32 %v1683, 7
      %v1685 = vsub.s32 0, %v1684
      %v1686 = vrot.slane %v1570, %v1685
      %v1687 = vlaneseq
      %v1688 = vshrl.u32 %v1687, 7
      %v1689 = vsub.s32 0, %v1688
      %v1690 = vrot.slane %v1572, %v1689
      %v1691 = vlaneseq
      %v1692 = vshrl.u32 %v1691, 7
      %v1693 = vsub.s32 0, %v1692
      %v1694 = vrot.slane %v1574, %v1693
      %v1703 = vmul.f32 %v1666, %v1581
      %v1704 = vmul.f32 %v1666, %v1585
      %v1705 = vmul.f32 %v1670, %v1592
      %v1706 = vmul.f32 %v1670, %v1596
      %v1707 = vmul.f32 %v1674, %v1603
      %v1708 = vmul.f32 %v1674, %v1607
      %v1709 = vmul.f32 %v1678, %v1614
      %v1710 = vmul.f32 %v1678, %v1618
      %v1711 = vmul.f32 %v1682, %v1625
      %v1712 = vmul.f32 %v1682, %v1629
      %v1713 = vmul.f32 %v1686, %v1636
      %v1714 = vmul.f32 %v1686, %v1640
      %v1715 = vmul.f32 %v1690, %v1647
      %v1716 = vmul.f32 %v1690, %v1651
      %v1717 = vmul.f32 %v1694, %v1658
      %v1718 = vmul.f32 %v1694, %v1662
      %v1719 = vmul.f32 %v1493, %v1188
      %v1720 = vmul.f32 %v1495, %v1189
      %v1721 = vmul.f32 %v1497, %v1190
      %v1722 = vmul.f32 %v1499, %v1191
      %v1723 = vmul.f32 %v1501, %v1192
      %v1724 = vmul.f32 %v1503, %v1193
      %v1725 = vmul.f32 %v1505, %v1194
      %v1726 = vmul.f32 %v1507, %v1195
      %v1727 = vmul.f32 %v1509, %v1196
      %v1728 = vmul.f32 %v1511, %v1197
      %v1729 = vmul.f32 %v1513, %v1198
      %v1730 = vmul.f32 %v1515, %v1199
      %v1731 = vmul.f32 %v1517, %v1200
      %v1732 = vmul.f32 %v1519, %v1201
      %v1733 = vmul.f32 %v1521, %v1202
      %v1734 = vmul.f32 %v1523, %v1203
      %v1735 = vadd.f32 %v1719, %v1703
      %v1736 = vadd.f32 %v1720, %v1704
      %v1737 = vadd.f32 %v1721, %v1705
      %v1738 = vadd.f32 %v1722, %v1706
      %v1739 = vadd.f32 %v1723, %v1707
      %v1740 = vadd.f32 %v1724, %v1708
      %v1741 = vadd.f32 %v1725, %v1709
      %v1742 = vadd.f32 %v1726, %v1710
      %v1743 = vadd.f32 %v1727, %v1711
      %v1744 = vadd.f32 %v1728, %v1712
      %v1745 = vadd.f32 %v1729, %v1713
      %v1746 = vadd.f32 %v1730, %v1714
      %v1747 = vadd.f32 %v1731, %v1715
      %v1748 = vadd.f32 %v1732, %v1716
      %v1749 = vadd.f32 %v1733, %v1717
      %v1750 = vadd.f32 %v1734, %v1718
      %s1752 = sor.u32 256, 16
      %1753 = vbcast.lane.b32.xlu0 %v1578, %s1752
      %v1754 = vpop.permute.xlu0 %1753
      %s1756 = sor.u32 256, 24
      %1757 = vbcast.lane.b32.xlu0 %v1578, %s1756
      %v1758 = vpop.permute.xlu0 %1757
      %s1760 = sor.u32 256, 16
      %1761 = vbcast.lane.b32.xlu0 %v1589, %s1760
      %v1762 = vpop.permute.xlu0 %1761
      %s1764 = sor.u32 256, 24
      %1765 = vbcast.lane.b32.xlu0 %v1589, %s1764
      %v1766 = vpop.permute.xlu0 %1765
      %s1768 = sor.u32 256, 16
      %1769 = vbcast.lane.b32.xlu0 %v1600, %s1768
      %v1770 = vpop.permute.xlu0 %1769
      %s1772 = sor.u32 256, 24
      %1773 = vbcast.lane.b32.xlu0 %v1600, %s1772
      %v1774 = vpop.permute.xlu0 %1773
      %s1776 = sor.u32 256, 16
      %1777 = vbcast.lane.b32.xlu0 %v1611, %s1776
      %v1778 = vpop.permute.xlu0 %1777
      %s1780 = sor.u32 256, 24
      %1781 = vbcast.lane.b32.xlu0 %v1611, %s1780
      %v1782 = vpop.permute.xlu0 %1781
      %s1784 = sor.u32 256, 16
      %1785 = vbcast.lane.b32.xlu0 %v1622, %s1784
      %v1786 = vpop.permute.xlu0 %1785
      %s1788 = sor.u32 256, 24
      %1789 = vbcast.lane.b32.xlu0 %v1622, %s1788
      %v1790 = vpop.permute.xlu0 %1789
      %s1792 = sor.u32 256, 16
      %1793 = vbcast.lane.b32.xlu0 %v1633, %s1792
      %v1794 = vpop.permute.xlu0 %1793
      %s1796 = sor.u32 256, 24
      %1797 = vbcast.lane.b32.xlu0 %v1633, %s1796
      %v1798 = vpop.permute.xlu0 %1797
      %s1800 = sor.u32 256, 16
      %1801 = vbcast.lane.b32.xlu0 %v1644, %s1800
      %v1802 = vpop.permute.xlu0 %1801
      %s1804 = sor.u32 256, 24
      %1805 = vbcast.lane.b32.xlu0 %v1644, %s1804
      %v1806 = vpop.permute.xlu0 %1805
      %s1808 = sor.u32 256, 16
      %1809 = vbcast.lane.b32.xlu0 %v1655, %s1808
      %v1810 = vpop.permute.xlu0 %1809
      %s1812 = sor.u32 256, 24
      %1813 = vbcast.lane.b32.xlu0 %v1655, %s1812
      %v1814 = vpop.permute.xlu0 %1813
      %v1815 = vmul.f32 %v1735, %v1754
      %v1816 = vmul.f32 %v1736, %v1758
      %v1817 = vmul.f32 %v1737, %v1762
      %v1818 = vmul.f32 %v1738, %v1766
      %v1819 = vmul.f32 %v1739, %v1770
      %v1820 = vmul.f32 %v1740, %v1774
      %v1821 = vmul.f32 %v1741, %v1778
      %v1822 = vmul.f32 %v1742, %v1782
      %v1823 = vmul.f32 %v1743, %v1786
      %v1824 = vmul.f32 %v1744, %v1790
      %v1825 = vmul.f32 %v1745, %v1794
      %v1826 = vmul.f32 %v1746, %v1798
      %v1827 = vmul.f32 %v1747, %v1802
      %v1828 = vmul.f32 %v1748, %v1806
      %v1829 = vmul.f32 %v1749, %v1810
      %v1830 = vmul.f32 %v1750, %v1814
      %v1831 = vsel %vm513, %v1815, 0.0
      %v1832 = vsel %vm513, %v1816, 0.0
      %v1833 = vadd.f32 %v1831, %v1832
      %v1834 = vrot.slane %v1833, 4
      %v1835 = vadd.f32 %v1833, %v1834
      %v1836 = vrot.slane %v1835, 2
      %v1837 = vadd.f32 %v1835, %v1836
      %v1838 = vrot.slane %v1837, 1
      %v1839 = vadd.f32 %v1837, %v1838
      %v1840 = vsel %vm513, %v1817, 0.0
      %v1841 = vsel %vm513, %v1818, 0.0
      %v1842 = vadd.f32 %v1840, %v1841
      %v1843 = vrot.slane %v1842, 4
      %v1844 = vadd.f32 %v1842, %v1843
      %v1845 = vrot.slane %v1844, 2
      %v1846 = vadd.f32 %v1844, %v1845
      %v1847 = vrot.slane %v1846, 1
      %v1848 = vadd.f32 %v1846, %v1847
      %v1849 = vsel %vm513, %v1819, 0.0
      %v1850 = vsel %vm513, %v1820, 0.0
      %v1851 = vadd.f32 %v1849, %v1850
      %v1852 = vrot.slane %v1851, 4
      %v1853 = vadd.f32 %v1851, %v1852
      %v1854 = vrot.slane %v1853, 2
      %v1855 = vadd.f32 %v1853, %v1854
      %v1856 = vrot.slane %v1855, 1
      %v1857 = vadd.f32 %v1855, %v1856
      %v1858 = vsel %vm513, %v1821, 0.0
      %v1859 = vsel %vm513, %v1822, 0.0
      %v1860 = vadd.f32 %v1858, %v1859
      %v1861 = vrot.slane %v1860, 4
      %v1862 = vadd.f32 %v1860, %v1861
      %v1863 = vrot.slane %v1862, 2
      %v1864 = vadd.f32 %v1862, %v1863
      %v1865 = vrot.slane %v1864, 1
      %v1866 = vadd.f32 %v1864, %v1865
      %v1867 = vsel %vm513, %v1823, 0.0
      %v1868 = vsel %vm513, %v1824, 0.0
      %v1869 = vadd.f32 %v1867, %v1868
      %v1870 = vrot.slane %v1869, 4
      %v1871 = vadd.f32 %v1869, %v1870
      %v1872 = vrot.slane %v1871, 2
      %v1873 = vadd.f32 %v1871, %v1872
      %v1874 = vrot.slane %v1873, 1
      %v1875 = vadd.f32 %v1873, %v1874
      %v1876 = vsel %vm513, %v1825, 0.0
      %v1877 = vsel %vm513, %v1826, 0.0
      %v1878 = vadd.f32 %v1876, %v1877
      %v1879 = vrot.slane %v1878, 4
      %v1880 = vadd.f32 %v1878, %v1879
      %v1881 = vrot.slane %v1880, 2
      %v1882 = vadd.f32 %v1880, %v1881
      %v1883 = vrot.slane %v1882, 1
      %v1884 = vadd.f32 %v1882, %v1883
      %v1885 = vsel %vm513, %v1827, 0.0
      %v1886 = vsel %vm513, %v1828, 0.0
      %v1887 = vadd.f32 %v1885, %v1886
      %v1888 = vrot.slane %v1887, 4
      %v1889 = vadd.f32 %v1887, %v1888
      %v1890 = vrot.slane %v1889, 2
      %v1891 = vadd.f32 %v1889, %v1890
      %v1892 = vrot.slane %v1891, 1
      %v1893 = vadd.f32 %v1891, %v1892
      %v1894 = vsel %vm513, %v1829, 0.0
      %v1895 = vsel %vm513, %v1830, 0.0
      %v1896 = vadd.f32 %v1894, %v1895
      %v1897 = vrot.slane %v1896, 4
      %v1898 = vadd.f32 %v1896, %v1897
      %v1899 = vrot.slane %v1898, 2
      %v1900 = vadd.f32 %v1898, %v1899
      %v1901 = vrot.slane %v1900, 1
      %v1902 = vadd.f32 %v1900, %v1901
      %v1911 = vsel %vm1364, %v1848, %v1839
      %v1912 = vsel %vm1366, %v1857, %v1911
      %v1913 = vsel %vm1368, %v1866, %v1912
      %v1914 = vsel %vm1370, %v1875, %v1913
      %v1915 = vsel %vm1372, %v1884, %v1914
      %v1916 = vsel %vm1374, %v1893, %v1915
      %v1917 = vsel %vm1376, %v1902, %v1916
      %s1919 = scalar_lea.vmem [#allocation8], 8
      %1920 = vst.msk [vmem:[%s1919] sm:$0xff] %vm513, %v1917
      %s1921 = scalar_lea.vmem [#allocation5], 16
      %v1922 = vld [vmem:[%s1921] sm:$0xff]
      %s1923 = scalar_lea.vmem [#allocation6], 16
      %v1924 = vld [vmem:[%s1923] sm:$0xff]
      %s1925 = scalar_lea.vmem [#allocation7], 16
      %v1926 = vld [vmem:[%s1925] sm:$0xff]
      %v1928 = vcombine.high %v1922, %v1922
      %v1930 = vunpack.c.l.s4 1966171168
      %v1931 = vunpack.c.0.s8 %v1930
      %v1932 = vlaneseq
      %v1933 = vshrl.u32 %v1932, 7
      %v1934 = vsub.s32 %v1931, %v1933
      %v1935 = vrot.slane %v1922, %v1934
      %v1937 = vunpack.c.l.s4 1966171168
      %v1938 = vunpack.c.0.s8 %v1937
      %v1939 = vlaneseq
      %v1940 = vshrl.u32 %v1939, 7
      %v1941 = vsub.s32 %v1938, %v1940
      %v1942 = vrot.slane %v1928, %v1941
      %v1943 = vcombine.high %v1935, %v1935
      %v1944 = vcombine.high %v1942, %v1942
      %v1946 = vunpack.c.l.s4 1966171168
      %v1947 = vunpack.c.0.s8 %v1946
      %v1948 = vlaneseq
      %v1949 = vshrl.u32 %v1948, 7
      %v1950 = vsub.s32 %v1947, %v1949
      %v1951 = vrot.slane %v1935, %v1950
      %v1953 = vunpack.c.l.s4 1966171168
      %v1954 = vunpack.c.0.s8 %v1953
      %v1955 = vlaneseq
      %v1956 = vshrl.u32 %v1955, 7
      %v1957 = vsub.s32 %v1954, %v1956
      %v1958 = vrot.slane %v1942, %v1957
      %v1960 = vunpack.c.l.s4 1966171168
      %v1961 = vunpack.c.0.s8 %v1960
      %v1962 = vlaneseq
      %v1963 = vshrl.u32 %v1962, 7
      %v1964 = vsub.s32 %v1961, %v1963
      %v1965 = vrot.slane %v1943, %v1964
      %v1967 = vunpack.c.l.s4 1966171168
      %v1968 = vunpack.c.0.s8 %v1967
      %v1969 = vlaneseq
      %v1970 = vshrl.u32 %v1969, 7
      %v1971 = vsub.s32 %v1968, %v1970
      %v1972 = vrot.slane %v1944, %v1971
      %v1973 = vcombine.high %v1951, %v1951
      %v1974 = vcombine.high %v1958, %v1958
      %v1975 = vcombine.high %v1965, %v1965
      %v1976 = vcombine.high %v1972, %v1972
      %v1977 = vlaneseq
      %v1978 = vshrl.u32 %v1977, 7
      %v1979 = vsub.s32 0, %v1978
      %v1980 = vrot.slane %v1951, %v1979
      %v1981 = vlaneseq
      %v1982 = vshrl.u32 %v1981, 7
      %v1983 = vsub.s32 0, %v1982
      %v1984 = vrot.slane %v1965, %v1983
      %v1985 = vlaneseq
      %v1986 = vshrl.u32 %v1985, 7
      %v1987 = vsub.s32 0, %v1986
      %v1988 = vrot.slane %v1973, %v1987
      %v1989 = vlaneseq
      %v1990 = vshrl.u32 %v1989, 7
      %v1991 = vsub.s32 0, %v1990
      %v1992 = vrot.slane %v1975, %v1991
      %v1993 = vlaneseq
      %v1994 = vshrl.u32 %v1993, 7
      %v1995 = vsub.s32 0, %v1994
      %v1996 = vrot.slane %v1958, %v1995
      %v1997 = vlaneseq
      %v1998 = vshrl.u32 %v1997, 7
      %v1999 = vsub.s32 0, %v1998
      %v2000 = vrot.slane %v1972, %v1999
      %v2001 = vlaneseq
      %v2002 = vshrl.u32 %v2001, 7
      %v2003 = vsub.s32 0, %v2002
      %v2004 = vrot.slane %v1974, %v2003
      %v2005 = vlaneseq
      %v2006 = vshrl.u32 %v2005, 7
      %v2007 = vsub.s32 0, %v2006
      %v2008 = vrot.slane %v1976, %v2007
      %v2017 = vmul.f32 %v1980, %v818
      %v2018 = vmul.f32 %v1980, %v819
      %v2019 = vmul.f32 %v1984, %v818
      %v2020 = vmul.f32 %v1984, %v819
      %v2021 = vmul.f32 %v1988, %v818
      %v2022 = vmul.f32 %v1988, %v819
      %v2023 = vmul.f32 %v1992, %v818
      %v2024 = vmul.f32 %v1992, %v819
      %v2025 = vmul.f32 %v1996, %v818
      %v2026 = vmul.f32 %v1996, %v819
      %v2027 = vmul.f32 %v2000, %v818
      %v2028 = vmul.f32 %v2000, %v819
      %v2029 = vmul.f32 %v2004, %v818
      %v2030 = vmul.f32 %v2004, %v819
      %v2031 = vmul.f32 %v2008, %v818
      %v2032 = vmul.f32 %v2008, %v819
      %v2033 = vmul.f32 %v2017, 1.442695
      %v2034 = vpow.pop %v2033
      %v2035 = vmul.f32 %v2018, 1.442695
      %v2036 = vpow.pop %v2035
      %v2037 = vmul.f32 %v2019, 1.442695
      %v2038 = vpow.pop %v2037
      %v2039 = vmul.f32 %v2020, 1.442695
      %v2040 = vpow.pop %v2039
      %v2041 = vmul.f32 %v2021, 1.442695
      %v2042 = vpow.pop %v2041
      %v2043 = vmul.f32 %v2022, 1.442695
      %v2044 = vpow.pop %v2043
      %v2045 = vmul.f32 %v2023, 1.442695
      %v2046 = vpow.pop %v2045
      %v2047 = vmul.f32 %v2024, 1.442695
      %v2048 = vpow.pop %v2047
      %v2049 = vmul.f32 %v2025, 1.442695
      %v2050 = vpow.pop %v2049
      %v2051 = vmul.f32 %v2026, 1.442695
      %v2052 = vpow.pop %v2051
      %v2053 = vmul.f32 %v2027, 1.442695
      %v2054 = vpow.pop %v2053
      %v2055 = vmul.f32 %v2028, 1.442695
      %v2056 = vpow.pop %v2055
      %v2057 = vmul.f32 %v2029, 1.442695
      %v2058 = vpow.pop %v2057
      %v2059 = vmul.f32 %v2030, 1.442695
      %v2060 = vpow.pop %v2059
      %v2061 = vmul.f32 %v2031, 1.442695
      %v2062 = vpow.pop %v2061
      %v2063 = vmul.f32 %v2032, 1.442695
      %v2064 = vpow.pop %v2063
      %v2065 = vmul.f32 %v1922, %v1924
      %v2067 = vcombine.high %v2065, %v2065
      %v2069 = vunpack.c.l.s4 1966171168
      %v2070 = vunpack.c.0.s8 %v2069
      %v2071 = vlaneseq
      %v2072 = vshrl.u32 %v2071, 7
      %v2073 = vsub.s32 %v2070, %v2072
      %v2074 = vrot.slane %v2065, %v2073
      %v2076 = vunpack.c.l.s4 1966171168
      %v2077 = vunpack.c.0.s8 %v2076
      %v2078 = vlaneseq
      %v2079 = vshrl.u32 %v2078, 7
      %v2080 = vsub.s32 %v2077, %v2079
      %v2081 = vrot.slane %v2067, %v2080
      %v2082 = vcombine.high %v2074, %v2074
      %v2083 = vcombine.high %v2081, %v2081
      %v2085 = vunpack.c.l.s4 1966171168
      %v2086 = vunpack.c.0.s8 %v2085
      %v2087 = vlaneseq
      %v2088 = vshrl.u32 %v2087, 7
      %v2089 = vsub.s32 %v2086, %v2088
      %v2090 = vrot.slane %v2074, %v2089
      %v2092 = vunpack.c.l.s4 1966171168
      %v2093 = vunpack.c.0.s8 %v2092
      %v2094 = vlaneseq
      %v2095 = vshrl.u32 %v2094, 7
      %v2096 = vsub.s32 %v2093, %v2095
      %v2097 = vrot.slane %v2081, %v2096
      %v2099 = vunpack.c.l.s4 1966171168
      %v2100 = vunpack.c.0.s8 %v2099
      %v2101 = vlaneseq
      %v2102 = vshrl.u32 %v2101, 7
      %v2103 = vsub.s32 %v2100, %v2102
      %v2104 = vrot.slane %v2082, %v2103
      %v2106 = vunpack.c.l.s4 1966171168
      %v2107 = vunpack.c.0.s8 %v2106
      %v2108 = vlaneseq
      %v2109 = vshrl.u32 %v2108, 7
      %v2110 = vsub.s32 %v2107, %v2109
      %v2111 = vrot.slane %v2083, %v2110
      %v2112 = vcombine.high %v2090, %v2090
      %v2113 = vcombine.high %v2097, %v2097
      %v2114 = vcombine.high %v2104, %v2104
      %v2115 = vcombine.high %v2111, %v2111
      %v2116 = vlaneseq
      %v2117 = vshrl.u32 %v2116, 7
      %v2118 = vsub.s32 0, %v2117
      %v2119 = vrot.slane %v1926, %v2118
      %2121 = vbcast.lane.b32.xlu0 %v2119, 256
      %v2122 = vpop.permute.xlu0 %2121
      %s2124 = sor.u32 256, 8
      %2125 = vbcast.lane.b32.xlu0 %v2119, %s2124
      %v2126 = vpop.permute.xlu0 %2125
      %v2127 = vlaneseq
      %v2128 = vshrl.u32 %v2127, 7
      %v2129 = vsub.s32 1, %v2128
      %v2130 = vrot.slane %v1926, %v2129
      %2132 = vbcast.lane.b32.xlu0 %v2130, 256
      %v2133 = vpop.permute.xlu0 %2132
      %s2135 = sor.u32 256, 8
      %2136 = vbcast.lane.b32.xlu0 %v2130, %s2135
      %v2137 = vpop.permute.xlu0 %2136
      %v2138 = vlaneseq
      %v2139 = vshrl.u32 %v2138, 7
      %v2140 = vsub.s32 2, %v2139
      %v2141 = vrot.slane %v1926, %v2140
      %2143 = vbcast.lane.b32.xlu0 %v2141, 256
      %v2144 = vpop.permute.xlu0 %2143
      %s2146 = sor.u32 256, 8
      %2147 = vbcast.lane.b32.xlu0 %v2141, %s2146
      %v2148 = vpop.permute.xlu0 %2147
      %v2149 = vlaneseq
      %v2150 = vshrl.u32 %v2149, 7
      %v2151 = vsub.s32 3, %v2150
      %v2152 = vrot.slane %v1926, %v2151
      %2154 = vbcast.lane.b32.xlu0 %v2152, 256
      %v2155 = vpop.permute.xlu0 %2154
      %s2157 = sor.u32 256, 8
      %2158 = vbcast.lane.b32.xlu0 %v2152, %s2157
      %v2159 = vpop.permute.xlu0 %2158
      %v2160 = vlaneseq
      %v2161 = vshrl.u32 %v2160, 7
      %v2162 = vsub.s32 4, %v2161
      %v2163 = vrot.slane %v1926, %v2162
      %2165 = vbcast.lane.b32.xlu0 %v2163, 256
      %v2166 = vpop.permute.xlu0 %2165
      %s2168 = sor.u32 256, 8
      %2169 = vbcast.lane.b32.xlu0 %v2163, %s2168
      %v2170 = vpop.permute.xlu0 %2169
      %v2171 = vlaneseq
      %v2172 = vshrl.u32 %v2171, 7
      %v2173 = vsub.s32 5, %v2172
      %v2174 = vrot.slane %v1926, %v2173
      %2176 = vbcast.lane.b32.xlu0 %v2174, 256
      %v2177 = vpop.permute.xlu0 %2176
      %s2179 = sor.u32 256, 8
      %2180 = vbcast.lane.b32.xlu0 %v2174, %s2179
      %v2181 = vpop.permute.xlu0 %2180
      %v2182 = vlaneseq
      %v2183 = vshrl.u32 %v2182, 7
      %v2184 = vsub.s32 6, %v2183
      %v2185 = vrot.slane %v1926, %v2184
      %2187 = vbcast.lane.b32.xlu0 %v2185, 256
      %v2188 = vpop.permute.xlu0 %2187
      %s2190 = sor.u32 256, 8
      %2191 = vbcast.lane.b32.xlu0 %v2185, %s2190
      %v2192 = vpop.permute.xlu0 %2191
      %v2193 = vlaneseq
      %v2194 = vshrl.u32 %v2193, 7
      %v2195 = vsub.s32 7, %v2194
      %v2196 = vrot.slane %v1926, %v2195
      %2198 = vbcast.lane.b32.xlu0 %v2196, 256
      %v2199 = vpop.permute.xlu0 %2198
      %s2201 = sor.u32 256, 8
      %2202 = vbcast.lane.b32.xlu0 %v2196, %s2201
      %v2203 = vpop.permute.xlu0 %2202
      %v2204 = vlaneseq
      %v2205 = vshrl.u32 %v2204, 7
      %v2206 = vsub.s32 0, %v2205
      %v2207 = vrot.slane %v2090, %v2206
      %v2208 = vlaneseq
      %v2209 = vshrl.u32 %v2208, 7
      %v2210 = vsub.s32 0, %v2209
      %v2211 = vrot.slane %v2104, %v2210
      %v2212 = vlaneseq
      %v2213 = vshrl.u32 %v2212, 7
      %v2214 = vsub.s32 0, %v2213
      %v2215 = vrot.slane %v2112, %v2214
      %v2216 = vlaneseq
      %v2217 = vshrl.u32 %v2216, 7
      %v2218 = vsub.s32 0, %v2217
      %v2219 = vrot.slane %v2114, %v2218
      %v2220 = vlaneseq
      %v2221 = vshrl.u32 %v2220, 7
      %v2222 = vsub.s32 0, %v2221
      %v2223 = vrot.slane %v2097, %v2222
      %v2224 = vlaneseq
      %v2225 = vshrl.u32 %v2224, 7
      %v2226 = vsub.s32 0, %v2225
      %v2227 = vrot.slane %v2111, %v2226
      %v2228 = vlaneseq
      %v2229 = vshrl.u32 %v2228, 7
      %v2230 = vsub.s32 0, %v2229
      %v2231 = vrot.slane %v2113, %v2230
      %v2232 = vlaneseq
      %v2233 = vshrl.u32 %v2232, 7
      %v2234 = vsub.s32 0, %v2233
      %v2235 = vrot.slane %v2115, %v2234
      %v2244 = vmul.f32 %v2207, %v2122
      %v2245 = vmul.f32 %v2207, %v2126
      %v2246 = vmul.f32 %v2211, %v2133
      %v2247 = vmul.f32 %v2211, %v2137
      %v2248 = vmul.f32 %v2215, %v2144
      %v2249 = vmul.f32 %v2215, %v2148
      %v2250 = vmul.f32 %v2219, %v2155
      %v2251 = vmul.f32 %v2219, %v2159
      %v2252 = vmul.f32 %v2223, %v2166
      %v2253 = vmul.f32 %v2223, %v2170
      %v2254 = vmul.f32 %v2227, %v2177
      %v2255 = vmul.f32 %v2227, %v2181
      %v2256 = vmul.f32 %v2231, %v2188
      %v2257 = vmul.f32 %v2231, %v2192
      %v2258 = vmul.f32 %v2235, %v2199
      %v2259 = vmul.f32 %v2235, %v2203
      %v2260 = vmul.f32 %v2034, %v1735
      %v2261 = vmul.f32 %v2036, %v1736
      %v2262 = vmul.f32 %v2038, %v1737
      %v2263 = vmul.f32 %v2040, %v1738
      %v2264 = vmul.f32 %v2042, %v1739
      %v2265 = vmul.f32 %v2044, %v1740
      %v2266 = vmul.f32 %v2046, %v1741
      %v2267 = vmul.f32 %v2048, %v1742
      %v2268 = vmul.f32 %v2050, %v1743
      %v2269 = vmul.f32 %v2052, %v1744
      %v2270 = vmul.f32 %v2054, %v1745
      %v2271 = vmul.f32 %v2056, %v1746
      %v2272 = vmul.f32 %v2058, %v1747
      %v2273 = vmul.f32 %v2060, %v1748
      %v2274 = vmul.f32 %v2062, %v1749
      %v2275 = vmul.f32 %v2064, %v1750
      %v2276 = vadd.f32 %v2260, %v2244
      %v2277 = vadd.f32 %v2261, %v2245
      %v2278 = vadd.f32 %v2262, %v2246
      %v2279 = vadd.f32 %v2263, %v2247
      %v2280 = vadd.f32 %v2264, %v2248
      %v2281 = vadd.f32 %v2265, %v2249
      %v2282 = vadd.f32 %v2266, %v2250
      %v2283 = vadd.f32 %v2267, %v2251
      %v2284 = vadd.f32 %v2268, %v2252
      %v2285 = vadd.f32 %v2269, %v2253
      %v2286 = vadd.f32 %v2270, %v2254
      %v2287 = vadd.f32 %v2271, %v2255
      %v2288 = vadd.f32 %v2272, %v2256
      %v2289 = vadd.f32 %v2273, %v2257
      %v2290 = vadd.f32 %v2274, %v2258
      %v2291 = vadd.f32 %v2275, %v2259
      %s2293 = sor.u32 256, 16
      %2294 = vbcast.lane.b32.xlu0 %v2119, %s2293
      %v2295 = vpop.permute.xlu0 %2294
      %s2297 = sor.u32 256, 24
      %2298 = vbcast.lane.b32.xlu0 %v2119, %s2297
      %v2299 = vpop.permute.xlu0 %2298
      %s2301 = sor.u32 256, 16
      %2302 = vbcast.lane.b32.xlu0 %v2130, %s2301
      %v2303 = vpop.permute.xlu0 %2302
      %s2305 = sor.u32 256, 24
      %2306 = vbcast.lane.b32.xlu0 %v2130, %s2305
      %v2307 = vpop.permute.xlu0 %2306
      %s2309 = sor.u32 256, 16
      %2310 = vbcast.lane.b32.xlu0 %v2141, %s2309
      %v2311 = vpop.permute.xlu0 %2310
      %s2313 = sor.u32 256, 24
      %2314 = vbcast.lane.b32.xlu0 %v2141, %s2313
      %v2315 = vpop.permute.xlu0 %2314
      %s2317 = sor.u32 256, 16
      %2318 = vbcast.lane.b32.xlu0 %v2152, %s2317
      %v2319 = vpop.permute.xlu0 %2318
      %s2321 = sor.u32 256, 24
      %2322 = vbcast.lane.b32.xlu0 %v2152, %s2321
      %v2323 = vpop.permute.xlu0 %2322
      %s2325 = sor.u32 256, 16
      %2326 = vbcast.lane.b32.xlu0 %v2163, %s2325
      %v2327 = vpop.permute.xlu0 %2326
      %s2329 = sor.u32 256, 24
      %2330 = vbcast.lane.b32.xlu0 %v2163, %s2329
      %v2331 = vpop.permute.xlu0 %2330
      %s2333 = sor.u32 256, 16
      %2334 = vbcast.lane.b32.xlu0 %v2174, %s2333
      %v2335 = vpop.permute.xlu0 %2334
      %s2337 = sor.u32 256, 24
      %2338 = vbcast.lane.b32.xlu0 %v2174, %s2337
      %v2339 = vpop.permute.xlu0 %2338
      %s2341 = sor.u32 256, 16
      %2342 = vbcast.lane.b32.xlu0 %v2185, %s2341
      %v2343 = vpop.permute.xlu0 %2342
      %s2345 = sor.u32 256, 24
      %2346 = vbcast.lane.b32.xlu0 %v2185, %s2345
      %v2347 = vpop.permute.xlu0 %2346
      %s2349 = sor.u32 256, 16
      %2350 = vbcast.lane.b32.xlu0 %v2196, %s2349
      %v2351 = vpop.permute.xlu0 %2350
      %s2353 = sor.u32 256, 24
      %2354 = vbcast.lane.b32.xlu0 %v2196, %s2353
      %v2355 = vpop.permute.xlu0 %2354
      %v2356 = vmul.f32 %v2276, %v2295
      %v2357 = vmul.f32 %v2277, %v2299
      %v2358 = vmul.f32 %v2278, %v2303
      %v2359 = vmul.f32 %v2279, %v2307
      %v2360 = vmul.f32 %v2280, %v2311
      %v2361 = vmul.f32 %v2281, %v2315
      %v2362 = vmul.f32 %v2282, %v2319
      %v2363 = vmul.f32 %v2283, %v2323
      %v2364 = vmul.f32 %v2284, %v2327
      %v2365 = vmul.f32 %v2285, %v2331
      %v2366 = vmul.f32 %v2286, %v2335
      %v2367 = vmul.f32 %v2287, %v2339
      %v2368 = vmul.f32 %v2288, %v2343
      %v2369 = vmul.f32 %v2289, %v2347
      %v2370 = vmul.f32 %v2290, %v2351
      %v2371 = vmul.f32 %v2291, %v2355
      %v2372 = vsel %vm513, %v2356, 0.0
      %v2373 = vsel %vm513, %v2357, 0.0
      %v2374 = vadd.f32 %v2372, %v2373
      %v2375 = vrot.slane %v2374, 4
      %v2376 = vadd.f32 %v2374, %v2375
      %v2377 = vrot.slane %v2376, 2
      %v2378 = vadd.f32 %v2376, %v2377
      %v2379 = vrot.slane %v2378, 1
      %v2380 = vadd.f32 %v2378, %v2379
      %v2381 = vsel %vm513, %v2358, 0.0
      %v2382 = vsel %vm513, %v2359, 0.0
      %v2383 = vadd.f32 %v2381, %v2382
      %v2384 = vrot.slane %v2383, 4
      %v2385 = vadd.f32 %v2383, %v2384
      %v2386 = vrot.slane %v2385, 2
      %v2387 = vadd.f32 %v2385, %v2386
      %v2388 = vrot.slane %v2387, 1
      %v2389 = vadd.f32 %v2387, %v2388
      %v2390 = vsel %vm513, %v2360, 0.0
      %v2391 = vsel %vm513, %v2361, 0.0
      %v2392 = vadd.f32 %v2390, %v2391
      %v2393 = vrot.slane %v2392, 4
      %v2394 = vadd.f32 %v2392, %v2393
      %v2395 = vrot.slane %v2394, 2
      %v2396 = vadd.f32 %v2394, %v2395
      %v2397 = vrot.slane %v2396, 1
      %v2398 = vadd.f32 %v2396, %v2397
      %v2399 = vsel %vm513, %v2362, 0.0
      %v2400 = vsel %vm513, %v2363, 0.0
      %v2401 = vadd.f32 %v2399, %v2400
      %v2402 = vrot.slane %v2401, 4
      %v2403 = vadd.f32 %v2401, %v2402
      %v2404 = vrot.slane %v2403, 2
      %v2405 = vadd.f32 %v2403, %v2404
      %v2406 = vrot.slane %v2405, 1
      %v2407 = vadd.f32 %v2405, %v2406
      %v2408 = vsel %vm513, %v2364, 0.0
      %v2409 = vsel %vm513, %v2365, 0.0
      %v2410 = vadd.f32 %v2408, %v2409
      %v2411 = vrot.slane %v2410, 4
      %v2412 = vadd.f32 %v2410, %v2411
      %v2413 = vrot.slane %v2412, 2
      %v2414 = vadd.f32 %v2412, %v2413
      %v2415 = vrot.slane %v2414, 1
      %v2416 = vadd.f32 %v2414, %v2415
      %v2417 = vsel %vm513, %v2366, 0.0
      %v2418 = vsel %vm513, %v2367, 0.0
      %v2419 = vadd.f32 %v2417, %v2418
      %v2420 = vrot.slane %v2419, 4
      %v2421 = vadd.f32 %v2419, %v2420
      %v2422 = vrot.slane %v2421, 2
      %v2423 = vadd.f32 %v2421, %v2422
      %v2424 = vrot.slane %v2423, 1
      %v2425 = vadd.f32 %v2423, %v2424
      %v2426 = vsel %vm513, %v2368, 0.0
      %v2427 = vsel %vm513, %v2369, 0.0
      %v2428 = vadd.f32 %v2426, %v2427
      %v2429 = vrot.slane %v2428, 4
      %v2430 = vadd.f32 %v2428, %v2429
      %v2431 = vrot.slane %v2430, 2
      %v2432 = vadd.f32 %v2430, %v2431
      %v2433 = vrot.slane %v2432, 1
      %v2434 = vadd.f32 %v2432, %v2433
      %v2435 = vsel %vm513, %v2370, 0.0
      %v2436 = vsel %vm513, %v2371, 0.0
      %v2437 = vadd.f32 %v2435, %v2436
      %v2438 = vrot.slane %v2437, 4
      %v2439 = vadd.f32 %v2437, %v2438
      %v2440 = vrot.slane %v2439, 2
      %v2441 = vadd.f32 %v2439, %v2440
      %v2442 = vrot.slane %v2441, 1
      %v2443 = vadd.f32 %v2441, %v2442
      %v2452 = vsel %vm1364, %v2389, %v2380
      %v2453 = vsel %vm1366, %v2398, %v2452
      %v2454 = vsel %vm1368, %v2407, %v2453
      %v2455 = vsel %vm1370, %v2416, %v2454
      %v2456 = vsel %vm1372, %v2425, %v2455
      %v2457 = vsel %vm1374, %v2434, %v2456
      %v2458 = vsel %vm1376, %v2443, %v2457
      %s2460 = scalar_lea.vmem [#allocation8], 16
      %2461 = vst.msk [vmem:[%s2460] sm:$0xff] %vm513, %v2458
      %s2462 = scalar_lea.vmem [#allocation5], 24
      %v2463 = vld [vmem:[%s2462] sm:$0xff]
      %s2464 = scalar_lea.vmem [#allocation6], 24
      %v2465 = vld [vmem:[%s2464] sm:$0xff]
      %s2466 = scalar_lea.vmem [#allocation7], 24
      %v2467 = vld [vmem:[%s2466] sm:$0xff]
      %v2469 = vcombine.high %v2463, %v2463
      %v2471 = vunpack.c.l.s4 1966171168
      %v2472 = vunpack.c.0.s8 %v2471
      %v2473 = vlaneseq
      %v2474 = vshrl.u32 %v2473, 7
      %v2475 = vsub.s32 %v2472, %v2474
      %v2476 = vrot.slane %v2463, %v2475
      %v2478 = vunpack.c.l.s4 1966171168
      %v2479 = vunpack.c.0.s8 %v2478
      %v2480 = vlaneseq
      %v2481 = vshrl.u32 %v2480, 7
      %v2482 = vsub.s32 %v2479, %v2481
      %v2483 = vrot.slane %v2469, %v2482
      %v2484 = vcombine.high %v2476, %v2476
      %v2485 = vcombine.high %v2483, %v2483
      %v2487 = vunpack.c.l.s4 1966171168
      %v2488 = vunpack.c.0.s8 %v2487
      %v2489 = vlaneseq
      %v2490 = vshrl.u32 %v2489, 7
      %v2491 = vsub.s32 %v2488, %v2490
      %v2492 = vrot.slane %v2476, %v2491
      %v2494 = vunpack.c.l.s4 1966171168
      %v2495 = vunpack.c.0.s8 %v2494
      %v2496 = vlaneseq
      %v2497 = vshrl.u32 %v2496, 7
      %v2498 = vsub.s32 %v2495, %v2497
      %v2499 = vrot.slane %v2483, %v2498
      %v2501 = vunpack.c.l.s4 1966171168
      %v2502 = vunpack.c.0.s8 %v2501
      %v2503 = vlaneseq
      %v2504 = vshrl.u32 %v2503, 7
      %v2505 = vsub.s32 %v2502, %v2504
      %v2506 = vrot.slane %v2484, %v2505
      %v2508 = vunpack.c.l.s4 1966171168
      %v2509 = vunpack.c.0.s8 %v2508
      %v2510 = vlaneseq
      %v2511 = vshrl.u32 %v2510, 7
      %v2512 = vsub.s32 %v2509, %v2511
      %v2513 = vrot.slane %v2485, %v2512
      %v2514 = vcombine.high %v2492, %v2492
      %v2515 = vcombine.high %v2499, %v2499
      %v2516 = vcombine.high %v2506, %v2506
      %v2517 = vcombine.high %v2513, %v2513
      %v2518 = vlaneseq
      %v2519 = vshrl.u32 %v2518, 7
      %v2520 = vsub.s32 0, %v2519
      %v2521 = vrot.slane %v2492, %v2520
      %v2522 = vlaneseq
      %v2523 = vshrl.u32 %v2522, 7
      %v2524 = vsub.s32 0, %v2523
      %v2525 = vrot.slane %v2506, %v2524
      %v2526 = vlaneseq
      %v2527 = vshrl.u32 %v2526, 7
      %v2528 = vsub.s32 0, %v2527
      %v2529 = vrot.slane %v2514, %v2528
      %v2530 = vlaneseq
      %v2531 = vshrl.u32 %v2530, 7
      %v2532 = vsub.s32 0, %v2531
      %v2533 = vrot.slane %v2516, %v2532
      %v2534 = vlaneseq
      %v2535 = vshrl.u32 %v2534, 7
      %v2536 = vsub.s32 0, %v2535
      %v2537 = vrot.slane %v2499, %v2536
      %v2538 = vlaneseq
      %v2539 = vshrl.u32 %v2538, 7
      %v2540 = vsub.s32 0, %v2539
      %v2541 = vrot.slane %v2513, %v2540
      %v2542 = vlaneseq
      %v2543 = vshrl.u32 %v2542, 7
      %v2544 = vsub.s32 0, %v2543
      %v2545 = vrot.slane %v2515, %v2544
      %v2546 = vlaneseq
      %v2547 = vshrl.u32 %v2546, 7
      %v2548 = vsub.s32 0, %v2547
      %v2549 = vrot.slane %v2517, %v2548
      %v2558 = vmul.f32 %v2521, %v818
      %v2559 = vmul.f32 %v2521, %v819
      %v2560 = vmul.f32 %v2525, %v818
      %v2561 = vmul.f32 %v2525, %v819
      %v2562 = vmul.f32 %v2529, %v818
      %v2563 = vmul.f32 %v2529, %v819
      %v2564 = vmul.f32 %v2533, %v818
      %v2565 = vmul.f32 %v2533, %v819
      %v2566 = vmul.f32 %v2537, %v818
      %v2567 = vmul.f32 %v2537, %v819
      %v2568 = vmul.f32 %v2541, %v818
      %v2569 = vmul.f32 %v2541, %v819
      %v2570 = vmul.f32 %v2545, %v818
      %v2571 = vmul.f32 %v2545, %v819
      %v2572 = vmul.f32 %v2549, %v818
      %v2573 = vmul.f32 %v2549, %v819
      %v2574 = vmul.f32 %v2558, 1.442695
      %v2575 = vpow.pop %v2574
      %v2576 = vmul.f32 %v2559, 1.442695
      %v2577 = vpow.pop %v2576
      %v2578 = vmul.f32 %v2560, 1.442695
      %v2579 = vpow.pop %v2578
      %v2580 = vmul.f32 %v2561, 1.442695
      %v2581 = vpow.pop %v2580
      %v2582 = vmul.f32 %v2562, 1.442695
      %v2583 = vpow.pop %v2582
      %v2584 = vmul.f32 %v2563, 1.442695
      %v2585 = vpow.pop %v2584
      %v2586 = vmul.f32 %v2564, 1.442695
      %v2587 = vpow.pop %v2586
      %v2588 = vmul.f32 %v2565, 1.442695
      %v2589 = vpow.pop %v2588
      %v2590 = vmul.f32 %v2566, 1.442695
      %v2591 = vpow.pop %v2590
      %v2592 = vmul.f32 %v2567, 1.442695
      %v2593 = vpow.pop %v2592
      %v2594 = vmul.f32 %v2568, 1.442695
      %v2595 = vpow.pop %v2594
      %v2596 = vmul.f32 %v2569, 1.442695
      %v2597 = vpow.pop %v2596
      %v2598 = vmul.f32 %v2570, 1.442695
      %v2599 = vpow.pop %v2598
      %v2600 = vmul.f32 %v2571, 1.442695
      %v2601 = vpow.pop %v2600
      %v2602 = vmul.f32 %v2572, 1.442695
      %v2603 = vpow.pop %v2602
      %v2604 = vmul.f32 %v2573, 1.442695
      %v2605 = vpow.pop %v2604
      %v2606 = vmul.f32 %v2463, %v2465
      %v2608 = vcombine.high %v2606, %v2606
      %v2610 = vunpack.c.l.s4 1966171168
      %v2611 = vunpack.c.0.s8 %v2610
      %v2612 = vlaneseq
      %v2613 = vshrl.u32 %v2612, 7
      %v2614 = vsub.s32 %v2611, %v2613
      %v2615 = vrot.slane %v2606, %v2614
      %v2617 = vunpack.c.l.s4 1966171168
      %v2618 = vunpack.c.0.s8 %v2617
      %v2619 = vlaneseq
      %v2620 = vshrl.u32 %v2619, 7
      %v2621 = vsub.s32 %v2618, %v2620
      %v2622 = vrot.slane %v2608, %v2621
      %v2623 = vcombine.high %v2615, %v2615
      %v2624 = vcombine.high %v2622, %v2622
      %v2626 = vunpack.c.l.s4 1966171168
      %v2627 = vunpack.c.0.s8 %v2626
      %v2628 = vlaneseq
      %v2629 = vshrl.u32 %v2628, 7
      %v2630 = vsub.s32 %v2627, %v2629
      %v2631 = vrot.slane %v2615, %v2630
      %v2633 = vunpack.c.l.s4 1966171168
      %v2634 = vunpack.c.0.s8 %v2633
      %v2635 = vlaneseq
      %v2636 = vshrl.u32 %v2635, 7
      %v2637 = vsub.s32 %v2634, %v2636
      %v2638 = vrot.slane %v2622, %v2637
      %v2640 = vunpack.c.l.s4 1966171168
      %v2641 = vunpack.c.0.s8 %v2640
      %v2642 = vlaneseq
      %v2643 = vshrl.u32 %v2642, 7
      %v2644 = vsub.s32 %v2641, %v2643
      %v2645 = vrot.slane %v2623, %v2644
      %v2647 = vunpack.c.l.s4 1966171168
      %v2648 = vunpack.c.0.s8 %v2647
      %v2649 = vlaneseq
      %v2650 = vshrl.u32 %v2649, 7
      %v2651 = vsub.s32 %v2648, %v2650
      %v2652 = vrot.slane %v2624, %v2651
      %v2653 = vcombine.high %v2631, %v2631
      %v2654 = vcombine.high %v2638, %v2638
      %v2655 = vcombine.high %v2645, %v2645
      %v2656 = vcombine.high %v2652, %v2652
      %v2657 = vlaneseq
      %v2658 = vshrl.u32 %v2657, 7
      %v2659 = vsub.s32 0, %v2658
      %v2660 = vrot.slane %v2467, %v2659
      %2662 = vbcast.lane.b32.xlu0 %v2660, 256
      %v2663 = vpop.permute.xlu0 %2662
      %s2665 = sor.u32 256, 8
      %2666 = vbcast.lane.b32.xlu0 %v2660, %s2665
      %v2667 = vpop.permute.xlu0 %2666
      %v2668 = vlaneseq
      %v2669 = vshrl.u32 %v2668, 7
      %v2670 = vsub.s32 1, %v2669
      %v2671 = vrot.slane %v2467, %v2670
      %2673 = vbcast.lane.b32.xlu0 %v2671, 256
      %v2674 = vpop.permute.xlu0 %2673
      %s2676 = sor.u32 256, 8
      %2677 = vbcast.lane.b32.xlu0 %v2671, %s2676
      %v2678 = vpop.permute.xlu0 %2677
      %v2679 = vlaneseq
      %v2680 = vshrl.u32 %v2679, 7
      %v2681 = vsub.s32 2, %v2680
      %v2682 = vrot.slane %v2467, %v2681
      %2684 = vbcast.lane.b32.xlu0 %v2682, 256
      %v2685 = vpop.permute.xlu0 %2684
      %s2687 = sor.u32 256, 8
      %2688 = vbcast.lane.b32.xlu0 %v2682, %s2687
      %v2689 = vpop.permute.xlu0 %2688
      %v2690 = vlaneseq
      %v2691 = vshrl.u32 %v2690, 7
      %v2692 = vsub.s32 3, %v2691
      %v2693 = vrot.slane %v2467, %v2692
      %2695 = vbcast.lane.b32.xlu0 %v2693, 256
      %v2696 = vpop.permute.xlu0 %2695
      %s2698 = sor.u32 256, 8
      %2699 = vbcast.lane.b32.xlu0 %v2693, %s2698
      %v2700 = vpop.permute.xlu0 %2699
      %v2701 = vlaneseq
      %v2702 = vshrl.u32 %v2701, 7
      %v2703 = vsub.s32 4, %v2702
      %v2704 = vrot.slane %v2467, %v2703
      %2706 = vbcast.lane.b32.xlu0 %v2704, 256
      %v2707 = vpop.permute.xlu0 %2706
      %s2709 = sor.u32 256, 8
      %2710 = vbcast.lane.b32.xlu0 %v2704, %s2709
      %v2711 = vpop.permute.xlu0 %2710
      %v2712 = vlaneseq
      %v2713 = vshrl.u32 %v2712, 7
      %v2714 = vsub.s32 5, %v2713
      %v2715 = vrot.slane %v2467, %v2714
      %2717 = vbcast.lane.b32.xlu0 %v2715, 256
      %v2718 = vpop.permute.xlu0 %2717
      %s2720 = sor.u32 256, 8
      %2721 = vbcast.lane.b32.xlu0 %v2715, %s2720
      %v2722 = vpop.permute.xlu0 %2721
      %v2723 = vlaneseq
      %v2724 = vshrl.u32 %v2723, 7
      %v2725 = vsub.s32 6, %v2724
      %v2726 = vrot.slane %v2467, %v2725
      %2728 = vbcast.lane.b32.xlu0 %v2726, 256
      %v2729 = vpop.permute.xlu0 %2728
      %s2731 = sor.u32 256, 8
      %2732 = vbcast.lane.b32.xlu0 %v2726, %s2731
      %v2733 = vpop.permute.xlu0 %2732
      %v2734 = vlaneseq
      %v2735 = vshrl.u32 %v2734, 7
      %v2736 = vsub.s32 7, %v2735
      %v2737 = vrot.slane %v2467, %v2736
      %2739 = vbcast.lane.b32.xlu0 %v2737, 256
      %v2740 = vpop.permute.xlu0 %2739
      %s2742 = sor.u32 256, 8
      %2743 = vbcast.lane.b32.xlu0 %v2737, %s2742
      %v2744 = vpop.permute.xlu0 %2743
      %v2745 = vlaneseq
      %v2746 = vshrl.u32 %v2745, 7
      %v2747 = vsub.s32 0, %v2746
      %v2748 = vrot.slane %v2631, %v2747
      %v2749 = vlaneseq
      %v2750 = vshrl.u32 %v2749, 7
      %v2751 = vsub.s32 0, %v2750
      %v2752 = vrot.slane %v2645, %v2751
      %v2753 = vlaneseq
      %v2754 = vshrl.u32 %v2753, 7
      %v2755 = vsub.s32 0, %v2754
      %v2756 = vrot.slane %v2653, %v2755
      %v2757 = vlaneseq
      %v2758 = vshrl.u32 %v2757, 7
      %v2759 = vsub.s32 0, %v2758
      %v2760 = vrot.slane %v2655, %v2759
      %v2761 = vlaneseq
      %v2762 = vshrl.u32 %v2761, 7
      %v2763 = vsub.s32 0, %v2762
      %v2764 = vrot.slane %v2638, %v2763
      %v2765 = vlaneseq
      %v2766 = vshrl.u32 %v2765, 7
      %v2767 = vsub.s32 0, %v2766
      %v2768 = vrot.slane %v2652, %v2767
      %v2769 = vlaneseq
      %v2770 = vshrl.u32 %v2769, 7
      %v2771 = vsub.s32 0, %v2770
      %v2772 = vrot.slane %v2654, %v2771
      %v2773 = vlaneseq
      %v2774 = vshrl.u32 %v2773, 7
      %v2775 = vsub.s32 0, %v2774
      %v2776 = vrot.slane %v2656, %v2775
      %v2785 = vmul.f32 %v2748, %v2663
      %v2786 = vmul.f32 %v2748, %v2667
      %v2787 = vmul.f32 %v2752, %v2674
      %v2788 = vmul.f32 %v2752, %v2678
      %v2789 = vmul.f32 %v2756, %v2685
      %v2790 = vmul.f32 %v2756, %v2689
      %v2791 = vmul.f32 %v2760, %v2696
      %v2792 = vmul.f32 %v2760, %v2700
      %v2793 = vmul.f32 %v2764, %v2707
      %v2794 = vmul.f32 %v2764, %v2711
      %v2795 = vmul.f32 %v2768, %v2718
      %v2796 = vmul.f32 %v2768, %v2722
      %v2797 = vmul.f32 %v2772, %v2729
      %v2798 = vmul.f32 %v2772, %v2733
      %v2799 = vmul.f32 %v2776, %v2740
      %v2800 = vmul.f32 %v2776, %v2744
      %v2801 = vmul.f32 %v2575, %v2276
      %v2802 = vmul.f32 %v2577, %v2277
      %v2803 = vmul.f32 %v2579, %v2278
      %v2804 = vmul.f32 %v2581, %v2279
      %v2805 = vmul.f32 %v2583, %v2280
      %v2806 = vmul.f32 %v2585, %v2281
      %v2807 = vmul.f32 %v2587, %v2282
      %v2808 = vmul.f32 %v2589, %v2283
      %v2809 = vmul.f32 %v2591, %v2284
      %v2810 = vmul.f32 %v2593, %v2285
      %v2811 = vmul.f32 %v2595, %v2286
      %v2812 = vmul.f32 %v2597, %v2287
      %v2813 = vmul.f32 %v2599, %v2288
      %v2814 = vmul.f32 %v2601, %v2289
      %v2815 = vmul.f32 %v2603, %v2290
      %v2816 = vmul.f32 %v2605, %v2291
      %v2817 = vadd.f32 %v2801, %v2785
      %v2818 = vadd.f32 %v2802, %v2786
      %v2819 = vadd.f32 %v2803, %v2787
      %v2820 = vadd.f32 %v2804, %v2788
      %v2821 = vadd.f32 %v2805, %v2789
      %v2822 = vadd.f32 %v2806, %v2790
      %v2823 = vadd.f32 %v2807, %v2791
      %v2824 = vadd.f32 %v2808, %v2792
      %v2825 = vadd.f32 %v2809, %v2793
      %v2826 = vadd.f32 %v2810, %v2794
      %v2827 = vadd.f32 %v2811, %v2795
      %v2828 = vadd.f32 %v2812, %v2796
      %v2829 = vadd.f32 %v2813, %v2797
      %v2830 = vadd.f32 %v2814, %v2798
      %v2831 = vadd.f32 %v2815, %v2799
      %v2832 = vadd.f32 %v2816, %v2800
      %s2834 = sor.u32 256, 16
      %2835 = vbcast.lane.b32.xlu0 %v2660, %s2834
      %v2836 = vpop.permute.xlu0 %2835
      %s2838 = sor.u32 256, 24
      %2839 = vbcast.lane.b32.xlu0 %v2660, %s2838
      %v2840 = vpop.permute.xlu0 %2839
      %s2842 = sor.u32 256, 16
      %2843 = vbcast.lane.b32.xlu0 %v2671, %s2842
      %v2844 = vpop.permute.xlu0 %2843
      %s2846 = sor.u32 256, 24
      %2847 = vbcast.lane.b32.xlu0 %v2671, %s2846
      %v2848 = vpop.permute.xlu0 %2847
      %s2850 = sor.u32 256, 16
      %2851 = vbcast.lane.b32.xlu0 %v2682, %s2850
      %v2852 = vpop.permute.xlu0 %2851
      %s2854 = sor.u32 256, 24
      %2855 = vbcast.lane.b32.xlu0 %v2682, %s2854
      %v2856 = vpop.permute.xlu0 %2855
      %s2858 = sor.u32 256, 16
      %2859 = vbcast.lane.b32.xlu0 %v2693, %s2858
      %v2860 = vpop.permute.xlu0 %2859
      %s2862 = sor.u32 256, 24
      %2863 = vbcast.lane.b32.xlu0 %v2693, %s2862
      %v2864 = vpop.permute.xlu0 %2863
      %s2866 = sor.u32 256, 16
      %2867 = vbcast.lane.b32.xlu0 %v2704, %s2866
      %v2868 = vpop.permute.xlu0 %2867
      %s2870 = sor.u32 256, 24
      %2871 = vbcast.lane.b32.xlu0 %v2704, %s2870
      %v2872 = vpop.permute.xlu0 %2871
      %s2874 = sor.u32 256, 16
      %2875 = vbcast.lane.b32.xlu0 %v2715, %s2874
      %v2876 = vpop.permute.xlu0 %2875
      %s2878 = sor.u32 256, 24
      %2879 = vbcast.lane.b32.xlu0 %v2715, %s2878
      %v2880 = vpop.permute.xlu0 %2879
      %s2882 = sor.u32 256, 16
      %2883 = vbcast.lane.b32.xlu0 %v2726, %s2882
      %v2884 = vpop.permute.xlu0 %2883
      %s2886 = sor.u32 256, 24
      %2887 = vbcast.lane.b32.xlu0 %v2726, %s2886
      %v2888 = vpop.permute.xlu0 %2887
      %s2890 = sor.u32 256, 16
      %2891 = vbcast.lane.b32.xlu0 %v2737, %s2890
      %v2892 = vpop.permute.xlu0 %2891
      %s2894 = sor.u32 256, 24
      %2895 = vbcast.lane.b32.xlu0 %v2737, %s2894
      %v2896 = vpop.permute.xlu0 %2895
      %v2897 = vmul.f32 %v2817, %v2836
      %v2898 = vmul.f32 %v2818, %v2840
      %v2899 = vmul.f32 %v2819, %v2844
      %v2900 = vmul.f32 %v2820, %v2848
      %v2901 = vmul.f32 %v2821, %v2852
      %v2902 = vmul.f32 %v2822, %v2856
      %v2903 = vmul.f32 %v2823, %v2860
      %v2904 = vmul.f32 %v2824, %v2864
      %v2905 = vmul.f32 %v2825, %v2868
      %v2906 = vmul.f32 %v2826, %v2872
      %v2907 = vmul.f32 %v2827, %v2876
      %v2908 = vmul.f32 %v2828, %v2880
      %v2909 = vmul.f32 %v2829, %v2884
      %v2910 = vmul.f32 %v2830, %v2888
      %v2911 = vmul.f32 %v2831, %v2892
      %v2912 = vmul.f32 %v2832, %v2896
      %v2913 = vsel %vm513, %v2897, 0.0
      %v2914 = vsel %vm513, %v2898, 0.0
      %v2915 = vadd.f32 %v2913, %v2914
      %v2916 = vrot.slane %v2915, 4
      %v2917 = vadd.f32 %v2915, %v2916
      %v2918 = vrot.slane %v2917, 2
      %v2919 = vadd.f32 %v2917, %v2918
      %v2920 = vrot.slane %v2919, 1
      %v2921 = vadd.f32 %v2919, %v2920
      %v2922 = vsel %vm513, %v2899, 0.0
      %v2923 = vsel %vm513, %v2900, 0.0
      %v2924 = vadd.f32 %v2922, %v2923
      %v2925 = vrot.slane %v2924, 4
      %v2926 = vadd.f32 %v2924, %v2925
      %v2927 = vrot.slane %v2926, 2
      %v2928 = vadd.f32 %v2926, %v2927
      %v2929 = vrot.slane %v2928, 1
      %v2930 = vadd.f32 %v2928, %v2929
      %v2931 = vsel %vm513, %v2901, 0.0
      %v2932 = vsel %vm513, %v2902, 0.0
      %v2933 = vadd.f32 %v2931, %v2932
      %v2934 = vrot.slane %v2933, 4
      %v2935 = vadd.f32 %v2933, %v2934
      %v2936 = vrot.slane %v2935, 2
      %v2937 = vadd.f32 %v2935, %v2936
      %v2938 = vrot.slane %v2937, 1
      %v2939 = vadd.f32 %v2937, %v2938
      %v2940 = vsel %vm513, %v2903, 0.0
      %v2941 = vsel %vm513, %v2904, 0.0
      %v2942 = vadd.f32 %v2940, %v2941
      %v2943 = vrot.slane %v2942, 4
      %v2944 = vadd.f32 %v2942, %v2943
      %v2945 = vrot.slane %v2944, 2
      %v2946 = vadd.f32 %v2944, %v2945
      %v2947 = vrot.slane %v2946, 1
      %v2948 = vadd.f32 %v2946, %v2947
      %v2949 = vsel %vm513, %v2905, 0.0
      %v2950 = vsel %vm513, %v2906, 0.0
      %v2951 = vadd.f32 %v2949, %v2950
      %v2952 = vrot.slane %v2951, 4
      %v2953 = vadd.f32 %v2951, %v2952
      %v2954 = vrot.slane %v2953, 2
      %v2955 = vadd.f32 %v2953, %v2954
      %v2956 = vrot.slane %v2955, 1
      %v2957 = vadd.f32 %v2955, %v2956
      %v2958 = vsel %vm513, %v2907, 0.0
      %v2959 = vsel %vm513, %v2908, 0.0
      %v2960 = vadd.f32 %v2958, %v2959
      %v2961 = vrot.slane %v2960, 4
      %v2962 = vadd.f32 %v2960, %v2961
      %v2963 = vrot.slane %v2962, 2
      %v2964 = vadd.f32 %v2962, %v2963
      %v2965 = vrot.slane %v2964, 1
      %v2966 = vadd.f32 %v2964, %v2965
      %v2967 = vsel %vm513, %v2909, 0.0
      %v2968 = vsel %vm513, %v2910, 0.0
      %v2969 = vadd.f32 %v2967, %v2968
      %v2970 = vrot.slane %v2969, 4
      %v2971 = vadd.f32 %v2969, %v2970
      %v2972 = vrot.slane %v2971, 2
      %v2973 = vadd.f32 %v2971, %v2972
      %v2974 = vrot.slane %v2973, 1
      %v2975 = vadd.f32 %v2973, %v2974
      %v2976 = vsel %vm513, %v2911, 0.0
      %v2977 = vsel %vm513, %v2912, 0.0
      %v2978 = vadd.f32 %v2976, %v2977
      %v2979 = vrot.slane %v2978, 4
      %v2980 = vadd.f32 %v2978, %v2979
      %v2981 = vrot.slane %v2980, 2
      %v2982 = vadd.f32 %v2980, %v2981
      %v2983 = vrot.slane %v2982, 1
      %v2984 = vadd.f32 %v2982, %v2983
      %v2993 = vsel %vm1364, %v2930, %v2921
      %v2994 = vsel %vm1366, %v2939, %v2993
      %v2995 = vsel %vm1368, %v2948, %v2994
      %v2996 = vsel %vm1370, %v2957, %v2995
      %v2997 = vsel %vm1372, %v2966, %v2996
      %v2998 = vsel %vm1374, %v2975, %v2997
      %v2999 = vsel %vm1376, %v2984, %v2998
      %s3001 = scalar_lea.vmem [#allocation8], 24
      %3002 = vst.msk [vmem:[%s3001] sm:$0xff] %vm513, %v2999
      %3003 = vst.msk [vmem:[#allocation4] sm:$0xff] %vm513, %v2817
      %3004 = vst.msk [vmem:[#allocation4 + $0x8] sm:$0xff] %vm513, %v2818
      %3005 = vst.msk [vmem:[#allocation4 + $0x10] sm:$0xff] %vm513, %v2819
      %3006 = vst.msk [vmem:[#allocation4 + $0x18] sm:$0xff] %vm513, %v2820
      %3007 = vst.msk [vmem:[#allocation4 + $0x20] sm:$0xff] %vm513, %v2821
      %3008 = vst.msk [vmem:[#allocation4 + $0x28] sm:$0xff] %vm513, %v2822
      %3009 = vst.msk [vmem:[#allocation4 + $0x30] sm:$0xff] %vm513, %v2823
      %3010 = vst.msk [vmem:[#allocation4 + $0x38] sm:$0xff] %vm513, %v2824
      %3011 = vst.msk [vmem:[#allocation4 + $0x40] sm:$0xff] %vm513, %v2825
      %3012 = vst.msk [vmem:[#allocation4 + $0x48] sm:$0xff] %vm513, %v2826
      %3013 = vst.msk [vmem:[#allocation4 + $0x50] sm:$0xff] %vm513, %v2827
      %3014 = vst.msk [vmem:[#allocation4 + $0x58] sm:$0xff] %vm513, %v2828
      %3015 = vst.msk [vmem:[#allocation4 + $0x60] sm:$0xff] %vm513, %v2829
      %3016 = vst.msk [vmem:[#allocation4 + $0x68] sm:$0xff] %vm513, %v2830
      %3017 = vst.msk [vmem:[#allocation4 + $0x70] sm:$0xff] %vm513, %v2831
      %3018 = vst.msk [vmem:[#allocation4 + $0x78] sm:$0xff] %vm513, %v2832
      %v3019 = vld [vmem:[#allocation8] sm:$0xff]
      %v3020 = vld [vmem:[#allocation8 + $0x8] sm:$0xff]
      %v3021 = vld [vmem:[#allocation8 + $0x10] sm:$0xff]
      %v3022 = vld [vmem:[#allocation8 + $0x18] sm:$0xff]
      %v3023 = vld [vmem:[#allocation6] sm:$0xff]
      %v3024 = vld [vmem:[#allocation6 + $0x8] sm:$0xff]
      %v3025 = vld [vmem:[#allocation6 + $0x10] sm:$0xff]
      %v3026 = vld [vmem:[#allocation6 + $0x18] sm:$0xff]
      %v3027 = vld [vmem:[%s8] sm:$0x1]
      %v3029 = vlaneseq
      %v3030 = vshrl.u32 %v3029, 7
      %v3031 = vsub.s32 0, %v3030
      %v3032 = vrot.slane %v3027, %v3031
      %v3034 = vmul.f32 %v3023, %v3032
      %v3035 = vmul.f32 %v3024, %v3032
      %v3036 = vmul.f32 %v3025, %v3032
      %v3037 = vmul.f32 %v3026, %v3032
      %v3038 = vadd.f32 %v3019, %v3034
      %v3039 = vadd.f32 %v3020, %v3035
      %v3040 = vadd.f32 %v3021, %v3036
      %v3041 = vadd.f32 %v3022, %v3037
      %v3042 = vxor.u32 %v496, 2147483648
      %v3043 = vxor.u32 %v499, 2147483648
      %v3044 = vxor.u32 %v504, 2147483648
      %v3045 = vxor.u32 %v507, 2147483648
      %v3046 = vmul.f32 %v3042, 1.442695
      %v3047 = vpow.pop %v3046
      %v3048 = vmul.f32 %v3043, 1.442695
      %v3049 = vpow.pop %v3048
      %v3050 = vmul.f32 %v3044, 1.442695
      %v3051 = vpow.pop %v3050
      %v3052 = vmul.f32 %v3045, 1.442695
      %v3053 = vpow.pop %v3052
      %v3054 = vadd.f32 %v3047, 1.0
      %v3055 = vadd.f32 %v3049, 1.0
      %v3056 = vadd.f32 %v3051, 1.0
      %v3057 = vadd.f32 %v3053, 1.0
      %v3058 = vrcp.pop %v3054
      %v3059 = vmul.f32 1.0, %v3058
      %v3060 = vrcp.pop %v3055
      %v3061 = vmul.f32 1.0, %v3060
      %v3062 = vrcp.pop %v3056
      %v3063 = vmul.f32 1.0, %v3062
      %v3064 = vrcp.pop %v3057
      %v3065 = vmul.f32 1.0, %v3064
      %v3066 = vmul.f32 %v496, %v3059
      %v3067 = vmul.f32 %v499, %v3061
      %v3068 = vmul.f32 %v504, %v3063
      %v3069 = vmul.f32 %v507, %v3065
      %3074 = vrot.lane.b32.xlu0 %v3066, 64
      %v3075 = vpop.permute.xlu0 %3074
      %3076 = vrot.lane.b32.xlu0 %v3067, 64
      %v3077 = vpop.permute.xlu0 %3076
      %3078 = vrot.lane.b32.xlu0 %v3068, 64
      %v3079 = vpop.permute.xlu0 %3078
      %3080 = vrot.lane.b32.xlu0 %v3069, 64
      %v3081 = vpop.permute.xlu0 %3080
      %v3086 = vmul.f32 %v3038, %v3075
      %v3087 = vmul.f32 %v3039, %v3077
      %v3088 = vmul.f32 %v3040, %v3079
      %v3089 = vmul.f32 %v3041, %v3081
      %v3090 = vpack.c.bf16 %v3087, %v3086
      %v3091 = vpack.c.bf16 %v3089, %v3088
      %v3092 = vld [vmem:[%s9] sm:$0xf]
      %v3093 = vld [vmem:[%s9 + $0x4] sm:$0xf]
      %v3094 = vld [vmem:[%s9 + $0x8] sm:$0xf]
      %v3095 = vld [vmem:[%s9 + $0xc] sm:$0xf]
      %v3096 = vld [vmem:[%s9 + $0x10] sm:$0xf]
      %v3097 = vld [vmem:[%s9 + $0x14] sm:$0xf]
      %v3098 = vld [vmem:[%s9 + $0x18] sm:$0xf]
      %v3099 = vld [vmem:[%s9 + $0x1c] sm:$0xf]
      %v3108 = vunpack.c.l.b16 %v3092
      %v3109 = vunpack.c.l.b16 %v3093
      %v3110 = vunpack.c.l.b16 %v3094
      %v3111 = vunpack.c.l.b16 %v3095
      %v3112 = vunpack.c.l.b16 %v3096
      %v3113 = vunpack.c.l.b16 %v3097
      %v3114 = vunpack.c.l.b16 %v3098
      %v3115 = vunpack.c.l.b16 %v3099
      %v3116 = vpack.c.b16 %v3109, %v3108
      %v3117 = vpack.c.b16 %v3111, %v3110
      %v3118 = vpack.c.b16 %v3113, %v3112
      %v3119 = vpack.c.b16 %v3115, %v3114
      %v3125 = vsel %vm513, %v3090, 0
      %v3128 = vsel %vm513, %v3091, 0
      %3130 = vmatprep.subr.bf16.mxu0 0
      %3131 = vmatpush1.bf16.msra.mxu0 0
      %3132 = vmatprep.subr.bf16.mxu0 0
      %3133 = vmatpush1.bf16.msra.mxu0 0
      %3134 = vmatprep.subr.bf16.mxu0 0
      %3135 = vmatpush1.bf16.msra.mxu0 0
      %3136 = vmatprep.subr.bf16.mxu0 0
      %3137 = vmatpush1.bf16.msra.mxu0 0
      %3138 = vmatprep.subr.bf16.mxu0 0
      %3139 = vmatpush1.bf16.msra.mxu0 %v3119
      %3140 = vmatprep.subr.bf16.mxu0 0
      %3141 = vmatpush1.bf16.msra.mxu0 %v3118
      %3142 = vmatprep.subr.bf16.mxu0 0
      %3143 = vmatpush1.bf16.msra.mxu0 %v3117
      %3144 = vmatprep.subr.bf16.mxu0 0
      %3145 = vmatpush1.bf16.msra.mxu0 %v3116
      %3146 = vmatprep.subr.bf16.mxu0 0
      %3147 = vmatpush2.bf16.msra.mxu0 0
      %3148 = vmatprep.subr.bf16.mxu0 0
      %3149 = vmatpush2.bf16.msra.mxu0 0
      %3150 = vmatprep.subr.bf16.mxu0 0
      %3151 = vmatpush2.bf16.msra.mxu0 0
      %3152 = vmatprep.subr.bf16.mxu0 0
      %3153 = vmatpush2.bf16.msra.mxu0 0
      %3154 = vmatprep.subr.bf16.mxu0 0
      %3155 = vmatpush2.bf16.msra.mxu0 0
      %3156 = vmatprep.subr.bf16.mxu0 0
      %3157 = vmatpush2.bf16.msra.mxu0 0
      %3158 = vmatprep.subr.bf16.mxu0 0
      %3159 = vmatpush2.bf16.msra.mxu0 0
      %3160 = vmatprep.subr.bf16.mxu0 0
      %3161 = vmatpush2.bf16.msra.mxu0 0
      %3162 = vmatprep.mubr.bf16.mxu0 0
      %3163 = vmatmul.mubr.bf16.gmra.mxu0 %v3125
      %v3164 = vpop.f32.mrf.mxu0
      %v3165 = vadd.f32 0.0, %v3164
      %v3166 = vpop.f32.mrf.mxu0
      %v3167 = vpop.f32.mrf.mxu0
      %v3168 = vadd.f32 0.0, %v3167
      %v3169 = vpop.f32.mrf.mxu0
      %3170 = vmatprep.mubr.bf16.mxu0 0
      %3171 = vmatmul.mubr.bf16.gmra.mxu0 %v3128
      %v3172 = vpop.f32.mrf.mxu0
      %v3173 = vadd.f32 0.0, %v3172
      %v3174 = vpop.f32.mrf.mxu0
      %v3175 = vpop.f32.mrf.mxu0
      %v3176 = vadd.f32 0.0, %v3175
      %v3177 = vpop.f32.mrf.mxu0
      %3178 = vdwg.mxu0
      %v3179 = vadd.f32 %v388, %v3165
      %v3180 = vadd.f32 %v389, %v3168
      %v3181 = vadd.f32 %v390, %v3173
      %v3182 = vadd.f32 %v391, %v3176
      %3183 = vst.msk [vmem:[%s361] sm:$0xff] %vm396, %v3179
      %3184 = vst.msk [vmem:[%s361 + $0x8] sm:$0xff] %vm396, %v3180
      %3185 = vst.msk [vmem:[%s361 + $0x10] sm:$0xff] %vm396, %v3181
      %3186 = vst.msk [vmem:[%s361 + $0x18] sm:$0xff] %vm396, %v3182
      %s3187 = smul.u32 4, %s21
      %p3188 = scmp.lt.s32.totalorder %s3187, 7
      %s3189 = scalar_select %p3188, %s3187, 7
      %s3190 = smul.addr %s3189, 8
      %s3191 = scalar_lea.vmem %s10, %s3190
      // Predicated region
      $region65: #{tpu_custom_call.1} parent=59 // pred_check
        %p3192 = pneg %p254
      $region66: #{tpu_custom_call.1} parent=59 // pred_check_branch
        %3194 = sbr.rel (%p3192) target = $region68
      $region67: #{tpu_custom_call.1} parent=59 // pred_region
        %s3195 = smul.u32 4, %s21
      $region68: #{tpu_custom_call.1} parent=59 // pred_fallthru
        _
    $region60: #{tpu_custom_call.1} parent=5 // pred_fallthru
      _
    %p3196 = scmp.le.s32.totalorder 2, %s16
    // Predicated region
    $region69: #{tpu_custom_call.1} parent=5 // pred_check
      %p3197 = pneg %p3196
    $region70: #{tpu_custom_call.1} parent=5 // pred_check_branch
      %3199 = sbr.rel (%p3197) target = $region72
    $region71: #{tpu_custom_call.1} parent=5 // pred_region
      %s3200 = ssub.s32 %s16, 2
      // Predicated region
      $region73: #{tpu_custom_call.1} parent=71 // pred_check
        %p3201 = pneg %p260
      $region74: #{tpu_custom_call.1} parent=71 // pred_check_branch
        %3203 = sbr.rel (%p3201) target = $region76
      $region75: #{tpu_custom_call.1} parent=71 // pred_region
        %s3204 = smul.u32 4, %s22
        %p3205 = scmp.lt.s32.totalorder %s3204, 7
        %s3206 = scalar_select %p3205, %s3204, 7
        %s3207 = smul.addr %s3206, 8
        %s3208 = scalar_lea.vmem %s10, %s3207
      $region76: #{tpu_custom_call.1} parent=71 // pred_fallthru
        _
    $region72: #{tpu_custom_call.1} parent=5 // pred_fallthru
      _
  $region6: #{tpu_custom_call.1} parent=0 // loop_footer
    %s20 = sadd.s32 1, %s16
  $region7: #{tpu_custom_call.1} parent=0 // loop_footer_branch
    %15 = sbr.rel target = $region3
  $region8: #{tpu_custom_call.1} parent=0 // loop_exit
    _

</llo_original>
